<compile_context>
chip_gen: v7x
topology: tpu7x:2x2x1
jax: 0.10.0
libtpu: 0.0.40
codegen_flags: <defaults>
</compile_context>

<pallas_src>
import math

import numpy as np
import jax
import jax.numpy as jnp
from jax.experimental import pallas as pl
from jax.experimental.pallas import tpu as pltpu


def _round_up(x, m):
    return ((x + m - 1) // m) * m


# ----------------------------------------------------------------------------
# Kernel
# ----------------------------------------------------------------------------
def _sliding_lstm_kernel(x_ref, wih_ref, whh_ref, b_ref,
                         w1_ref, b1_ref, w2p_ref, b2p_ref, p_ref, out_ref):
    """LSTM recurrence + fc head + (pre-folded) sliding-residual decode.

    x_ref   : (B, T, D)        batch-first input history block
    wih_ref : (D, 4H)          LSTM input->gates (g-gate cols pre-scaled x2)
    whh_ref : (H, 4H)          LSTM hidden->gates (g-gate cols pre-scaled x2)
    b_ref   : (1, 4H)          b_ih + b_hh (g-gate cols pre-scaled x2)
    w1_ref  : (H, H), b1_ref: (1, H)            fc layer 1
    w2p_ref : (H, out_lanes), b2p_ref: (1, out_lanes)   fc2 folded with decode
    p_ref   : (2, out_lanes)   last_pos placement matrix
    out_ref : (B, out_lanes)   lane-dense padded trajectory slab
    """
    B, T, D = x_ref.shape
    H = whh_ref.shape[0]

    x_all = x_ref[...]                                   # (B, T, D)
    wih = wih_ref[...]
    whh = whh_ref[...]
    bias = b_ref[...]

    # Hoisted input projection: one bulk MXU matmul, off the serial chain.
    xw = (jnp.dot(x_all.reshape(B * T, D), wih,
                  preferred_element_type=jnp.float32)
          + bias).reshape(B, T, 4 * H)                   # (B, T, 4H)

    def lstm_step(xw_t, h, c):
        gates = xw_t + jnp.dot(h, whh, preferred_element_type=jnp.float32)
        # sigmoid(z) = 0.5*(tanh(z/2)+1); g-gate columns were pre-scaled by 2,
        # so one tanh EUP push covers all four gates.
        y = jnp.tanh(0.5 * gates)
        i_g = 0.5 * (y[:, 0:H] + 1.0)
        f_g = 0.5 * (y[:, H:2 * H] + 1.0)
        g_g = y[:, 2 * H:3 * H]
        o_g = 0.5 * (y[:, 3 * H:4 * H] + 1.0)
        c_new = f_g * c + i_g * g_g
        h_new = o_g * jnp.tanh(c_new)
        return h_new, c_new

    h = jnp.zeros((B, H), jnp.float32)
    c = jnp.zeros((B, H), jnp.float32)
    if B <= 32:
        # Small block: full unroll with static slices (best LLO visibility).
        for t in range(T):
            h, c = lstm_step(xw[:, t, :], h, c)
    else:
        # Large block: bounded unroll to keep vreg live ranges in check.
        def body(t, carry):
            h_t, c_t = carry
            xw_t = jax.lax.dynamic_index_in_dim(xw, t, axis=1, keepdims=False)
            return lstm_step(xw_t, h_t, c_t)
        h, c = jax.lax.fori_loop(0, T, body, (h, c), unroll=4)

    # fc head (h is constant across windows -> computed exactly once).
    hid = jnp.maximum(
        jnp.dot(h, w1_ref[...], preferred_element_type=jnp.float32) + b1_ref[...],
        0.0)

    # Fused sliding-residual decode: single (H -> out_lanes) MXU matmul plus a
    # 2-term lane/sublane broadcast for the last_pos base.  One lane-dense
    # unmasked store of the whole padded slab.
    last_pos = x_all[:, T - 1, 0:2]                      # x[:, -1, :2]  (B, 2)
    p = p_ref[...]                                       # (2, out_lanes)
    traj = (jnp.dot(hid, w2p_ref[...], preferred_element_type=jnp.float32)
            + b2p_ref[...]
            + last_pos[:, 0:1] * p[0:1, :]
            + last_pos[:, 1:2] * p[1:2, :])
    out_ref[...] = traj.astype(out_ref.dtype)


# ----------------------------------------------------------------------------
# Host-side parameter fusion
# ----------------------------------------------------------------------------
def _decode_matrices(future_len, step_size, out_lanes):
    """Constant matrices that linearize the sliding-residual decode:
    out[:, 2*(w*step+s)+e] = last_pos[:, e] + delta_flat[:, 2*j+e]*(w + [j<=s])."""
    n_windows = future_len // step_size
    M = np.zeros((2 * step_size, out_lanes), np.float32)
    P = np.zeros((2, out_lanes), np.float32)
    for w in range(n_windows):
        for s in range(step_size):
            for e in range(2):
                col = 2 * (w * step_size + s) + e
                P[e, col] = 1.0
                for j in range(step_size):
                    M[2 * j + e, col] = float(w) + (1.0 if j <= s else 0.0)
    return M, P


def fuse_kernel_params(params, *, future_len=60, step_size=5):
    """Raw (pre-transposed PyTorch) params -> fused kernel params:
    g-gate columns pre-scaled by 2, decode matrices folded into fc2."""
    wih_t, whh_t, b, w1_t, b1, w2_t, b2 = params
    H = whh_t.shape[0]
    out_lanes = _round_up(2 * future_len, 128)

    gate_scale = jnp.ones((1, 4 * H), jnp.float32).at[:, 2 * H:3 * H].set(2.0)
    wih_s = wih_t * gate_scale
    whh_s = whh_t * gate_scale
    b_s = b * gate_scale

    M, P = _decode_matrices(future_len, step_size, out_lanes)
    M = jnp.asarray(M)
    P = jnp.asarray(P)
    w2p = jnp.dot(w2_t, M)            # (H, out_lanes)
    b2p = jnp.dot(b2, M)              # (1, out_lanes)
    return (wih_s, whh_s, b_s, w1_t, b1, w2p, b2p, P)


# ----------------------------------------------------------------------------
# Wrapper
# ----------------------------------------------------------------------------
def _choose_batch_block(B):
    if B <= 8:
        return B
    try:
        vmem_bytes = pltpu.get_tpu_info().vmem_capacity_bytes
    except Exception:
        vmem_bytes = 64 * 1024 * 1024
    # Single-TC parts (128 MiB VMEM) favor fewer, larger blocks; v7x
    # (64 MiB, 2 TCs) favors >= 2 modest blocks so both cores get work.
    cap = 1024 if vmem_bytes >= (100 << 20) else 512
    bb = _round_up(-(-B // 2), 8)          # >= 2 blocks, sublane-aligned
    return min(bb, cap)


def sliding_residual_ego_lstm(x, fused_params, *, future_len=60, step_size=5):
    """x: (B, T, 8) float32 (batch_first, like the PyTorch module).
    Returns (B, future_len, 2)."""
    wih_s, whh_s, b_s, w1_t, b1, w2p, b2p, P = fused_params
    B, T, D = x.shape
    out_lanes = w2p.shape[1]

    bb = _choose_batch_block(B)
    grid_b = -(-B // bb)
    B_pad = grid_b * bb
    if B_pad != B:
        x = jnp.pad(x, ((0, B_pad - B), (0, 0), (0, 0)))

    out_flat = pl.pallas_call(
        _sliding_lstm_kernel,
        out_shape=jax.ShapeDtypeStruct((B_pad, out_lanes), jnp.float32),
        grid_spec=pltpu.PrefetchScalarGridSpec(
            num_scalar_prefetch=0,
            grid=(grid_b,),
            in_specs=[
                pl.BlockSpec((bb, T, D), lambda i: (i, 0, 0)),
                pl.BlockSpec(wih_s.shape, lambda i: (0, 0)),
                pl.BlockSpec(whh_s.shape, lambda i: (0, 0)),
                pl.BlockSpec(b_s.shape, lambda i: (0, 0)),
                pl.BlockSpec(w1_t.shape, lambda i: (0, 0)),
                pl.BlockSpec(b1.shape, lambda i: (0, 0)),
                pl.BlockSpec(w2p.shape, lambda i: (0, 0)),
                pl.BlockSpec(b2p.shape, lambda i: (0, 0)),
                pl.BlockSpec(P.shape, lambda i: (0, 0)),
            ],
            out_specs=pl.BlockSpec((bb, out_lanes), lambda i: (i, 0)),
        ),
        compiler_params=pltpu.CompilerParams(
            dimension_semantics=("parallel",),
            vmem_limit_bytes=32 * 1024 * 1024),
    )(x, wih_s, whh_s, b_s, w1_t, b1, w2p, b2p, P)

    return out_flat[:B, :2 * future_len].reshape(B, future_len, 2)


# ----------------------------------------------------------------------------
# Pure-JAX reference (mirrors the PyTorch forward pass, uses raw params)
# ----------------------------------------------------------------------------
def _reference(x, params, *, future_len=60, step_size=5):
    wih_t, whh_t, b, w1_t, b1, w2_t, b2 = params
    B, T, D = x.shape
    H = whh_t.shape[0]

    def step(carry, x_t):
        h, c = carry
        gates = x_t @ wih_t + h @ whh_t + b[0]
        i_g = jax.nn.sigmoid(gates[:, 0:H])
        f_g = jax.nn.sigmoid(gates[:, H:2 * H])
        g_g = jnp.tanh(gates[:, 2 * H:3 * H])
        o_g = jax.nn.sigmoid(gates[:, 3 * H:4 * H])
        c_new = f_g * c + i_g * g_g
        h_new = o_g * jnp.tanh(c_new)
        return (h_new, c_new), None

    (h, _), _ = jax.lax.scan(step,
                             (jnp.zeros((B, H)), jnp.zeros((B, H))),
                             jnp.transpose(x, (1, 0, 2)))
    last_pos = x[:, -1, :2]
    preds = []
    current = last_pos
    for _ in range(future_len // step_size):
        hid = jnp.maximum(h @ w1_t + b1[0], 0.0)
        delta = (hid @ w2_t + b2[0]).reshape(B, step_size, 2)
        current_traj = current[:, None, :] + jnp.cumsum(delta, axis=1)
        preds.append(current_traj)
        current = current_traj[:, -1, :]
    return jnp.concatenate(preds, axis=1)


def init_params(key, input_size=8, hidden_size=32, step_size=5, output_size=2):
    """Deterministic PyTorch-style uniform init.  Returns pre-transposed params."""
    H = hidden_size
    ks = jax.random.split(key, 8)
    bound = 1.0 / math.sqrt(H)
    u = lambda k, shape: jax.random.uniform(k, shape, jnp.float32, -bound, bound)

    w_ih = u(ks[0], (4 * H, input_size))     # PyTorch weight_ih_l0
    w_hh = u(ks[1], (4 * H, H))              # PyTorch weight_hh_l0
    b_ih = u(ks[2], (4 * H,))
    b_hh = u(ks[3], (4 * H,))
    w1 = u(ks[4], (H, H))                    # fc[0].weight
    b1 = u(ks[5], (H,))
    w2 = u(ks[6], (step_size * output_size, H))   # fc[2].weight
    b2 = u(ks[7], (step_size * output_size,))

    return (jnp.transpose(w_ih),                     # (D, 4H)
            jnp.transpose(w_hh),                     # (H, 4H)
            (b_ih + b_hh).reshape(1, 4 * H),
            jnp.transpose(w1), b1.reshape(1, H),
            jnp.transpose(w2), b2.reshape(1, step_size * output_size))


if __name__ == "__main__":
    B, T, D = 8, 16, 8          # batch (full sublanes), history length, ego features
    H = 32                      # hidden size (small test size; 4H = 128 lanes)
    FUTURE_LEN, STEP = 60, 5

    key = jax.random.PRNGKey(0)
    k_param, k_x = jax.random.split(key)
    raw_params = init_params(k_param, input_size=D, hidden_size=H, step_size=STEP)
    fused_params = fuse_kernel_params(raw_params, future_len=FUTURE_LEN,
                                      step_size=STEP)
    x = jax.random.normal(k_x, (B, T, D), dtype=jnp.float32)

    out = sliding_residual_ego_lstm(x, fused_params,
                                    future_len=FUTURE_LEN, step_size=STEP)
    out = jax.block_until_ready(out)

    ref = jax.block_until_ready(
        _reference(x, raw_params, future_len=FUTURE_LEN, step_size=STEP))

    assert out.shape == (B, FUTURE_LEN, 2), out.shape
    assert bool(jnp.all(jnp.isfinite(out)))
    max_err = float(jnp.max(jnp.abs(out - ref)))
    assert max_err < 1e-2, max_err   # f32 end-to-end; covers MXU pass differences

    print("KERNEL_OK")
</pallas_src>

<mosaic_0001>
module attributes {stable_mosaic.version = 11 : i64} {
  func.func @_sliding_lstm_kernel(%arg0: i32, %arg1: memref<8x16x8xf32, #tpu.memory_space<vmem>>, %arg2: memref<8x128xf32, #tpu.memory_space<vmem>>, %arg3: memref<32x128xf32, #tpu.memory_space<vmem>>, %arg4: memref<1x128xf32, #tpu.memory_space<vmem>>, %arg5: memref<32x32xf32, #tpu.memory_space<vmem>>, %arg6: memref<1x32xf32, #tpu.memory_space<vmem>>, %arg7: memref<32x128xf32, #tpu.memory_space<vmem>>, %arg8: memref<1x128xf32, #tpu.memory_space<vmem>>, %arg9: memref<2x128xf32, #tpu.memory_space<vmem>>, %arg10: memref<8x128xf32, #tpu.memory_space<vmem>>) attributes {dimension_semantics = [#tpu.dimension_semantics<parallel>], iteration_bounds = array<i64: 1>, scalar_prefetch = 0 : i64, scratch_operands = 0 : i64, tpu.core_type = #tpu.core_type<tc>, window_params = [{transform_indices = @transform_0, window_bounds = array<i64: 8, 16, 8>}, {pipeline_mode = #tpu.pipeline_mode<synchronous>, transform_indices = @transform_1, window_bounds = array<i64: 8, 128>}, {pipeline_mode = #tpu.pipeline_mode<synchronous>, transform_indices = @transform_2, window_bounds = array<i64: 32, 128>}, {pipeline_mode = #tpu.pipeline_mode<synchronous>, transform_indices = @transform_3, window_bounds = array<i64: 1, 128>}, {pipeline_mode = #tpu.pipeline_mode<synchronous>, transform_indices = @transform_4, window_bounds = array<i64: 32, 32>}, {pipeline_mode = #tpu.pipeline_mode<synchronous>, transform_indices = @transform_5, window_bounds = array<i64: 1, 32>}, {pipeline_mode = #tpu.pipeline_mode<synchronous>, transform_indices = @transform_6, window_bounds = array<i64: 32, 128>}, {pipeline_mode = #tpu.pipeline_mode<synchronous>, transform_indices = @transform_7, window_bounds = array<i64: 1, 128>}, {pipeline_mode = #tpu.pipeline_mode<synchronous>, transform_indices = @transform_8, window_bounds = array<i64: 2, 128>}, {transform_indices = @transform_9, window_bounds = array<i64: 8, 128>}]} {
    %c0 = arith.constant 0 : index
    %c0_0 = arith.constant 0 : index
    %c0_1 = arith.constant 0 : index
    %0 = vector.load %arg1[%c0, %c0_0, %c0_1] : memref<8x16x8xf32, #tpu.memory_space<vmem>>, vector<8x16x8xf32>
    %c0_2 = arith.constant 0 : index
    %c0_3 = arith.constant 0 : index
    %1 = vector.load %arg2[%c0_2, %c0_3] : memref<8x128xf32, #tpu.memory_space<vmem>>, vector<8x128xf32>
    %c0_4 = arith.constant 0 : index
    %c0_5 = arith.constant 0 : index
    %2 = vector.load %arg3[%c0_4, %c0_5] : memref<32x128xf32, #tpu.memory_space<vmem>>, vector<32x128xf32>
    %c0_6 = arith.constant 0 : index
    %c0_7 = arith.constant 0 : index
    %3 = vector.load %arg4[%c0_6, %c0_7] : memref<1x128xf32, #tpu.memory_space<vmem>>, vector<1x128xf32>
    %4 = vector.shape_cast %0 : vector<8x16x8xf32> to vector<128x8xf32>
    %cst = arith.constant dense<0.000000e+00> : vector<128x128xf32>
    %5 = tpu.matmul %4, %1, %cst {dimension_numbers = #tpu.dot_dimension_numbers<[1], [0], [0], [1], [0, 0, 1, 1], [], []>} : vector<128x8xf32>, vector<8x128xf32>, vector<128x128xf32> -> vector<128x128xf32>
    %6 = vector.broadcast %3 : vector<1x128xf32> to vector<128x128xf32>
    %7 = arith.addf %5, %6 : vector<128x128xf32>
    %8 = vector.shape_cast %7 : vector<128x128xf32> to vector<8x16x128xf32>
    %cst_8 = arith.constant 0.000000e+00 : f32
    %9 = vector.broadcast %cst_8 : f32 to vector<8x32xf32>
    %cst_9 = arith.constant 0.000000e+00 : f32
    %10 = vector.broadcast %cst_9 : f32 to vector<8x32xf32>
    %11 = vector.extract_strided_slice %8 {offsets = [0, 0, 0], sizes = [8, 1, 128], strides = [1, 1, 1]} : vector<8x16x128xf32> to vector<8x1x128xf32>
    %12 = vector.shape_cast %11 : vector<8x1x128xf32> to vector<8x128xf32>
    %cst_10 = arith.constant dense<0.000000e+00> : vector<8x128xf32>
    %13 = tpu.matmul %9, %2, %cst_10 {dimension_numbers = #tpu.dot_dimension_numbers<[1], [0], [0], [1], [0, 0, 1, 1], [], []>} : vector<8x32xf32>, vector<32x128xf32>, vector<8x128xf32> -> vector<8x128xf32>
    %14 = arith.addf %12, %13 : vector<8x128xf32>
    %cst_11 = arith.constant 5.000000e-01 : f32
    %15 = vector.broadcast %cst_11 : f32 to vector<8x128xf32>
    %16 = arith.mulf %15, %14 : vector<8x128xf32>
    %17 = math.tanh %16 : vector<8x128xf32>
    %18 = vector.extract_strided_slice %17 {offsets = [0, 0], sizes = [8, 32], strides = [1, 1]} : vector<8x128xf32> to vector<8x32xf32>
    %cst_12 = arith.constant 1.000000e+00 : f32
    %19 = vector.broadcast %cst_12 : f32 to vector<8x32xf32>
    %20 = arith.addf %18, %19 : vector<8x32xf32>
    %cst_13 = arith.constant 5.000000e-01 : f32
    %21 = vector.broadcast %cst_13 : f32 to vector<8x32xf32>
    %22 = arith.mulf %21, %20 : vector<8x32xf32>
    %23 = vector.extract_strided_slice %17 {offsets = [0, 32], sizes = [8, 32], strides = [1, 1]} : vector<8x128xf32> to vector<8x32xf32>
    %cst_14 = arith.constant 1.000000e+00 : f32
    %24 = vector.broadcast %cst_14 : f32 to vector<8x32xf32>
    %25 = arith.addf %23, %24 : vector<8x32xf32>
    %cst_15 = arith.constant 5.000000e-01 : f32
    %26 = vector.broadcast %cst_15 : f32 to vector<8x32xf32>
    %27 = arith.mulf %26, %25 : vector<8x32xf32>
    %28 = vector.extract_strided_slice %17 {offsets = [0, 64], sizes = [8, 32], strides = [1, 1]} : vector<8x128xf32> to vector<8x32xf32>
    %29 = vector.extract_strided_slice %17 {offsets = [0, 96], sizes = [8, 32], strides = [1, 1]} : vector<8x128xf32> to vector<8x32xf32>
    %cst_16 = arith.constant 1.000000e+00 : f32
    %30 = vector.broadcast %cst_16 : f32 to vector<8x32xf32>
    %31 = arith.addf %29, %30 : vector<8x32xf32>
    %cst_17 = arith.constant 5.000000e-01 : f32
    %32 = vector.broadcast %cst_17 : f32 to vector<8x32xf32>
    %33 = arith.mulf %32, %31 : vector<8x32xf32>
    %34 = arith.mulf %27, %10 : vector<8x32xf32>
    %35 = arith.mulf %22, %28 : vector<8x32xf32>
    %36 = arith.addf %34, %35 : vector<8x32xf32>
    %37 = math.tanh %36 : vector<8x32xf32>
    %38 = arith.mulf %33, %37 : vector<8x32xf32>
    %39 = vector.extract_strided_slice %8 {offsets = [0, 1, 0], sizes = [8, 1, 128], strides = [1, 1, 1]} : vector<8x16x128xf32> to vector<8x1x128xf32>
    %40 = vector.shape_cast %39 : vector<8x1x128xf32> to vector<8x128xf32>
    %cst_18 = arith.constant dense<0.000000e+00> : vector<8x128xf32>
    %41 = tpu.matmul %38, %2, %cst_18 {dimension_numbers = #tpu.dot_dimension_numbers<[1], [0], [0], [1], [0, 0, 1, 1], [], []>} : vector<8x32xf32>, vector<32x128xf32>, vector<8x128xf32> -> vector<8x128xf32>
    %42 = arith.addf %40, %41 : vector<8x128xf32>
    %cst_19 = arith.constant 5.000000e-01 : f32
    %43 = vector.broadcast %cst_19 : f32 to vector<8x128xf32>
    %44 = arith.mulf %43, %42 : vector<8x128xf32>
    %45 = math.tanh %44 : vector<8x128xf32>
    %46 = vector.extract_strided_slice %45 {offsets = [0, 0], sizes = [8, 32], strides = [1, 1]} : vector<8x128xf32> to vector<8x32xf32>
    %cst_20 = arith.constant 1.000000e+00 : f32
    %47 = vector.broadcast %cst_20 : f32 to vector<8x32xf32>
    %48 = arith.addf %46, %47 : vector<8x32xf32>
    %cst_21 = arith.constant 5.000000e-01 : f32
    %49 = vector.broadcast %cst_21 : f32 to vector<8x32xf32>
    %50 = arith.mulf %49, %48 : vector<8x32xf32>
    %51 = vector.extract_strided_slice %45 {offsets = [0, 32], sizes = [8, 32], strides = [1, 1]} : vector<8x128xf32> to vector<8x32xf32>
    %cst_22 = arith.constant 1.000000e+00 : f32
    %52 = vector.broadcast %cst_22 : f32 to vector<8x32xf32>
    %53 = arith.addf %51, %52 : vector<8x32xf32>
    %cst_23 = arith.constant 5.000000e-01 : f32
    %54 = vector.broadcast %cst_23 : f32 to vector<8x32xf32>
    %55 = arith.mulf %54, %53 : vector<8x32xf32>
    %56 = vector.extract_strided_slice %45 {offsets = [0, 64], sizes = [8, 32], strides = [1, 1]} : vector<8x128xf32> to vector<8x32xf32>
    %57 = vector.extract_strided_slice %45 {offsets = [0, 96], sizes = [8, 32], strides = [1, 1]} : vector<8x128xf32> to vector<8x32xf32>
    %cst_24 = arith.constant 1.000000e+00 : f32
    %58 = vector.broadcast %cst_24 : f32 to vector<8x32xf32>
    %59 = arith.addf %57, %58 : vector<8x32xf32>
    %cst_25 = arith.constant 5.000000e-01 : f32
    %60 = vector.broadcast %cst_25 : f32 to vector<8x32xf32>
    %61 = arith.mulf %60, %59 : vector<8x32xf32>
    %62 = arith.mulf %55, %36 : vector<8x32xf32>
    %63 = arith.mulf %50, %56 : vector<8x32xf32>
    %64 = arith.addf %62, %63 : vector<8x32xf32>
    %65 = math.tanh %64 : vector<8x32xf32>
    %66 = arith.mulf %61, %65 : vector<8x32xf32>
    %67 = vector.extract_strided_slice %8 {offsets = [0, 2, 0], sizes = [8, 1, 128], strides = [1, 1, 1]} : vector<8x16x128xf32> to vector<8x1x128xf32>
    %68 = vector.shape_cast %67 : vector<8x1x128xf32> to vector<8x128xf32>
    %cst_26 = arith.constant dense<0.000000e+00> : vector<8x128xf32>
    %69 = tpu.matmul %66, %2, %cst_26 {dimension_numbers = #tpu.dot_dimension_numbers<[1], [0], [0], [1], [0, 0, 1, 1], [], []>} : vector<8x32xf32>, vector<32x128xf32>, vector<8x128xf32> -> vector<8x128xf32>
    %70 = arith.addf %68, %69 : vector<8x128xf32>
    %cst_27 = arith.constant 5.000000e-01 : f32
    %71 = vector.broadcast %cst_27 : f32 to vector<8x128xf32>
    %72 = arith.mulf %71, %70 : vector<8x128xf32>
    %73 = math.tanh %72 : vector<8x128xf32>
    %74 = vector.extract_strided_slice %73 {offsets = [0, 0], sizes = [8, 32], strides = [1, 1]} : vector<8x128xf32> to vector<8x32xf32>
    %cst_28 = arith.constant 1.000000e+00 : f32
    %75 = vector.broadcast %cst_28 : f32 to vector<8x32xf32>
    %76 = arith.addf %74, %75 : vector<8x32xf32>
    %cst_29 = arith.constant 5.000000e-01 : f32
    %77 = vector.broadcast %cst_29 : f32 to vector<8x32xf32>
    %78 = arith.mulf %77, %76 : vector<8x32xf32>
    %79 = vector.extract_strided_slice %73 {offsets = [0, 32], sizes = [8, 32], strides = [1, 1]} : vector<8x128xf32> to vector<8x32xf32>
    %cst_30 = arith.constant 1.000000e+00 : f32
    %80 = vector.broadcast %cst_30 : f32 to vector<8x32xf32>
    %81 = arith.addf %79, %80 : vector<8x32xf32>
    %cst_31 = arith.constant 5.000000e-01 : f32
    %82 = vector.broadcast %cst_31 : f32 to vector<8x32xf32>
    %83 = arith.mulf %82, %81 : vector<8x32xf32>
    %84 = vector.extract_strided_slice %73 {offsets = [0, 64], sizes = [8, 32], strides = [1, 1]} : vector<8x128xf32> to vector<8x32xf32>
    %85 = vector.extract_strided_slice %73 {offsets = [0, 96], sizes = [8, 32], strides = [1, 1]} : vector<8x128xf32> to vector<8x32xf32>
    %cst_32 = arith.constant 1.000000e+00 : f32
    %86 = vector.broadcast %cst_32 : f32 to vector<8x32xf32>
    %87 = arith.addf %85, %86 : vector<8x32xf32>
    %cst_33 = arith.constant 5.000000e-01 : f32
    %88 = vector.broadcast %cst_33 : f32 to vector<8x32xf32>
    %89 = arith.mulf %88, %87 : vector<8x32xf32>
    %90 = arith.mulf %83, %64 : vector<8x32xf32>
    %91 = arith.mulf %78, %84 : vector<8x32xf32>
    %92 = arith.addf %90, %91 : vector<8x32xf32>
    %93 = math.tanh %92 : vector<8x32xf32>
    %94 = arith.mulf %89, %93 : vector<8x32xf32>
    %95 = vector.extract_strided_slice %8 {offsets = [0, 3, 0], sizes = [8, 1, 128], strides = [1, 1, 1]} : vector<8x16x128xf32> to vector<8x1x128xf32>
    %96 = vector.shape_cast %95 : vector<8x1x128xf32> to vector<8x128xf32>
    %cst_34 = arith.constant dense<0.000000e+00> : vector<8x128xf32>
    %97 = tpu.matmul %94, %2, %cst_34 {dimension_numbers = #tpu.dot_dimension_numbers<[1], [0], [0], [1], [0, 0, 1, 1], [], []>} : vector<8x32xf32>, vector<32x128xf32>, vector<8x128xf32> -> vector<8x128xf32>
    %98 = arith.addf %96, %97 : vector<8x128xf32>
    %cst_35 = arith.constant 5.000000e-01 : f32
    %99 = vector.broadcast %cst_35 : f32 to vector<8x128xf32>
    %100 = arith.mulf %99, %98 : vector<8x128xf32>
    %101 = math.tanh %100 : vector<8x128xf32>
    %102 = vector.extract_strided_slice %101 {offsets = [0, 0], sizes = [8, 32], strides = [1, 1]} : vector<8x128xf32> to vector<8x32xf32>
    %cst_36 = arith.constant 1.000000e+00 : f32
    %103 = vector.broadcast %cst_36 : f32 to vector<8x32xf32>
    %104 = arith.addf %102, %103 : vector<8x32xf32>
    %cst_37 = arith.constant 5.000000e-01 : f32
    %105 = vector.broadcast %cst_37 : f32 to vector<8x32xf32>
    %106 = arith.mulf %105, %104 : vector<8x32xf32>
    %107 = vector.extract_strided_slice %101 {offsets = [0, 32], sizes = [8, 32], strides = [1, 1]} : vector<8x128xf32> to vector<8x32xf32>
    %cst_38 = arith.constant 1.000000e+00 : f32
    %108 = vector.broadcast %cst_38 : f32 to vector<8x32xf32>
    %109 = arith.addf %107, %108 : vector<8x32xf32>
    %cst_39 = arith.constant 5.000000e-01 : f32
    %110 = vector.broadcast %cst_39 : f32 to vector<8x32xf32>
    %111 = arith.mulf %110, %109 : vector<8x32xf32>
    %112 = vector.extract_strided_slice %101 {offsets = [0, 64], sizes = [8, 32], strides = [1, 1]} : vector<8x128xf32> to vector<8x32xf32>
    %113 = vector.extract_strided_slice %101 {offsets = [0, 96], sizes = [8, 32], strides = [1, 1]} : vector<8x128xf32> to vector<8x32xf32>
    %cst_40 = arith.constant 1.000000e+00 : f32
    %114 = vector.broadcast %cst_40 : f32 to vector<8x32xf32>
    %115 = arith.addf %113, %114 : vector<8x32xf32>
    %cst_41 = arith.constant 5.000000e-01 : f32
    %116 = vector.broadcast %cst_41 : f32 to vector<8x32xf32>
    %117 = arith.mulf %116, %115 : vector<8x32xf32>
    %118 = arith.mulf %111, %92 : vector<8x32xf32>
    %119 = arith.mulf %106, %112 : vector<8x32xf32>
    %120 = arith.addf %118, %119 : vector<8x32xf32>
    %121 = math.tanh %120 : vector<8x32xf32>
    %122 = arith.mulf %117, %121 : vector<8x32xf32>
    %123 = vector.extract_strided_slice %8 {offsets = [0, 4, 0], sizes = [8, 1, 128], strides = [1, 1, 1]} : vector<8x16x128xf32> to vector<8x1x128xf32>
    %124 = vector.shape_cast %123 : vector<8x1x128xf32> to vector<8x128xf32>
    %cst_42 = arith.constant dense<0.000000e+00> : vector<8x128xf32>
    %125 = tpu.matmul %122, %2, %cst_42 {dimension_numbers = #tpu.dot_dimension_numbers<[1], [0], [0], [1], [0, 0, 1, 1], [], []>} : vector<8x32xf32>, vector<32x128xf32>, vector<8x128xf32> -> vector<8x128xf32>
    %126 = arith.addf %124, %125 : vector<8x128xf32>
    %cst_43 = arith.constant 5.000000e-01 : f32
    %127 = vector.broadcast %cst_43 : f32 to vector<8x128xf32>
    %128 = arith.mulf %127, %126 : vector<8x128xf32>
    %129 = math.tanh %128 : vector<8x128xf32>
    %130 = vector.extract_strided_slice %129 {offsets = [0, 0], sizes = [8, 32], strides = [1, 1]} : vector<8x128xf32> to vector<8x32xf32>
    %cst_44 = arith.constant 1.000000e+00 : f32
    %131 = vector.broadcast %cst_44 : f32 to vector<8x32xf32>
    %132 = arith.addf %130, %131 : vector<8x32xf32>
    %cst_45 = arith.constant 5.000000e-01 : f32
    %133 = vector.broadcast %cst_45 : f32 to vector<8x32xf32>
    %134 = arith.mulf %133, %132 : vector<8x32xf32>
    %135 = vector.extract_strided_slice %129 {offsets = [0, 32], sizes = [8, 32], strides = [1, 1]} : vector<8x128xf32> to vector<8x32xf32>
    %cst_46 = arith.constant 1.000000e+00 : f32
    %136 = vector.broadcast %cst_46 : f32 to vector<8x32xf32>
    %137 = arith.addf %135, %136 : vector<8x32xf32>
    %cst_47 = arith.constant 5.000000e-01 : f32
    %138 = vector.broadcast %cst_47 : f32 to vector<8x32xf32>
    %139 = arith.mulf %138, %137 : vector<8x32xf32>
    %140 = vector.extract_strided_slice %129 {offsets = [0, 64], sizes = [8, 32], strides = [1, 1]} : vector<8x128xf32> to vector<8x32xf32>
    %141 = vector.extract_strided_slice %129 {offsets = [0, 96], sizes = [8, 32], strides = [1, 1]} : vector<8x128xf32> to vector<8x32xf32>
    %cst_48 = arith.constant 1.000000e+00 : f32
    %142 = vector.broadcast %cst_48 : f32 to vector<8x32xf32>
    %143 = arith.addf %141, %142 : vector<8x32xf32>
    %cst_49 = arith.constant 5.000000e-01 : f32
    %144 = vector.broadcast %cst_49 : f32 to vector<8x32xf32>
    %145 = arith.mulf %144, %143 : vector<8x32xf32>
    %146 = arith.mulf %139, %120 : vector<8x32xf32>
    %147 = arith.mulf %134, %140 : vector<8x32xf32>
    %148 = arith.addf %146, %147 : vector<8x32xf32>
    %149 = math.tanh %148 : vector<8x32xf32>
    %150 = arith.mulf %145, %149 : vector<8x32xf32>
    %151 = vector.extract_strided_slice %8 {offsets = [0, 5, 0], sizes = [8, 1, 128], strides = [1, 1, 1]} : vector<8x16x128xf32> to vector<8x1x128xf32>
    %152 = vector.shape_cast %151 : vector<8x1x128xf32> to vector<8x128xf32>
    %cst_50 = arith.constant dense<0.000000e+00> : vector<8x128xf32>
    %153 = tpu.matmul %150, %2, %cst_50 {dimension_numbers = #tpu.dot_dimension_numbers<[1], [0], [0], [1], [0, 0, 1, 1], [], []>} : vector<8x32xf32>, vector<32x128xf32>, vector<8x128xf32> -> vector<8x128xf32>
    %154 = arith.addf %152, %153 : vector<8x128xf32>
    %cst_51 = arith.constant 5.000000e-01 : f32
    %155 = vector.broadcast %cst_51 : f32 to vector<8x128xf32>
    %156 = arith.mulf %155, %154 : vector<8x128xf32>
    %157 = math.tanh %156 : vector<8x128xf32>
    %158 = vector.extract_strided_slice %157 {offsets = [0, 0], sizes = [8, 32], strides = [1, 1]} : vector<8x128xf32> to vector<8x32xf32>
    %cst_52 = arith.constant 1.000000e+00 : f32
    %159 = vector.broadcast %cst_52 : f32 to vector<8x32xf32>
    %160 = arith.addf %158, %159 : vector<8x32xf32>
    %cst_53 = arith.constant 5.000000e-01 : f32
    %161 = vector.broadcast %cst_53 : f32 to vector<8x32xf32>
    %162 = arith.mulf %161, %160 : vector<8x32xf32>
    %163 = vector.extract_strided_slice %157 {offsets = [0, 32], sizes = [8, 32], strides = [1, 1]} : vector<8x128xf32> to vector<8x32xf32>
    %cst_54 = arith.constant 1.000000e+00 : f32
    %164 = vector.broadcast %cst_54 : f32 to vector<8x32xf32>
    %165 = arith.addf %163, %164 : vector<8x32xf32>
    %cst_55 = arith.constant 5.000000e-01 : f32
    %166 = vector.broadcast %cst_55 : f32 to vector<8x32xf32>
    %167 = arith.mulf %166, %165 : vector<8x32xf32>
    %168 = vector.extract_strided_slice %157 {offsets = [0, 64], sizes = [8, 32], strides = [1, 1]} : vector<8x128xf32> to vector<8x32xf32>
    %169 = vector.extract_strided_slice %157 {offsets = [0, 96], sizes = [8, 32], strides = [1, 1]} : vector<8x128xf32> to vector<8x32xf32>
    %cst_56 = arith.constant 1.000000e+00 : f32
    %170 = vector.broadcast %cst_56 : f32 to vector<8x32xf32>
    %171 = arith.addf %169, %170 : vector<8x32xf32>
    %cst_57 = arith.constant 5.000000e-01 : f32
    %172 = vector.broadcast %cst_57 : f32 to vector<8x32xf32>
    %173 = arith.mulf %172, %171 : vector<8x32xf32>
    %174 = arith.mulf %167, %148 : vector<8x32xf32>
    %175 = arith.mulf %162, %168 : vector<8x32xf32>
    %176 = arith.addf %174, %175 : vector<8x32xf32>
    %177 = math.tanh %176 : vector<8x32xf32>
    %178 = arith.mulf %173, %177 : vector<8x32xf32>
    %179 = vector.extract_strided_slice %8 {offsets = [0, 6, 0], sizes = [8, 1, 128], strides = [1, 1, 1]} : vector<8x16x128xf32> to vector<8x1x128xf32>
    %180 = vector.shape_cast %179 : vector<8x1x128xf32> to vector<8x128xf32>
    %cst_58 = arith.constant dense<0.000000e+00> : vector<8x128xf32>
    %181 = tpu.matmul %178, %2, %cst_58 {dimension_numbers = #tpu.dot_dimension_numbers<[1], [0], [0], [1], [0, 0, 1, 1], [], []>} : vector<8x32xf32>, vector<32x128xf32>, vector<8x128xf32> -> vector<8x128xf32>
    %182 = arith.addf %180, %181 : vector<8x128xf32>
    %cst_59 = arith.constant 5.000000e-01 : f32
    %183 = vector.broadcast %cst_59 : f32 to vector<8x128xf32>
    %184 = arith.mulf %183, %182 : vector<8x128xf32>
    %185 = math.tanh %184 : vector<8x128xf32>
    %186 = vector.extract_strided_slice %185 {offsets = [0, 0], sizes = [8, 32], strides = [1, 1]} : vector<8x128xf32> to vector<8x32xf32>
    %cst_60 = arith.constant 1.000000e+00 : f32
    %187 = vector.broadcast %cst_60 : f32 to vector<8x32xf32>
    %188 = arith.addf %186, %187 : vector<8x32xf32>
    %cst_61 = arith.constant 5.000000e-01 : f32
    %189 = vector.broadcast %cst_61 : f32 to vector<8x32xf32>
    %190 = arith.mulf %189, %188 : vector<8x32xf32>
    %191 = vector.extract_strided_slice %185 {offsets = [0, 32], sizes = [8, 32], strides = [1, 1]} : vector<8x128xf32> to vector<8x32xf32>
    %cst_62 = arith.constant 1.000000e+00 : f32
    %192 = vector.broadcast %cst_62 : f32 to vector<8x32xf32>
    %193 = arith.addf %191, %192 : vector<8x32xf32>
    %cst_63 = arith.constant 5.000000e-01 : f32
    %194 = vector.broadcast %cst_63 : f32 to vector<8x32xf32>
    %195 = arith.mulf %194, %193 : vector<8x32xf32>
    %196 = vector.extract_strided_slice %185 {offsets = [0, 64], sizes = [8, 32], strides = [1, 1]} : vector<8x128xf32> to vector<8x32xf32>
    %197 = vector.extract_strided_slice %185 {offsets = [0, 96], sizes = [8, 32], strides = [1, 1]} : vector<8x128xf32> to vector<8x32xf32>
    %cst_64 = arith.constant 1.000000e+00 : f32
    %198 = vector.broadcast %cst_64 : f32 to vector<8x32xf32>
    %199 = arith.addf %197, %198 : vector<8x32xf32>
    %cst_65 = arith.constant 5.000000e-01 : f32
    %200 = vector.broadcast %cst_65 : f32 to vector<8x32xf32>
    %201 = arith.mulf %200, %199 : vector<8x32xf32>
    %202 = arith.mulf %195, %176 : vector<8x32xf32>
    %203 = arith.mulf %190, %196 : vector<8x32xf32>
    %204 = arith.addf %202, %203 : vector<8x32xf32>
    %205 = math.tanh %204 : vector<8x32xf32>
    %206 = arith.mulf %201, %205 : vector<8x32xf32>
    %207 = vector.extract_strided_slice %8 {offsets = [0, 7, 0], sizes = [8, 1, 128], strides = [1, 1, 1]} : vector<8x16x128xf32> to vector<8x1x128xf32>
    %208 = vector.shape_cast %207 : vector<8x1x128xf32> to vector<8x128xf32>
    %cst_66 = arith.constant dense<0.000000e+00> : vector<8x128xf32>
    %209 = tpu.matmul %206, %2, %cst_66 {dimension_numbers = #tpu.dot_dimension_numbers<[1], [0], [0], [1], [0, 0, 1, 1], [], []>} : vector<8x32xf32>, vector<32x128xf32>, vector<8x128xf32> -> vector<8x128xf32>
    %210 = arith.addf %208, %209 : vector<8x128xf32>
    %cst_67 = arith.constant 5.000000e-01 : f32
    %211 = vector.broadcast %cst_67 : f32 to vector<8x128xf32>
    %212 = arith.mulf %211, %210 : vector<8x128xf32>
    %213 = math.tanh %212 : vector<8x128xf32>
    %214 = vector.extract_strided_slice %213 {offsets = [0, 0], sizes = [8, 32], strides = [1, 1]} : vector<8x128xf32> to vector<8x32xf32>
    %cst_68 = arith.constant 1.000000e+00 : f32
    %215 = vector.broadcast %cst_68 : f32 to vector<8x32xf32>
    %216 = arith.addf %214, %215 : vector<8x32xf32>
    %cst_69 = arith.constant 5.000000e-01 : f32
    %217 = vector.broadcast %cst_69 : f32 to vector<8x32xf32>
    %218 = arith.mulf %217, %216 : vector<8x32xf32>
    %219 = vector.extract_strided_slice %213 {offsets = [0, 32], sizes = [8, 32], strides = [1, 1]} : vector<8x128xf32> to vector<8x32xf32>
    %cst_70 = arith.constant 1.000000e+00 : f32
    %220 = vector.broadcast %cst_70 : f32 to vector<8x32xf32>
    %221 = arith.addf %219, %220 : vector<8x32xf32>
    %cst_71 = arith.constant 5.000000e-01 : f32
    %222 = vector.broadcast %cst_71 : f32 to vector<8x32xf32>
    %223 = arith.mulf %222, %221 : vector<8x32xf32>
    %224 = vector.extract_strided_slice %213 {offsets = [0, 64], sizes = [8, 32], strides = [1, 1]} : vector<8x128xf32> to vector<8x32xf32>
    %225 = vector.extract_strided_slice %213 {offsets = [0, 96], sizes = [8, 32], strides = [1, 1]} : vector<8x128xf32> to vector<8x32xf32>
    %cst_72 = arith.constant 1.000000e+00 : f32
    %226 = vector.broadcast %cst_72 : f32 to vector<8x32xf32>
    %227 = arith.addf %225, %226 : vector<8x32xf32>
    %cst_73 = arith.constant 5.000000e-01 : f32
    %228 = vector.broadcast %cst_73 : f32 to vector<8x32xf32>
    %229 = arith.mulf %228, %227 : vector<8x32xf32>
    %230 = arith.mulf %223, %204 : vector<8x32xf32>
    %231 = arith.mulf %218, %224 : vector<8x32xf32>
    %232 = arith.addf %230, %231 : vector<8x32xf32>
    %233 = math.tanh %232 : vector<8x32xf32>
    %234 = arith.mulf %229, %233 : vector<8x32xf32>
    %235 = vector.extract_strided_slice %8 {offsets = [0, 8, 0], sizes = [8, 1, 128], strides = [1, 1, 1]} : vector<8x16x128xf32> to vector<8x1x128xf32>
    %236 = vector.shape_cast %235 : vector<8x1x128xf32> to vector<8x128xf32>
    %cst_74 = arith.constant dense<0.000000e+00> : vector<8x128xf32>
    %237 = tpu.matmul %234, %2, %cst_74 {dimension_numbers = #tpu.dot_dimension_numbers<[1], [0], [0], [1], [0, 0, 1, 1], [], []>} : vector<8x32xf32>, vector<32x128xf32>, vector<8x128xf32> -> vector<8x128xf32>
    %238 = arith.addf %236, %237 : vector<8x128xf32>
    %cst_75 = arith.constant 5.000000e-01 : f32
    %239 = vector.broadcast %cst_75 : f32 to vector<8x128xf32>
    %240 = arith.mulf %239, %238 : vector<8x128xf32>
    %241 = math.tanh %240 : vector<8x128xf32>
    %242 = vector.extract_strided_slice %241 {offsets = [0, 0], sizes = [8, 32], strides = [1, 1]} : vector<8x128xf32> to vector<8x32xf32>
    %cst_76 = arith.constant 1.000000e+00 : f32
    %243 = vector.broadcast %cst_76 : f32 to vector<8x32xf32>
    %244 = arith.addf %242, %243 : vector<8x32xf32>
    %cst_77 = arith.constant 5.000000e-01 : f32
    %245 = vector.broadcast %cst_77 : f32 to vector<8x32xf32>
    %246 = arith.mulf %245, %244 : vector<8x32xf32>
    %247 = vector.extract_strided_slice %241 {offsets = [0, 32], sizes = [8, 32], strides = [1, 1]} : vector<8x128xf32> to vector<8x32xf32>
    %cst_78 = arith.constant 1.000000e+00 : f32
    %248 = vector.broadcast %cst_78 : f32 to vector<8x32xf32>
    %249 = arith.addf %247, %248 : vector<8x32xf32>
    %cst_79 = arith.constant 5.000000e-01 : f32
    %250 = vector.broadcast %cst_79 : f32 to vector<8x32xf32>
    %251 = arith.mulf %250, %249 : vector<8x32xf32>
    %252 = vector.extract_strided_slice %241 {offsets = [0, 64], sizes = [8, 32], strides = [1, 1]} : vector<8x128xf32> to vector<8x32xf32>
    %253 = vector.extract_strided_slice %241 {offsets = [0, 96], sizes = [8, 32], strides = [1, 1]} : vector<8x128xf32> to vector<8x32xf32>
    %cst_80 = arith.constant 1.000000e+00 : f32
    %254 = vector.broadcast %cst_80 : f32 to vector<8x32xf32>
    %255 = arith.addf %253, %254 : vector<8x32xf32>
    %cst_81 = arith.constant 5.000000e-01 : f32
    %256 = vector.broadcast %cst_81 : f32 to vector<8x32xf32>
    %257 = arith.mulf %256, %255 : vector<8x32xf32>
    %258 = arith.mulf %251, %232 : vector<8x32xf32>
    %259 = arith.mulf %246, %252 : vector<8x32xf32>
    %260 = arith.addf %258, %259 : vector<8x32xf32>
    %261 = math.tanh %260 : vector<8x32xf32>
    %262 = arith.mulf %257, %261 : vector<8x32xf32>
    %263 = vector.extract_strided_slice %8 {offsets = [0, 9, 0], sizes = [8, 1, 128], strides = [1, 1, 1]} : vector<8x16x128xf32> to vector<8x1x128xf32>
    %264 = vector.shape_cast %263 : vector<8x1x128xf32> to vector<8x128xf32>
    %cst_82 = arith.constant dense<0.000000e+00> : vector<8x128xf32>
    %265 = tpu.matmul %262, %2, %cst_82 {dimension_numbers = #tpu.dot_dimension_numbers<[1], [0], [0], [1], [0, 0, 1, 1], [], []>} : vector<8x32xf32>, vector<32x128xf32>, vector<8x128xf32> -> vector<8x128xf32>
    %266 = arith.addf %264, %265 : vector<8x128xf32>
    %cst_83 = arith.constant 5.000000e-01 : f32
    %267 = vector.broadcast %cst_83 : f32 to vector<8x128xf32>
    %268 = arith.mulf %267, %266 : vector<8x128xf32>
    %269 = math.tanh %268 : vector<8x128xf32>
    %270 = vector.extract_strided_slice %269 {offsets = [0, 0], sizes = [8, 32], strides = [1, 1]} : vector<8x128xf32> to vector<8x32xf32>
    %cst_84 = arith.constant 1.000000e+00 : f32
    %271 = vector.broadcast %cst_84 : f32 to vector<8x32xf32>
    %272 = arith.addf %270, %271 : vector<8x32xf32>
    %cst_85 = arith.constant 5.000000e-01 : f32
    %273 = vector.broadcast %cst_85 : f32 to vector<8x32xf32>
    %274 = arith.mulf %273, %272 : vector<8x32xf32>
    %275 = vector.extract_strided_slice %269 {offsets = [0, 32], sizes = [8, 32], strides = [1, 1]} : vector<8x128xf32> to vector<8x32xf32>
    %cst_86 = arith.constant 1.000000e+00 : f32
    %276 = vector.broadcast %cst_86 : f32 to vector<8x32xf32>
    %277 = arith.addf %275, %276 : vector<8x32xf32>
    %cst_87 = arith.constant 5.000000e-01 : f32
    %278 = vector.broadcast %cst_87 : f32 to vector<8x32xf32>
    %279 = arith.mulf %278, %277 : vector<8x32xf32>
    %280 = vector.extract_strided_slice %269 {offsets = [0, 64], sizes = [8, 32], strides = [1, 1]} : vector<8x128xf32> to vector<8x32xf32>
    %281 = vector.extract_strided_slice %269 {offsets = [0, 96], sizes = [8, 32], strides = [1, 1]} : vector<8x128xf32> to vector<8x32xf32>
    %cst_88 = arith.constant 1.000000e+00 : f32
    %282 = vector.broadcast %cst_88 : f32 to vector<8x32xf32>
    %283 = arith.addf %281, %282 : vector<8x32xf32>
    %cst_89 = arith.constant 5.000000e-01 : f32
    %284 = vector.broadcast %cst_89 : f32 to vector<8x32xf32>
    %285 = arith.mulf %284, %283 : vector<8x32xf32>
    %286 = arith.mulf %279, %260 : vector<8x32xf32>
    %287 = arith.mulf %274, %280 : vector<8x32xf32>
    %288 = arith.addf %286, %287 : vector<8x32xf32>
    %289 = math.tanh %288 : vector<8x32xf32>
    %290 = arith.mulf %285, %289 : vector<8x32xf32>
    %291 = vector.extract_strided_slice %8 {offsets = [0, 10, 0], sizes = [8, 1, 128], strides = [1, 1, 1]} : vector<8x16x128xf32> to vector<8x1x128xf32>
    %292 = vector.shape_cast %291 : vector<8x1x128xf32> to vector<8x128xf32>
    %cst_90 = arith.constant dense<0.000000e+00> : vector<8x128xf32>
    %293 = tpu.matmul %290, %2, %cst_90 {dimension_numbers = #tpu.dot_dimension_numbers<[1], [0], [0], [1], [0, 0, 1, 1], [], []>} : vector<8x32xf32>, vector<32x128xf32>, vector<8x128xf32> -> vector<8x128xf32>
    %294 = arith.addf %292, %293 : vector<8x128xf32>
    %cst_91 = arith.constant 5.000000e-01 : f32
    %295 = vector.broadcast %cst_91 : f32 to vector<8x128xf32>
    %296 = arith.mulf %295, %294 : vector<8x128xf32>
    %297 = math.tanh %296 : vector<8x128xf32>
    %298 = vector.extract_strided_slice %297 {offsets = [0, 0], sizes = [8, 32], strides = [1, 1]} : vector<8x128xf32> to vector<8x32xf32>
    %cst_92 = arith.constant 1.000000e+00 : f32
    %299 = vector.broadcast %cst_92 : f32 to vector<8x32xf32>
    %300 = arith.addf %298, %299 : vector<8x32xf32>
    %cst_93 = arith.constant 5.000000e-01 : f32
    %301 = vector.broadcast %cst_93 : f32 to vector<8x32xf32>
    %302 = arith.mulf %301, %300 : vector<8x32xf32>
    %303 = vector.extract_strided_slice %297 {offsets = [0, 32], sizes = [8, 32], strides = [1, 1]} : vector<8x128xf32> to vector<8x32xf32>
    %cst_94 = arith.constant 1.000000e+00 : f32
    %304 = vector.broadcast %cst_94 : f32 to vector<8x32xf32>
    %305 = arith.addf %303, %304 : vector<8x32xf32>
    %cst_95 = arith.constant 5.000000e-01 : f32
    %306 = vector.broadcast %cst_95 : f32 to vector<8x32xf32>
    %307 = arith.mulf %306, %305 : vector<8x32xf32>
    %308 = vector.extract_strided_slice %297 {offsets = [0, 64], sizes = [8, 32], strides = [1, 1]} : vector<8x128xf32> to vector<8x32xf32>
    %309 = vector.extract_strided_slice %297 {offsets = [0, 96], sizes = [8, 32], strides = [1, 1]} : vector<8x128xf32> to vector<8x32xf32>
    %cst_96 = arith.constant 1.000000e+00 : f32
    %310 = vector.broadcast %cst_96 : f32 to vector<8x32xf32>
    %311 = arith.addf %309, %310 : vector<8x32xf32>
    %cst_97 = arith.constant 5.000000e-01 : f32
    %312 = vector.broadcast %cst_97 : f32 to vector<8x32xf32>
    %313 = arith.mulf %312, %311 : vector<8x32xf32>
    %314 = arith.mulf %307, %288 : vector<8x32xf32>
    %315 = arith.mulf %302, %308 : vector<8x32xf32>
    %316 = arith.addf %314, %315 : vector<8x32xf32>
    %317 = math.tanh %316 : vector<8x32xf32>
    %318 = arith.mulf %313, %317 : vector<8x32xf32>
    %319 = vector.extract_strided_slice %8 {offsets = [0, 11, 0], sizes = [8, 1, 128], strides = [1, 1, 1]} : vector<8x16x128xf32> to vector<8x1x128xf32>
    %320 = vector.shape_cast %319 : vector<8x1x128xf32> to vector<8x128xf32>
    %cst_98 = arith.constant dense<0.000000e+00> : vector<8x128xf32>
    %321 = tpu.matmul %318, %2, %cst_98 {dimension_numbers = #tpu.dot_dimension_numbers<[1], [0], [0], [1], [0, 0, 1, 1], [], []>} : vector<8x32xf32>, vector<32x128xf32>, vector<8x128xf32> -> vector<8x128xf32>
    %322 = arith.addf %320, %321 : vector<8x128xf32>
    %cst_99 = arith.constant 5.000000e-01 : f32
    %323 = vector.broadcast %cst_99 : f32 to vector<8x128xf32>
    %324 = arith.mulf %323, %322 : vector<8x128xf32>
    %325 = math.tanh %324 : vector<8x128xf32>
    %326 = vector.extract_strided_slice %325 {offsets = [0, 0], sizes = [8, 32], strides = [1, 1]} : vector<8x128xf32> to vector<8x32xf32>
    %cst_100 = arith.constant 1.000000e+00 : f32
    %327 = vector.broadcast %cst_100 : f32 to vector<8x32xf32>
    %328 = arith.addf %326, %327 : vector<8x32xf32>
    %cst_101 = arith.constant 5.000000e-01 : f32
    %329 = vector.broadcast %cst_101 : f32 to vector<8x32xf32>
    %330 = arith.mulf %329, %328 : vector<8x32xf32>
    %331 = vector.extract_strided_slice %325 {offsets = [0, 32], sizes = [8, 32], strides = [1, 1]} : vector<8x128xf32> to vector<8x32xf32>
    %cst_102 = arith.constant 1.000000e+00 : f32
    %332 = vector.broadcast %cst_102 : f32 to vector<8x32xf32>
    %333 = arith.addf %331, %332 : vector<8x32xf32>
    %cst_103 = arith.constant 5.000000e-01 : f32
    %334 = vector.broadcast %cst_103 : f32 to vector<8x32xf32>
    %335 = arith.mulf %334, %333 : vector<8x32xf32>
    %336 = vector.extract_strided_slice %325 {offsets = [0, 64], sizes = [8, 32], strides = [1, 1]} : vector<8x128xf32> to vector<8x32xf32>
    %337 = vector.extract_strided_slice %325 {offsets = [0, 96], sizes = [8, 32], strides = [1, 1]} : vector<8x128xf32> to vector<8x32xf32>
    %cst_104 = arith.constant 1.000000e+00 : f32
    %338 = vector.broadcast %cst_104 : f32 to vector<8x32xf32>
    %339 = arith.addf %337, %338 : vector<8x32xf32>
    %cst_105 = arith.constant 5.000000e-01 : f32
    %340 = vector.broadcast %cst_105 : f32 to vector<8x32xf32>
    %341 = arith.mulf %340, %339 : vector<8x32xf32>
    %342 = arith.mulf %335, %316 : vector<8x32xf32>
    %343 = arith.mulf %330, %336 : vector<8x32xf32>
    %344 = arith.addf %342, %343 : vector<8x32xf32>
    %345 = math.tanh %344 : vector<8x32xf32>
    %346 = arith.mulf %341, %345 : vector<8x32xf32>
    %347 = vector.extract_strided_slice %8 {offsets = [0, 12, 0], sizes = [8, 1, 128], strides = [1, 1, 1]} : vector<8x16x128xf32> to vector<8x1x128xf32>
    %348 = vector.shape_cast %347 : vector<8x1x128xf32> to vector<8x128xf32>
    %cst_106 = arith.constant dense<0.000000e+00> : vector<8x128xf32>
    %349 = tpu.matmul %346, %2, %cst_106 {dimension_numbers = #tpu.dot_dimension_numbers<[1], [0], [0], [1], [0, 0, 1, 1], [], []>} : vector<8x32xf32>, vector<32x128xf32>, vector<8x128xf32> -> vector<8x128xf32>
    %350 = arith.addf %348, %349 : vector<8x128xf32>
    %cst_107 = arith.constant 5.000000e-01 : f32
    %351 = vector.broadcast %cst_107 : f32 to vector<8x128xf32>
    %352 = arith.mulf %351, %350 : vector<8x128xf32>
    %353 = math.tanh %352 : vector<8x128xf32>
    %354 = vector.extract_strided_slice %353 {offsets = [0, 0], sizes = [8, 32], strides = [1, 1]} : vector<8x128xf32> to vector<8x32xf32>
    %cst_108 = arith.constant 1.000000e+00 : f32
    %355 = vector.broadcast %cst_108 : f32 to vector<8x32xf32>
    %356 = arith.addf %354, %355 : vector<8x32xf32>
    %cst_109 = arith.constant 5.000000e-01 : f32
    %357 = vector.broadcast %cst_109 : f32 to vector<8x32xf32>
    %358 = arith.mulf %357, %356 : vector<8x32xf32>
    %359 = vector.extract_strided_slice %353 {offsets = [0, 32], sizes = [8, 32], strides = [1, 1]} : vector<8x128xf32> to vector<8x32xf32>
    %cst_110 = arith.constant 1.000000e+00 : f32
    %360 = vector.broadcast %cst_110 : f32 to vector<8x32xf32>
    %361 = arith.addf %359, %360 : vector<8x32xf32>
    %cst_111 = arith.constant 5.000000e-01 : f32
    %362 = vector.broadcast %cst_111 : f32 to vector<8x32xf32>
    %363 = arith.mulf %362, %361 : vector<8x32xf32>
    %364 = vector.extract_strided_slice %353 {offsets = [0, 64], sizes = [8, 32], strides = [1, 1]} : vector<8x128xf32> to vector<8x32xf32>
    %365 = vector.extract_strided_slice %353 {offsets = [0, 96], sizes = [8, 32], strides = [1, 1]} : vector<8x128xf32> to vector<8x32xf32>
    %cst_112 = arith.constant 1.000000e+00 : f32
    %366 = vector.broadcast %cst_112 : f32 to vector<8x32xf32>
    %367 = arith.addf %365, %366 : vector<8x32xf32>
    %cst_113 = arith.constant 5.000000e-01 : f32
    %368 = vector.broadcast %cst_113 : f32 to vector<8x32xf32>
    %369 = arith.mulf %368, %367 : vector<8x32xf32>
    %370 = arith.mulf %363, %344 : vector<8x32xf32>
    %371 = arith.mulf %358, %364 : vector<8x32xf32>
    %372 = arith.addf %370, %371 : vector<8x32xf32>
    %373 = math.tanh %372 : vector<8x32xf32>
    %374 = arith.mulf %369, %373 : vector<8x32xf32>
    %375 = vector.extract_strided_slice %8 {offsets = [0, 13, 0], sizes = [8, 1, 128], strides = [1, 1, 1]} : vector<8x16x128xf32> to vector<8x1x128xf32>
    %376 = vector.shape_cast %375 : vector<8x1x128xf32> to vector<8x128xf32>
    %cst_114 = arith.constant dense<0.000000e+00> : vector<8x128xf32>
    %377 = tpu.matmul %374, %2, %cst_114 {dimension_numbers = #tpu.dot_dimension_numbers<[1], [0], [0], [1], [0, 0, 1, 1], [], []>} : vector<8x32xf32>, vector<32x128xf32>, vector<8x128xf32> -> vector<8x128xf32>
    %378 = arith.addf %376, %377 : vector<8x128xf32>
    %cst_115 = arith.constant 5.000000e-01 : f32
    %379 = vector.broadcast %cst_115 : f32 to vector<8x128xf32>
    %380 = arith.mulf %379, %378 : vector<8x128xf32>
    %381 = math.tanh %380 : vector<8x128xf32>
    %382 = vector.extract_strided_slice %381 {offsets = [0, 0], sizes = [8, 32], strides = [1, 1]} : vector<8x128xf32> to vector<8x32xf32>
    %cst_116 = arith.constant 1.000000e+00 : f32
    %383 = vector.broadcast %cst_116 : f32 to vector<8x32xf32>
    %384 = arith.addf %382, %383 : vector<8x32xf32>
    %cst_117 = arith.constant 5.000000e-01 : f32
    %385 = vector.broadcast %cst_117 : f32 to vector<8x32xf32>
    %386 = arith.mulf %385, %384 : vector<8x32xf32>
    %387 = vector.extract_strided_slice %381 {offsets = [0, 32], sizes = [8, 32], strides = [1, 1]} : vector<8x128xf32> to vector<8x32xf32>
    %cst_118 = arith.constant 1.000000e+00 : f32
    %388 = vector.broadcast %cst_118 : f32 to vector<8x32xf32>
    %389 = arith.addf %387, %388 : vector<8x32xf32>
    %cst_119 = arith.constant 5.000000e-01 : f32
    %390 = vector.broadcast %cst_119 : f32 to vector<8x32xf32>
    %391 = arith.mulf %390, %389 : vector<8x32xf32>
    %392 = vector.extract_strided_slice %381 {offsets = [0, 64], sizes = [8, 32], strides = [1, 1]} : vector<8x128xf32> to vector<8x32xf32>
    %393 = vector.extract_strided_slice %381 {offsets = [0, 96], sizes = [8, 32], strides = [1, 1]} : vector<8x128xf32> to vector<8x32xf32>
    %cst_120 = arith.constant 1.000000e+00 : f32
    %394 = vector.broadcast %cst_120 : f32 to vector<8x32xf32>
    %395 = arith.addf %393, %394 : vector<8x32xf32>
    %cst_121 = arith.constant 5.000000e-01 : f32
    %396 = vector.broadcast %cst_121 : f32 to vector<8x32xf32>
    %397 = arith.mulf %396, %395 : vector<8x32xf32>
    %398 = arith.mulf %391, %372 : vector<8x32xf32>
    %399 = arith.mulf %386, %392 : vector<8x32xf32>
    %400 = arith.addf %398, %399 : vector<8x32xf32>
    %401 = math.tanh %400 : vector<8x32xf32>
    %402 = arith.mulf %397, %401 : vector<8x32xf32>
    %403 = vector.extract_strided_slice %8 {offsets = [0, 14, 0], sizes = [8, 1, 128], strides = [1, 1, 1]} : vector<8x16x128xf32> to vector<8x1x128xf32>
    %404 = vector.shape_cast %403 : vector<8x1x128xf32> to vector<8x128xf32>
    %cst_122 = arith.constant dense<0.000000e+00> : vector<8x128xf32>
    %405 = tpu.matmul %402, %2, %cst_122 {dimension_numbers = #tpu.dot_dimension_numbers<[1], [0], [0], [1], [0, 0, 1, 1], [], []>} : vector<8x32xf32>, vector<32x128xf32>, vector<8x128xf32> -> vector<8x128xf32>
    %406 = arith.addf %404, %405 : vector<8x128xf32>
    %cst_123 = arith.constant 5.000000e-01 : f32
    %407 = vector.broadcast %cst_123 : f32 to vector<8x128xf32>
    %408 = arith.mulf %407, %406 : vector<8x128xf32>
    %409 = math.tanh %408 : vector<8x128xf32>
    %410 = vector.extract_strided_slice %409 {offsets = [0, 0], sizes = [8, 32], strides = [1, 1]} : vector<8x128xf32> to vector<8x32xf32>
    %cst_124 = arith.constant 1.000000e+00 : f32
    %411 = vector.broadcast %cst_124 : f32 to vector<8x32xf32>
    %412 = arith.addf %410, %411 : vector<8x32xf32>
    %cst_125 = arith.constant 5.000000e-01 : f32
    %413 = vector.broadcast %cst_125 : f32 to vector<8x32xf32>
    %414 = arith.mulf %413, %412 : vector<8x32xf32>
    %415 = vector.extract_strided_slice %409 {offsets = [0, 32], sizes = [8, 32], strides = [1, 1]} : vector<8x128xf32> to vector<8x32xf32>
    %cst_126 = arith.constant 1.000000e+00 : f32
    %416 = vector.broadcast %cst_126 : f32 to vector<8x32xf32>
    %417 = arith.addf %415, %416 : vector<8x32xf32>
    %cst_127 = arith.constant 5.000000e-01 : f32
    %418 = vector.broadcast %cst_127 : f32 to vector<8x32xf32>
    %419 = arith.mulf %418, %417 : vector<8x32xf32>
    %420 = vector.extract_strided_slice %409 {offsets = [0, 64], sizes = [8, 32], strides = [1, 1]} : vector<8x128xf32> to vector<8x32xf32>
    %421 = vector.extract_strided_slice %409 {offsets = [0, 96], sizes = [8, 32], strides = [1, 1]} : vector<8x128xf32> to vector<8x32xf32>
    %cst_128 = arith.constant 1.000000e+00 : f32
    %422 = vector.broadcast %cst_128 : f32 to vector<8x32xf32>
    %423 = arith.addf %421, %422 : vector<8x32xf32>
    %cst_129 = arith.constant 5.000000e-01 : f32
    %424 = vector.broadcast %cst_129 : f32 to vector<8x32xf32>
    %425 = arith.mulf %424, %423 : vector<8x32xf32>
    %426 = arith.mulf %419, %400 : vector<8x32xf32>
    %427 = arith.mulf %414, %420 : vector<8x32xf32>
    %428 = arith.addf %426, %427 : vector<8x32xf32>
    %429 = math.tanh %428 : vector<8x32xf32>
    %430 = arith.mulf %425, %429 : vector<8x32xf32>
    %431 = vector.extract_strided_slice %8 {offsets = [0, 15, 0], sizes = [8, 1, 128], strides = [1, 1, 1]} : vector<8x16x128xf32> to vector<8x1x128xf32>
    %432 = vector.shape_cast %431 : vector<8x1x128xf32> to vector<8x128xf32>
    %cst_130 = arith.constant dense<0.000000e+00> : vector<8x128xf32>
    %433 = tpu.matmul %430, %2, %cst_130 {dimension_numbers = #tpu.dot_dimension_numbers<[1], [0], [0], [1], [0, 0, 1, 1], [], []>} : vector<8x32xf32>, vector<32x128xf32>, vector<8x128xf32> -> vector<8x128xf32>
    %434 = arith.addf %432, %433 : vector<8x128xf32>
    %cst_131 = arith.constant 5.000000e-01 : f32
    %435 = vector.broadcast %cst_131 : f32 to vector<8x128xf32>
    %436 = arith.mulf %435, %434 : vector<8x128xf32>
    %437 = math.tanh %436 : vector<8x128xf32>
    %438 = vector.extract_strided_slice %437 {offsets = [0, 0], sizes = [8, 32], strides = [1, 1]} : vector<8x128xf32> to vector<8x32xf32>
    %cst_132 = arith.constant 1.000000e+00 : f32
    %439 = vector.broadcast %cst_132 : f32 to vector<8x32xf32>
    %440 = arith.addf %438, %439 : vector<8x32xf32>
    %cst_133 = arith.constant 5.000000e-01 : f32
    %441 = vector.broadcast %cst_133 : f32 to vector<8x32xf32>
    %442 = arith.mulf %441, %440 : vector<8x32xf32>
    %443 = vector.extract_strided_slice %437 {offsets = [0, 32], sizes = [8, 32], strides = [1, 1]} : vector<8x128xf32> to vector<8x32xf32>
    %cst_134 = arith.constant 1.000000e+00 : f32
    %444 = vector.broadcast %cst_134 : f32 to vector<8x32xf32>
    %445 = arith.addf %443, %444 : vector<8x32xf32>
    %cst_135 = arith.constant 5.000000e-01 : f32
    %446 = vector.broadcast %cst_135 : f32 to vector<8x32xf32>
    %447 = arith.mulf %446, %445 : vector<8x32xf32>
    %448 = vector.extract_strided_slice %437 {offsets = [0, 64], sizes = [8, 32], strides = [1, 1]} : vector<8x128xf32> to vector<8x32xf32>
    %449 = vector.extract_strided_slice %437 {offsets = [0, 96], sizes = [8, 32], strides = [1, 1]} : vector<8x128xf32> to vector<8x32xf32>
    %cst_136 = arith.constant 1.000000e+00 : f32
    %450 = vector.broadcast %cst_136 : f32 to vector<8x32xf32>
    %451 = arith.addf %449, %450 : vector<8x32xf32>
    %cst_137 = arith.constant 5.000000e-01 : f32
    %452 = vector.broadcast %cst_137 : f32 to vector<8x32xf32>
    %453 = arith.mulf %452, %451 : vector<8x32xf32>
    %454 = arith.mulf %447, %428 : vector<8x32xf32>
    %455 = arith.mulf %442, %448 : vector<8x32xf32>
    %456 = arith.addf %454, %455 : vector<8x32xf32>
    %457 = math.tanh %456 : vector<8x32xf32>
    %458 = arith.mulf %453, %457 : vector<8x32xf32>
    %c0_138 = arith.constant 0 : index
    %c0_139 = arith.constant 0 : index
    %459 = vector.load %arg5[%c0_138, %c0_139] : memref<32x32xf32, #tpu.memory_space<vmem>>, vector<32x32xf32>
    %cst_140 = arith.constant dense<0.000000e+00> : vector<8x32xf32>
    %460 = tpu.matmul %458, %459, %cst_140 {dimension_numbers = #tpu.dot_dimension_numbers<[1], [0], [0], [1], [0, 0, 1, 1], [], []>} : vector<8x32xf32>, vector<32x32xf32>, vector<8x32xf32> -> vector<8x32xf32>
    %c0_141 = arith.constant 0 : index
    %c0_142 = arith.constant 0 : index
    %461 = vector.load %arg6[%c0_141, %c0_142] : memref<1x32xf32, #tpu.memory_space<vmem>>, vector<1x32xf32>
    %462 = vector.broadcast %461 : vector<1x32xf32> to vector<8x32xf32>
    %463 = arith.addf %460, %462 : vector<8x32xf32>
    %cst_143 = arith.constant 0.000000e+00 : f32
    %464 = vector.broadcast %cst_143 : f32 to vector<8x32xf32>
    %465 = arith.maximumf %463, %464 : vector<8x32xf32>
    %466 = vector.extract_strided_slice %0 {offsets = [0, 15, 0], sizes = [8, 1, 2], strides = [1, 1, 1]} : vector<8x16x8xf32> to vector<8x1x2xf32>
    %467 = vector.shape_cast %466 : vector<8x1x2xf32> to vector<8x2xf32>
    %c0_144 = arith.constant 0 : index
    %c0_145 = arith.constant 0 : index
    %468 = vector.load %arg9[%c0_144, %c0_145] : memref<2x128xf32, #tpu.memory_space<vmem>>, vector<2x128xf32>
    %c0_146 = arith.constant 0 : index
    %c0_147 = arith.constant 0 : index
    %469 = vector.load %arg7[%c0_146, %c0_147] : memref<32x128xf32, #tpu.memory_space<vmem>>, vector<32x128xf32>
    %cst_148 = arith.constant dense<0.000000e+00> : vector<8x128xf32>
    %470 = tpu.matmul %465, %469, %cst_148 {dimension_numbers = #tpu.dot_dimension_numbers<[1], [0], [0], [1], [0, 0, 1, 1], [], []>} : vector<8x32xf32>, vector<32x128xf32>, vector<8x128xf32> -> vector<8x128xf32>
    %c0_149 = arith.constant 0 : index
    %c0_150 = arith.constant 0 : index
    %471 = vector.load %arg8[%c0_149, %c0_150] : memref<1x128xf32, #tpu.memory_space<vmem>>, vector<1x128xf32>
    %472 = vector.broadcast %471 : vector<1x128xf32> to vector<8x128xf32>
    %473 = arith.addf %470, %472 : vector<8x128xf32>
    %474 = vector.extract_strided_slice %467 {offsets = [0, 0], sizes = [8, 1], strides = [1, 1]} : vector<8x2xf32> to vector<8x1xf32>
    %475 = vector.extract_strided_slice %468 {offsets = [0, 0], sizes = [1, 128], strides = [1, 1]} : vector<2x128xf32> to vector<1x128xf32>
    %476 = vector.broadcast %474 : vector<8x1xf32> to vector<8x128xf32>
    %477 = vector.broadcast %475 : vector<1x128xf32> to vector<8x128xf32>
    %478 = arith.mulf %476, %477 : vector<8x128xf32>
    %479 = arith.addf %473, %478 : vector<8x128xf32>
    %480 = vector.extract_strided_slice %467 {offsets = [0, 1], sizes = [8, 1], strides = [1, 1]} : vector<8x2xf32> to vector<8x1xf32>
    %481 = vector.extract_strided_slice %468 {offsets = [1, 0], sizes = [1, 128], strides = [1, 1]} : vector<2x128xf32> to vector<1x128xf32>
    %482 = vector.broadcast %480 : vector<8x1xf32> to vector<8x128xf32>
    %483 = vector.broadcast %481 : vector<1x128xf32> to vector<8x128xf32>
    %484 = arith.mulf %482, %483 : vector<8x128xf32>
    %485 = arith.addf %479, %484 : vector<8x128xf32>
    %c0_151 = arith.constant 0 : index
    %c0_152 = arith.constant 0 : index
    %486 = vector.load %arg10[%c0_151, %c0_152] : memref<8x128xf32, #tpu.memory_space<vmem>>, vector<8x128xf32>
    tpu.vector_store %arg10[%c0_151, %c0_152], %485 {strides = array<i32>} : memref<8x128xf32, #tpu.memory_space<vmem>>, vector<8x128xf32>,
    return
  }
  func.func @transform_0(%arg0: i32) -> (i32, i32, i32) {
    %c0_i32 = arith.constant 0 : i32
    %c0_i32_0 = arith.constant 0 : i32
    %c0_i32_1 = arith.constant 0 : i32
    return %arg0, %c0_i32, %c0_i32_0 : i32, i32, i32
  }
  func.func @transform_1(%arg0: i32) -> (i32, i32) {
    %c0_i32 = arith.constant 0 : i32
    %c0_i32_0 = arith.constant 0 : i32
    %c0_i32_1 = arith.constant 0 : i32
    return %c0_i32, %c0_i32_0 : i32, i32
  }
  func.func @transform_2(%arg0: i32) -> (i32, i32) {
    %c0_i32 = arith.constant 0 : i32
    %c0_i32_0 = arith.constant 0 : i32
    %c0_i32_1 = arith.constant 0 : i32
    return %c0_i32, %c0_i32_0 : i32, i32
  }
  func.func @transform_3(%arg0: i32) -> (i32, i32) {
    %c0_i32 = arith.constant 0 : i32
    %c0_i32_0 = arith.constant 0 : i32
    %c0_i32_1 = arith.constant 0 : i32
    return %c0_i32, %c0_i32_0 : i32, i32
  }
  func.func @transform_4(%arg0: i32) -> (i32, i32) {
    %c0_i32 = arith.constant 0 : i32
    %c0_i32_0 = arith.constant 0 : i32
    %c0_i32_1 = arith.constant 0 : i32
    return %c0_i32, %c0_i32_0 : i32, i32
  }
  func.func @transform_5(%arg0: i32) -> (i32, i32) {
    %c0_i32 = arith.constant 0 : i32
    %c0_i32_0 = arith.constant 0 : i32
    %c0_i32_1 = arith.constant 0 : i32
    return %c0_i32, %c0_i32_0 : i32, i32
  }
  func.func @transform_6(%arg0: i32) -> (i32, i32) {
    %c0_i32 = arith.constant 0 : i32
    %c0_i32_0 = arith.constant 0 : i32
    %c0_i32_1 = arith.constant 0 : i32
    return %c0_i32, %c0_i32_0 : i32, i32
  }
  func.func @transform_7(%arg0: i32) -> (i32, i32) {
    %c0_i32 = arith.constant 0 : i32
    %c0_i32_0 = arith.constant 0 : i32
    %c0_i32_1 = arith.constant 0 : i32
    return %c0_i32, %c0_i32_0 : i32, i32
  }
  func.func @transform_8(%arg0: i32) -> (i32, i32) {
    %c0_i32 = arith.constant 0 : i32
    %c0_i32_0 = arith.constant 0 : i32
    %c0_i32_1 = arith.constant 0 : i32
    return %c0_i32, %c0_i32_0 : i32, i32
  }
  func.func @transform_9(%arg0: i32) -> (i32, i32) {
    %c0_i32 = arith.constant 0 : i32
    %c0_i32_0 = arith.constant 0 : i32
    return %arg0, %c0_i32 : i32, i32
  }
}

</mosaic_0001>

<llo_original>
// kernel: tpu_custom_call.1
$region0: #{tpu_custom_call.1}
  #allocation0 [shape = 'u32[]', space=smem, size = 0x4, offset = 0x4, fixed_abs, tag = 'smem constant byte address 0x4 - core index']
  #allocation1 [shape = 'u32[144,128]{1,0:T(1,128)}', space=vmem, size = 0x12000, scoped, tag = 'internal scratch']
  %s0 = inlined_call_operand.vmem [shape: f32[8,16,8], index: 0, kind: input, shape index: {}]
  %s1 = inlined_call_operand.vmem [shape: f32[8,128], index: 1, kind: input, shape index: {}]
  %s2 = inlined_call_operand.vmem [shape: f32[32,128], index: 2, kind: input, shape index: {}]
  %s3 = inlined_call_operand.vmem [shape: f32[1,128], index: 3, kind: input, shape index: {}]
  %s4 = inlined_call_operand.vmem [shape: f32[32,32], index: 4, kind: input, shape index: {}]
  %s5 = inlined_call_operand.vmem [shape: f32[1,32], index: 5, kind: input, shape index: {}]
  %s6 = inlined_call_operand.vmem [shape: f32[32,128], index: 6, kind: input, shape index: {}]
  %s7 = inlined_call_operand.vmem [shape: f32[1,128], index: 7, kind: input, shape index: {}]
  %s8 = inlined_call_operand.vmem [shape: f32[2,128], index: 8, kind: input, shape index: {}]
  %s9 = inlined_call_operand.hbm [shape: f32[8,128], index: 9, kind: output, shape index: {}]
  %s10 = sld [smem:[#allocation0]]
  $region46: #{tpu_custom_call.1} parent=0
    _
  %s12 = ssub.s32 1, %s10
  %s13 = scalar_select 0, %s12, %s10
  $region1: #{tpu_custom_call.1} parent=0
    #allocation2 [shape = 'u8[4096]{0}', space=vmem, size = 0x1000, scoped, tag = 'output window, operand 0, single buffered']
    #allocation3 [shape = 's32[1]{0}', space=sflag, size = 0x4, scoped, tag = 'scoped memory for tpu_custom_call.1']
    %14 = vsyncpa [#allocation3], 0
    // Predicated region
    $region2: #{tpu_custom_call.1} parent=1 // pred_check
      _
    $region3: #{tpu_custom_call.1} parent=1 // pred_check_branch
      %16 = sbr.rel (0) target = $region5
    $region4: #{tpu_custom_call.1} parent=1 // pred_region
      _
    $region5: #{tpu_custom_call.1} parent=1 // pred_fallthru
      _
    // Predicated region
    $region6: #{tpu_custom_call.1} parent=1 // pred_check
      _
    $region7: #{tpu_custom_call.1} parent=1 // pred_check_branch
      %18 = sbr.rel (0) target = $region9
    $region8: #{tpu_custom_call.1} parent=1 // pred_region
      _
    $region9: #{tpu_custom_call.1} parent=1 // pred_fallthru
      _
    // Predicated region
    $region10: #{tpu_custom_call.1} parent=1 // pred_check
      _
    $region11: #{tpu_custom_call.1} parent=1 // pred_check_branch
      %20 = sbr.rel (0) target = $region13
    $region12: #{tpu_custom_call.1} parent=1 // pred_region
      _
    $region13: #{tpu_custom_call.1} parent=1 // pred_fallthru
      _
    // Predicated region
    $region14: #{tpu_custom_call.1} parent=1 // pred_check
      _
    $region15: #{tpu_custom_call.1} parent=1 // pred_check_branch
      %22 = sbr.rel (0) target = $region17
    $region16: #{tpu_custom_call.1} parent=1 // pred_region
      _
    $region17: #{tpu_custom_call.1} parent=1 // pred_fallthru
      _
    // Predicated region
    $region18: #{tpu_custom_call.1} parent=1 // pred_check
      _
    $region19: #{tpu_custom_call.1} parent=1 // pred_check_branch
      %24 = sbr.rel (0) target = $region21
    $region20: #{tpu_custom_call.1} parent=1 // pred_region
      _
    $region21: #{tpu_custom_call.1} parent=1 // pred_fallthru
      _
    // Predicated region
    $region22: #{tpu_custom_call.1} parent=1 // pred_check
      _
    $region23: #{tpu_custom_call.1} parent=1 // pred_check_branch
      %26 = sbr.rel (0) target = $region25
    $region24: #{tpu_custom_call.1} parent=1 // pred_region
      _
    $region25: #{tpu_custom_call.1} parent=1 // pred_fallthru
      _
    // Predicated region
    $region26: #{tpu_custom_call.1} parent=1 // pred_check
      _
    $region27: #{tpu_custom_call.1} parent=1 // pred_check_branch
      %28 = sbr.rel (0) target = $region29
    $region28: #{tpu_custom_call.1} parent=1 // pred_region
      _
    $region29: #{tpu_custom_call.1} parent=1 // pred_fallthru
      _
    // Predicated region
    $region30: #{tpu_custom_call.1} parent=1 // pred_check
      _
    $region31: #{tpu_custom_call.1} parent=1 // pred_check_branch
      %30 = sbr.rel (0) target = $region33
    $region32: #{tpu_custom_call.1} parent=1 // pred_region
      _
    $region33: #{tpu_custom_call.1} parent=1 // pred_fallthru
      _
    // Predicated region
    $region34: #{tpu_custom_call.1} parent=1 // pred_check
      _
    $region35: #{tpu_custom_call.1} parent=1 // pred_check_branch
      %32 = sbr.rel (0) target = $region37
    $region36: #{tpu_custom_call.1} parent=1 // pred_region
      _
    $region37: #{tpu_custom_call.1} parent=1 // pred_fallthru
      _
    %v33 = vld [vmem:[%s0] sm:$0xff]
    %v34 = vld [vmem:[%s0 + $0x8] sm:$0xff]
    %v35 = vld [vmem:[%s0 + $0x10] sm:$0xff]
    %v36 = vld [vmem:[%s0 + $0x18] sm:$0xff]
    %v37 = vld [vmem:[%s0 + $0x20] sm:$0xff]
    %v38 = vld [vmem:[%s0 + $0x28] sm:$0xff]
    %v39 = vld [vmem:[%s0 + $0x30] sm:$0xff]
    %v40 = vld [vmem:[%s0 + $0x38] sm:$0xff]
    %v41 = vld [vmem:[%s0 + $0x40] sm:$0xff]
    %v42 = vld [vmem:[%s0 + $0x48] sm:$0xff]
    %v43 = vld [vmem:[%s0 + $0x50] sm:$0xff]
    %v44 = vld [vmem:[%s0 + $0x58] sm:$0xff]
    %v45 = vld [vmem:[%s0 + $0x60] sm:$0xff]
    %v46 = vld [vmem:[%s0 + $0x68] sm:$0xff]
    %v47 = vld [vmem:[%s0 + $0x70] sm:$0xff]
    %v48 = vld [vmem:[%s0 + $0x78] sm:$0xff]
    %v49 = vld [vmem:[%s1] sm:$0xff]
    %v50 = vld [vmem:[%s2] sm:$0xff]
    %v51 = vld [vmem:[%s2 + $0x8] sm:$0xff]
    %v52 = vld [vmem:[%s2 + $0x10] sm:$0xff]
    %v53 = vld [vmem:[%s2 + $0x18] sm:$0xff]
    %v54 = vld [vmem:[%s3] sm:$0x1]
    %v56 = vlaneseq
    %v57 = vshrl.u32 %v56, 7
    %v58 = vsub.s32 0, %v57
    %v59 = vrot.slane %v54, %v58
    %vm61 = vcmask 64512
    %v63 = vsel %vm61, %v33, 0
    %v66 = vsel %vm61, %v34, 0
    %v69 = vsel %vm61, %v35, 0
    %v72 = vsel %vm61, %v36, 0
    %v75 = vsel %vm61, %v37, 0
    %v78 = vsel %vm61, %v38, 0
    %v81 = vsel %vm61, %v39, 0
    %v84 = vsel %vm61, %v40, 0
    %v87 = vsel %vm61, %v41, 0
    %v90 = vsel %vm61, %v42, 0
    %v93 = vsel %vm61, %v43, 0
    %v96 = vsel %vm61, %v44, 0
    %v99 = vsel %vm61, %v45, 0
    %v102 = vsel %vm61, %v46, 0
    %v105 = vsel %vm61, %v47, 0
    %v108 = vsel %vm61, %v48, 0
    %110 = vmatprep.subr.mxu0 0.0
    %111 = vmatpush1.msra.mxu0 %v49
    %112 = vmatprep.subr.mxu0 0.0
    %113 = vmatpush1.msra.mxu0 0.0
    %114 = vmatprep.subr.mxu0 0.0
    %115 = vmatpush1.msra.mxu0 0.0
    %116 = vmatprep.subr.mxu0 0.0
    %117 = vmatpush1.msra.mxu0 0.0
    %118 = vmatprep.subr.mxu0 0.0
    %119 = vmatpush1.msra.mxu0 0.0
    %120 = vmatprep.subr.mxu0 0.0
    %121 = vmatpush1.msra.mxu0 0.0
    %122 = vmatprep.subr.mxu0 0.0
    %123 = vmatpush1.msra.mxu0 0.0
    %124 = vmatprep.subr.mxu0 0.0
    %125 = vmatpush1.msra.mxu0 0.0
    %126 = vmatprep.subr.mxu0 0.0
    %127 = vmatpush1.msra.mxu0 0.0
    %128 = vmatprep.subr.mxu0 0.0
    %129 = vmatpush1.msra.mxu0 0.0
    %130 = vmatprep.subr.mxu0 0.0
    %131 = vmatpush1.msra.mxu0 0.0
    %132 = vmatprep.subr.mxu0 0.0
    %133 = vmatpush1.msra.mxu0 0.0
    %134 = vmatprep.subr.mxu0 0.0
    %135 = vmatpush1.msra.mxu0 0.0
    %136 = vmatprep.subr.mxu0 0.0
    %137 = vmatpush1.msra.mxu0 0.0
    %138 = vmatprep.subr.mxu0 0.0
    %139 = vmatpush1.msra.mxu0 0.0
    %140 = vmatprep.subr.mxu0 0.0
    %141 = vmatpush1.msra.mxu0 0.0
    %142 = vmatprep.subr.mxu0 0.0
    %143 = vmatpush1.msra.mxu0 0.0
    %144 = vmatprep.subr.mxu0 0.0
    %145 = vmatpush1.msra.mxu0 0.0
    %146 = vmatprep.subr.mxu0 0.0
    %147 = vmatpush1.msra.mxu0 0.0
    %148 = vmatprep.subr.mxu0 0.0
    %149 = vmatpush1.msra.mxu0 0.0
    %150 = vmatprep.subr.mxu0 0.0
    %151 = vmatpush1.msra.mxu0 0.0
    %152 = vmatprep.subr.mxu0 0.0
    %153 = vmatpush1.msra.mxu0 0.0
    %154 = vmatprep.subr.mxu0 0.0
    %155 = vmatpush1.msra.mxu0 0.0
    %156 = vmatprep.subr.mxu0 0.0
    %157 = vmatpush1.msra.mxu0 0.0
    %158 = vmatprep.subr.mxu0 0.0
    %159 = vmatpush1.msra.mxu0 0.0
    %160 = vmatprep.subr.mxu0 0.0
    %161 = vmatpush1.msra.mxu0 0.0
    %162 = vmatprep.subr.mxu0 0.0
    %163 = vmatpush1.msra.mxu0 0.0
    %164 = vmatprep.subr.mxu0 0.0
    %165 = vmatpush1.msra.mxu0 0.0
    %166 = vmatprep.subr.mxu0 0.0
    %167 = vmatpush1.msra.mxu0 0.0
    %168 = vmatprep.subr.mxu0 0.0
    %169 = vmatpush1.msra.mxu0 0.0
    %170 = vmatprep.subr.mxu0 0.0
    %171 = vmatpush1.msra.mxu0 0.0
    %172 = vmatprep.subr.mxu0 0.0
    %173 = vmatpush1.msra.mxu0 0.0
    %174 = vmatprep.mubr.f32.mxu0 0.0
    %175 = vmatmul.mubr.f32.gmra.mrb[0].mxu0 %v63
    %v176 = vpop.f32.mrb[0].mxu0
    %v177 = vadd.f32 %v59, %v176
    %v178 = vpop.f32.mrb[0].mxu0
    %179 = vmatprep.mubr.f32.mxu0 0.0
    %180 = vmatmul.mubr.f32.gmra.mrb[0].mxu0 %v66
    %v181 = vpop.f32.mrb[0].mxu0
    %v182 = vadd.f32 %v59, %v181
    %v183 = vpop.f32.mrb[0].mxu0
    %184 = vmatprep.mubr.f32.mxu0 0.0
    %185 = vmatmul.mubr.f32.gmra.mrb[0].mxu0 %v69
    %v186 = vpop.f32.mrb[0].mxu0
    %v187 = vadd.f32 %v59, %v186
    %v188 = vpop.f32.mrb[0].mxu0
    %189 = vmatprep.mubr.f32.mxu0 0.0
    %190 = vmatmul.mubr.f32.gmra.mrb[0].mxu0 %v72
    %v191 = vpop.f32.mrb[0].mxu0
    %v192 = vadd.f32 %v59, %v191
    %v193 = vpop.f32.mrb[0].mxu0
    %194 = vmatprep.mubr.f32.mxu0 0.0
    %195 = vmatmul.mubr.f32.gmra.mrb[0].mxu0 %v75
    %v196 = vpop.f32.mrb[0].mxu0
    %v197 = vadd.f32 %v59, %v196
    %v198 = vpop.f32.mrb[0].mxu0
    %199 = vmatprep.mubr.f32.mxu0 0.0
    %200 = vmatmul.mubr.f32.gmra.mrb[0].mxu0 %v78
    %v201 = vpop.f32.mrb[0].mxu0
    %v202 = vadd.f32 %v59, %v201
    %v203 = vpop.f32.mrb[0].mxu0
    %204 = vmatprep.mubr.f32.mxu0 0.0
    %205 = vmatmul.mubr.f32.gmra.mrb[0].mxu0 %v81
    %v206 = vpop.f32.mrb[0].mxu0
    %v207 = vadd.f32 %v59, %v206
    %v208 = vpop.f32.mrb[0].mxu0
    %209 = vmatprep.mubr.f32.mxu0 0.0
    %210 = vmatmul.mubr.f32.gmra.mrb[0].mxu0 %v84
    %v211 = vpop.f32.mrb[0].mxu0
    %v212 = vadd.f32 %v59, %v211
    %v213 = vpop.f32.mrb[0].mxu0
    %214 = vmatprep.mubr.f32.mxu0 0.0
    %215 = vmatmul.mubr.f32.gmra.mrb[0].mxu0 %v87
    %v216 = vpop.f32.mrb[0].mxu0
    %v217 = vadd.f32 %v59, %v216
    %v218 = vpop.f32.mrb[0].mxu0
    %219 = vmatprep.mubr.f32.mxu0 0.0
    %220 = vmatmul.mubr.f32.gmra.mrb[0].mxu0 %v90
    %v221 = vpop.f32.mrb[0].mxu0
    %v222 = vadd.f32 %v59, %v221
    %v223 = vpop.f32.mrb[0].mxu0
    %224 = vmatprep.mubr.f32.mxu0 0.0
    %225 = vmatmul.mubr.f32.gmra.mrb[0].mxu0 %v93
    %v226 = vpop.f32.mrb[0].mxu0
    %v227 = vadd.f32 %v59, %v226
    %v228 = vpop.f32.mrb[0].mxu0
    %229 = vmatprep.mubr.f32.mxu0 0.0
    %230 = vmatmul.mubr.f32.gmra.mrb[0].mxu0 %v96
    %v231 = vpop.f32.mrb[0].mxu0
    %v232 = vadd.f32 %v59, %v231
    %v233 = vpop.f32.mrb[0].mxu0
    %234 = vmatprep.mubr.f32.mxu0 0.0
    %235 = vmatmul.mubr.f32.gmra.mrb[0].mxu0 %v99
    %v236 = vpop.f32.mrb[0].mxu0
    %v237 = vadd.f32 %v59, %v236
    %v238 = vpop.f32.mrb[0].mxu0
    %239 = vmatprep.mubr.f32.mxu0 0.0
    %240 = vmatmul.mubr.f32.gmra.mrb[0].mxu0 %v102
    %v241 = vpop.f32.mrb[0].mxu0
    %v242 = vadd.f32 %v59, %v241
    %v243 = vpop.f32.mrb[0].mxu0
    %244 = vmatprep.mubr.f32.mxu0 0.0
    %245 = vmatmul.mubr.f32.gmra.mrb[0].mxu0 %v105
    %v246 = vpop.f32.mrb[0].mxu0
    %v247 = vadd.f32 %v59, %v246
    %v248 = vpop.f32.mrb[0].mxu0
    %249 = vmatprep.mubr.f32.mxu0 0.0
    %250 = vmatmul.mubr.f32.gmra.mrb[0].mxu0 %v108
    %v251 = vpop.f32.mrb[0].mxu0
    %v252 = vadd.f32 %v59, %v251
    %v253 = vpop.f32.mrb[0].mxu0
    %254 = vdwg.mxu0
    %vm255 = vcmask 261120
    %v257 = vsel %vm255, 0.0, 0
    %259 = vmatprep.subr.mxu0 0.0
    %260 = vmatpush1.msra.mxu0 %v50
    %261 = vmatprep.subr.mxu0 0.0
    %262 = vmatpush1.msra.mxu0 %v51
    %263 = vmatprep.subr.mxu0 0.0
    %264 = vmatpush1.msra.mxu0 %v52
    %265 = vmatprep.subr.mxu0 0.0
    %266 = vmatpush1.msra.mxu0 %v53
    %267 = vmatprep.subr.mxu0 0.0
    %268 = vmatpush1.msra.mxu0 0.0
    %269 = vmatprep.subr.mxu0 0.0
    %270 = vmatpush1.msra.mxu0 0.0
    %271 = vmatprep.subr.mxu0 0.0
    %272 = vmatpush1.msra.mxu0 0.0
    %273 = vmatprep.subr.mxu0 0.0
    %274 = vmatpush1.msra.mxu0 0.0
    %275 = vmatprep.subr.mxu0 0.0
    %276 = vmatpush1.msra.mxu0 0.0
    %277 = vmatprep.subr.mxu0 0.0
    %278 = vmatpush1.msra.mxu0 0.0
    %279 = vmatprep.subr.mxu0 0.0
    %280 = vmatpush1.msra.mxu0 0.0
    %281 = vmatprep.subr.mxu0 0.0
    %282 = vmatpush1.msra.mxu0 0.0
    %283 = vmatprep.subr.mxu0 0.0
    %284 = vmatpush1.msra.mxu0 0.0
    %285 = vmatprep.subr.mxu0 0.0
    %286 = vmatpush1.msra.mxu0 0.0
    %287 = vmatprep.subr.mxu0 0.0
    %288 = vmatpush1.msra.mxu0 0.0
    %289 = vmatprep.subr.mxu0 0.0
    %290 = vmatpush1.msra.mxu0 0.0
    %291 = vmatprep.subr.mxu0 0.0
    %292 = vmatpush1.msra.mxu0 0.0
    %293 = vmatprep.subr.mxu0 0.0
    %294 = vmatpush1.msra.mxu0 0.0
    %295 = vmatprep.subr.mxu0 0.0
    %296 = vmatpush1.msra.mxu0 0.0
    %297 = vmatprep.subr.mxu0 0.0
    %298 = vmatpush1.msra.mxu0 0.0
    %299 = vmatprep.subr.mxu0 0.0
    %300 = vmatpush1.msra.mxu0 0.0
    %301 = vmatprep.subr.mxu0 0.0
    %302 = vmatpush1.msra.mxu0 0.0
    %303 = vmatprep.subr.mxu0 0.0
    %304 = vmatpush1.msra.mxu0 0.0
    %305 = vmatprep.subr.mxu0 0.0
    %306 = vmatpush1.msra.mxu0 0.0
    %307 = vmatprep.subr.mxu0 0.0
    %308 = vmatpush1.msra.mxu0 0.0
    %309 = vmatprep.subr.mxu0 0.0
    %310 = vmatpush1.msra.mxu0 0.0
    %311 = vmatprep.subr.mxu0 0.0
    %312 = vmatpush1.msra.mxu0 0.0
    %313 = vmatprep.subr.mxu0 0.0
    %314 = vmatpush1.msra.mxu0 0.0
    %315 = vmatprep.subr.mxu0 0.0
    %316 = vmatpush1.msra.mxu0 0.0
    %317 = vmatprep.subr.mxu0 0.0
    %318 = vmatpush1.msra.mxu0 0.0
    %319 = vmatprep.subr.mxu0 0.0
    %320 = vmatpush1.msra.mxu0 0.0
    %321 = vmatprep.subr.mxu0 0.0
    %322 = vmatpush1.msra.mxu0 0.0
    %323 = vmatprep.mubr.f32.mxu0 0.0
    %324 = vmatmul.mubr.f32.gmra.mrb[0].mxu0 %v257
    %v325 = vpop.f32.mrb[0].mxu0
    %v326 = vadd.f32 0.0, %v325
    %v327 = vpop.f32.mrb[0].mxu0
    %328 = vdwg.mxu0
    %v330 = vrot.slane %v326, 1
    %v331 = vrot.slane %v326, 2
    %v332 = vrot.slane %v326, 3
    %v333 = vrot.slane %v326, 4
    %v334 = vrot.slane %v326, 5
    %v335 = vrot.slane %v326, 6
    %v336 = vrot.slane %v326, 7
    %v345 = vadd.f32 %v177, %v326
    %v346 = vadd.f32 %v187, %v330
    %v347 = vadd.f32 %v197, %v331
    %v348 = vadd.f32 %v207, %v332
    %v349 = vadd.f32 %v217, %v333
    %v350 = vadd.f32 %v227, %v334
    %v351 = vadd.f32 %v237, %v335
    %v352 = vadd.f32 %v247, %v336
    %v353 = vmul.f32 %v345, 0.5
    %v354 = vmul.f32 %v346, 0.5
    %v355 = vmul.f32 %v347, 0.5
    %v356 = vmul.f32 %v348, 0.5
    %v357 = vmul.f32 %v349, 0.5
    %v358 = vmul.f32 %v350, 0.5
    %v359 = vmul.f32 %v351, 0.5
    %v360 = vmul.f32 %v352, 0.5
    %v361 = vtanh.pop %v353
    %v362 = vtanh.pop %v354
    %v363 = vtanh.pop %v355
    %v364 = vtanh.pop %v356
    %v365 = vtanh.pop %v357
    %v366 = vtanh.pop %v358
    %v367 = vtanh.pop %v359
    %v368 = vtanh.pop %v360
    %v369 = vadd.f32 %v361, 1.0
    %v370 = vadd.f32 %v362, 1.0
    %v371 = vadd.f32 %v363, 1.0
    %v372 = vadd.f32 %v364, 1.0
    %v373 = vadd.f32 %v365, 1.0
    %v374 = vadd.f32 %v366, 1.0
    %v375 = vadd.f32 %v367, 1.0
    %v376 = vadd.f32 %v368, 1.0
    %v377 = vmul.f32 %v369, 0.5
    %v378 = vmul.f32 %v370, 0.5
    %v379 = vmul.f32 %v371, 0.5
    %v380 = vmul.f32 %v372, 0.5
    %v381 = vmul.f32 %v373, 0.5
    %v382 = vmul.f32 %v374, 0.5
    %v383 = vmul.f32 %v375, 0.5
    %v384 = vmul.f32 %v376, 0.5
    %v385 = vmul.f32 %v377, 0.0
    %v386 = vmul.f32 %v378, 0.0
    %v387 = vmul.f32 %v379, 0.0
    %v388 = vmul.f32 %v380, 0.0
    %v389 = vmul.f32 %v381, 0.0
    %v390 = vmul.f32 %v382, 0.0
    %v391 = vmul.f32 %v383, 0.0
    %v392 = vmul.f32 %v384, 0.0
    %401 = vrot.lane.b32.xlu0 %v361, 64
    %v402 = vpop.permute.xlu0 %401
    %403 = vrot.lane.b32.xlu0 %v362, 64
    %v404 = vpop.permute.xlu0 %403
    %405 = vrot.lane.b32.xlu0 %v363, 64
    %v406 = vpop.permute.xlu0 %405
    %407 = vrot.lane.b32.xlu0 %v364, 64
    %v408 = vpop.permute.xlu0 %407
    %409 = vrot.lane.b32.xlu0 %v365, 64
    %v410 = vpop.permute.xlu0 %409
    %411 = vrot.lane.b32.xlu0 %v366, 64
    %v412 = vpop.permute.xlu0 %411
    %413 = vrot.lane.b32.xlu0 %v367, 64
    %v414 = vpop.permute.xlu0 %413
    %415 = vrot.lane.b32.xlu0 %v368, 64
    %v416 = vpop.permute.xlu0 %415
    %v425 = vmul.f32 %v377, %v402
    %v426 = vmul.f32 %v378, %v404
    %v427 = vmul.f32 %v379, %v406
    %v428 = vmul.f32 %v380, %v408
    %v429 = vmul.f32 %v381, %v410
    %v430 = vmul.f32 %v382, %v412
    %v431 = vmul.f32 %v383, %v414
    %v432 = vmul.f32 %v384, %v416
    %441 = vrot.lane.b32.xlu0 %v425, 32
    %v442 = vpop.permute.xlu0 %441
    %443 = vrot.lane.b32.xlu0 %v426, 32
    %v444 = vpop.permute.xlu0 %443
    %445 = vrot.lane.b32.xlu0 %v427, 32
    %v446 = vpop.permute.xlu0 %445
    %447 = vrot.lane.b32.xlu0 %v428, 32
    %v448 = vpop.permute.xlu0 %447
    %449 = vrot.lane.b32.xlu0 %v429, 32
    %v450 = vpop.permute.xlu0 %449
    %451 = vrot.lane.b32.xlu0 %v430, 32
    %v452 = vpop.permute.xlu0 %451
    %453 = vrot.lane.b32.xlu0 %v431, 32
    %v454 = vpop.permute.xlu0 %453
    %455 = vrot.lane.b32.xlu0 %v432, 32
    %v456 = vpop.permute.xlu0 %455
    %v465 = vadd.f32 %v385, %v442
    %v466 = vadd.f32 %v386, %v444
    %v467 = vadd.f32 %v387, %v446
    %v468 = vadd.f32 %v388, %v448
    %v469 = vadd.f32 %v389, %v450
    %v470 = vadd.f32 %v390, %v452
    %v471 = vadd.f32 %v391, %v454
    %v472 = vadd.f32 %v392, %v456
    %v473 = vtanh.pop %v465
    %v474 = vtanh.pop %v466
    %v475 = vtanh.pop %v467
    %v476 = vtanh.pop %v468
    %v477 = vtanh.pop %v469
    %v478 = vtanh.pop %v470
    %v479 = vtanh.pop %v471
    %v480 = vtanh.pop %v472
    %489 = vrot.lane.b32.xlu0 %v473, 64
    %v490 = vpop.permute.xlu0 %489
    %491 = vrot.lane.b32.xlu0 %v474, 64
    %v492 = vpop.permute.xlu0 %491
    %493 = vrot.lane.b32.xlu0 %v475, 64
    %v494 = vpop.permute.xlu0 %493
    %495 = vrot.lane.b32.xlu0 %v476, 64
    %v496 = vpop.permute.xlu0 %495
    %497 = vrot.lane.b32.xlu0 %v477, 64
    %v498 = vpop.permute.xlu0 %497
    %499 = vrot.lane.b32.xlu0 %v478, 64
    %v500 = vpop.permute.xlu0 %499
    %501 = vrot.lane.b32.xlu0 %v479, 64
    %v502 = vpop.permute.xlu0 %501
    %503 = vrot.lane.b32.xlu0 %v480, 64
    %v504 = vpop.permute.xlu0 %503
    %v513 = vmul.f32 %v377, %v490
    %v514 = vmul.f32 %v378, %v492
    %v515 = vmul.f32 %v379, %v494
    %v516 = vmul.f32 %v380, %v496
    %v517 = vmul.f32 %v381, %v498
    %v518 = vmul.f32 %v382, %v500
    %v519 = vmul.f32 %v383, %v502
    %v520 = vmul.f32 %v384, %v504
    %v529 = vrot.slane %v514, 7
    %vm530 = vcmask 1041409
    %v531 = vsel %vm530, %v529, %v513
    %v532 = vrot.slane %v515, 6
    %vm533 = vcmask 1042434
    %v534 = vsel %vm533, %v532, %v531
    %v535 = vrot.slane %v516, 5
    %vm536 = vcmask 1043459
    %v537 = vsel %vm536, %v535, %v534
    %v538 = vrot.slane %v517, 4
    %vm539 = vcmask 1044484
    %v540 = vsel %vm539, %v538, %v537
    %v541 = vrot.slane %v518, 3
    %vm542 = vcmask 1045509
    %v543 = vsel %vm542, %v541, %v540
    %v544 = vrot.slane %v519, 2
    %vm545 = vcmask 1046534
    %v546 = vsel %vm545, %v544, %v543
    %v547 = vrot.slane %v520, 1
    %vm548 = vcmask 1047559
    %v549 = vsel %vm548, %v547, %v546
    %550 = vrot.lane.b32.xlu0 %v549, 32
    %v551 = vpop.permute.xlu0 %550
    %v552 = vsel %vm255, %v551, 0
    %554 = vmatprep.subr.mxu0 0.0
    %555 = vmatpush1.msra.mxu0 %v50
    %556 = vmatprep.subr.mxu0 0.0
    %557 = vmatpush1.msra.mxu0 %v51
    %558 = vmatprep.subr.mxu0 0.0
    %559 = vmatpush1.msra.mxu0 %v52
    %560 = vmatprep.subr.mxu0 0.0
    %561 = vmatpush1.msra.mxu0 %v53
    %562 = vmatprep.subr.mxu0 0.0
    %563 = vmatpush1.msra.mxu0 0.0
    %564 = vmatprep.subr.mxu0 0.0
    %565 = vmatpush1.msra.mxu0 0.0
    %566 = vmatprep.subr.mxu0 0.0
    %567 = vmatpush1.msra.mxu0 0.0
    %568 = vmatprep.subr.mxu0 0.0
    %569 = vmatpush1.msra.mxu0 0.0
    %570 = vmatprep.subr.mxu0 0.0
    %571 = vmatpush1.msra.mxu0 0.0
    %572 = vmatprep.subr.mxu0 0.0
    %573 = vmatpush1.msra.mxu0 0.0
    %574 = vmatprep.subr.mxu0 0.0
    %575 = vmatpush1.msra.mxu0 0.0
    %576 = vmatprep.subr.mxu0 0.0
    %577 = vmatpush1.msra.mxu0 0.0
    %578 = vmatprep.subr.mxu0 0.0
    %579 = vmatpush1.msra.mxu0 0.0
    %580 = vmatprep.subr.mxu0 0.0
    %581 = vmatpush1.msra.mxu0 0.0
    %582 = vmatprep.subr.mxu0 0.0
    %583 = vmatpush1.msra.mxu0 0.0
    %584 = vmatprep.subr.mxu0 0.0
    %585 = vmatpush1.msra.mxu0 0.0
    %586 = vmatprep.subr.mxu0 0.0
    %587 = vmatpush1.msra.mxu0 0.0
    %588 = vmatprep.subr.mxu0 0.0
    %589 = vmatpush1.msra.mxu0 0.0
    %590 = vmatprep.subr.mxu0 0.0
    %591 = vmatpush1.msra.mxu0 0.0
    %592 = vmatprep.subr.mxu0 0.0
    %593 = vmatpush1.msra.mxu0 0.0
    %594 = vmatprep.subr.mxu0 0.0
    %595 = vmatpush1.msra.mxu0 0.0
    %596 = vmatprep.subr.mxu0 0.0
    %597 = vmatpush1.msra.mxu0 0.0
    %598 = vmatprep.subr.mxu0 0.0
    %599 = vmatpush1.msra.mxu0 0.0
    %600 = vmatprep.subr.mxu0 0.0
    %601 = vmatpush1.msra.mxu0 0.0
    %602 = vmatprep.subr.mxu0 0.0
    %603 = vmatpush1.msra.mxu0 0.0
    %604 = vmatprep.subr.mxu0 0.0
    %605 = vmatpush1.msra.mxu0 0.0
    %606 = vmatprep.subr.mxu0 0.0
    %607 = vmatpush1.msra.mxu0 0.0
    %608 = vmatprep.subr.mxu0 0.0
    %609 = vmatpush1.msra.mxu0 0.0
    %610 = vmatprep.subr.mxu0 0.0
    %611 = vmatpush1.msra.mxu0 0.0
    %612 = vmatprep.subr.mxu0 0.0
    %613 = vmatpush1.msra.mxu0 0.0
    %614 = vmatprep.subr.mxu0 0.0
    %615 = vmatpush1.msra.mxu0 0.0
    %616 = vmatprep.subr.mxu0 0.0
    %617 = vmatpush1.msra.mxu0 0.0
    %618 = vmatprep.mubr.f32.mxu0 0.0
    %619 = vmatmul.mubr.f32.gmra.mrb[0].mxu0 %v552
    %v620 = vpop.f32.mrb[0].mxu0
    %v621 = vadd.f32 0.0, %v620
    %v622 = vpop.f32.mrb[0].mxu0
    %623 = vdwg.mxu0
    %v625 = vrot.slane %v621, 7
    %v626 = vrot.slane %v621, 1
    %v627 = vrot.slane %v621, 2
    %v628 = vrot.slane %v621, 3
    %v629 = vrot.slane %v621, 4
    %v630 = vrot.slane %v621, 5
    %v631 = vrot.slane %v621, 6
    %v640 = vadd.f32 %v177, %v625
    %v641 = vadd.f32 %v187, %v621
    %v642 = vadd.f32 %v197, %v626
    %v643 = vadd.f32 %v207, %v627
    %v644 = vadd.f32 %v217, %v628
    %v645 = vadd.f32 %v227, %v629
    %v646 = vadd.f32 %v237, %v630
    %v647 = vadd.f32 %v247, %v631
    %v648 = vmul.f32 %v640, 0.5
    %v649 = vmul.f32 %v641, 0.5
    %v650 = vmul.f32 %v642, 0.5
    %v651 = vmul.f32 %v643, 0.5
    %v652 = vmul.f32 %v644, 0.5
    %v653 = vmul.f32 %v645, 0.5
    %v654 = vmul.f32 %v646, 0.5
    %v655 = vmul.f32 %v647, 0.5
    %v656 = vtanh.pop %v648
    %v657 = vtanh.pop %v649
    %v658 = vtanh.pop %v650
    %v659 = vtanh.pop %v651
    %v660 = vtanh.pop %v652
    %v661 = vtanh.pop %v653
    %v662 = vtanh.pop %v654
    %v663 = vtanh.pop %v655
    %v664 = vadd.f32 %v656, 1.0
    %v665 = vadd.f32 %v657, 1.0
    %v666 = vadd.f32 %v658, 1.0
    %v667 = vadd.f32 %v659, 1.0
    %v668 = vadd.f32 %v660, 1.0
    %v669 = vadd.f32 %v661, 1.0
    %v670 = vadd.f32 %v662, 1.0
    %v671 = vadd.f32 %v663, 1.0
    %v672 = vmul.f32 %v664, 0.5
    %v673 = vmul.f32 %v665, 0.5
    %v674 = vmul.f32 %v666, 0.5
    %v675 = vmul.f32 %v667, 0.5
    %v676 = vmul.f32 %v668, 0.5
    %v677 = vmul.f32 %v669, 0.5
    %v678 = vmul.f32 %v670, 0.5
    %v679 = vmul.f32 %v671, 0.5
    %v688 = vrot.slane %v465, 7
    %v689 = vrot.slane %v466, 7
    %v690 = vrot.slane %v467, 7
    %v691 = vrot.slane %v468, 7
    %v692 = vrot.slane %v469, 7
    %v693 = vrot.slane %v470, 7
    %v694 = vrot.slane %v471, 7
    %v695 = vrot.slane %v472, 7
    %v704 = vmul.f32 %v672, %v688
    %v705 = vmul.f32 %v673, %v689
    %v706 = vmul.f32 %v674, %v690
    %v707 = vmul.f32 %v675, %v691
    %v708 = vmul.f32 %v676, %v692
    %v709 = vmul.f32 %v677, %v693
    %v710 = vmul.f32 %v678, %v694
    %v711 = vmul.f32 %v679, %v695
    %720 = vrot.lane.b32.xlu0 %v656, 64
    %v721 = vpop.permute.xlu0 %720
    %722 = vrot.lane.b32.xlu0 %v657, 64
    %v723 = vpop.permute.xlu0 %722
    %724 = vrot.lane.b32.xlu0 %v658, 64
    %v725 = vpop.permute.xlu0 %724
    %726 = vrot.lane.b32.xlu0 %v659, 64
    %v727 = vpop.permute.xlu0 %726
    %728 = vrot.lane.b32.xlu0 %v660, 64
    %v729 = vpop.permute.xlu0 %728
    %730 = vrot.lane.b32.xlu0 %v661, 64
    %v731 = vpop.permute.xlu0 %730
    %732 = vrot.lane.b32.xlu0 %v662, 64
    %v733 = vpop.permute.xlu0 %732
    %734 = vrot.lane.b32.xlu0 %v663, 64
    %v735 = vpop.permute.xlu0 %734
    %v744 = vmul.f32 %v672, %v721
    %v745 = vmul.f32 %v673, %v723
    %v746 = vmul.f32 %v674, %v725
    %v747 = vmul.f32 %v675, %v727
    %v748 = vmul.f32 %v676, %v729
    %v749 = vmul.f32 %v677, %v731
    %v750 = vmul.f32 %v678, %v733
    %v751 = vmul.f32 %v679, %v735
    %760 = vrot.lane.b32.xlu0 %v744, 32
    %v761 = vpop.permute.xlu0 %760
    %762 = vrot.lane.b32.xlu0 %v745, 32
    %v763 = vpop.permute.xlu0 %762
    %764 = vrot.lane.b32.xlu0 %v746, 32
    %v765 = vpop.permute.xlu0 %764
    %766 = vrot.lane.b32.xlu0 %v747, 32
    %v767 = vpop.permute.xlu0 %766
    %768 = vrot.lane.b32.xlu0 %v748, 32
    %v769 = vpop.permute.xlu0 %768
    %770 = vrot.lane.b32.xlu0 %v749, 32
    %v771 = vpop.permute.xlu0 %770
    %772 = vrot.lane.b32.xlu0 %v750, 32
    %v773 = vpop.permute.xlu0 %772
    %774 = vrot.lane.b32.xlu0 %v751, 32
    %v775 = vpop.permute.xlu0 %774
    %v784 = vadd.f32 %v704, %v761
    %v785 = vadd.f32 %v705, %v763
    %v786 = vadd.f32 %v706, %v765
    %v787 = vadd.f32 %v707, %v767
    %v788 = vadd.f32 %v708, %v769
    %v789 = vadd.f32 %v709, %v771
    %v790 = vadd.f32 %v710, %v773
    %v791 = vadd.f32 %v711, %v775
    %v792 = vtanh.pop %v784
    %v793 = vtanh.pop %v785
    %v794 = vtanh.pop %v786
    %v795 = vtanh.pop %v787
    %v796 = vtanh.pop %v788
    %v797 = vtanh.pop %v789
    %v798 = vtanh.pop %v790
    %v799 = vtanh.pop %v791
    %808 = vrot.lane.b32.xlu0 %v792, 64
    %v809 = vpop.permute.xlu0 %808
    %810 = vrot.lane.b32.xlu0 %v793, 64
    %v811 = vpop.permute.xlu0 %810
    %812 = vrot.lane.b32.xlu0 %v794, 64
    %v813 = vpop.permute.xlu0 %812
    %814 = vrot.lane.b32.xlu0 %v795, 64
    %v815 = vpop.permute.xlu0 %814
    %816 = vrot.lane.b32.xlu0 %v796, 64
    %v817 = vpop.permute.xlu0 %816
    %818 = vrot.lane.b32.xlu0 %v797, 64
    %v819 = vpop.permute.xlu0 %818
    %820 = vrot.lane.b32.xlu0 %v798, 64
    %v821 = vpop.permute.xlu0 %820
    %822 = vrot.lane.b32.xlu0 %v799, 64
    %v823 = vpop.permute.xlu0 %822
    %v832 = vmul.f32 %v672, %v809
    %v833 = vmul.f32 %v673, %v811
    %v834 = vmul.f32 %v674, %v813
    %v835 = vmul.f32 %v675, %v815
    %v836 = vmul.f32 %v676, %v817
    %v837 = vmul.f32 %v677, %v819
    %v838 = vmul.f32 %v678, %v821
    %v839 = vmul.f32 %v679, %v823
    %v848 = vrot.slane %v832, 1
    %v849 = vsel %vm530, %v833, %v848
    %v850 = vrot.slane %v834, 7
    %v851 = vsel %vm533, %v850, %v849
    %v852 = vrot.slane %v835, 6
    %v853 = vsel %vm536, %v852, %v851
    %v854 = vrot.slane %v836, 5
    %v855 = vsel %vm539, %v854, %v853
    %v856 = vrot.slane %v837, 4
    %v857 = vsel %vm542, %v856, %v855
    %v858 = vrot.slane %v838, 3
    %v859 = vsel %vm545, %v858, %v857
    %v860 = vrot.slane %v839, 2
    %v861 = vsel %vm548, %v860, %v859
    %862 = vrot.lane.b32.xlu0 %v861, 32
    %v863 = vpop.permute.xlu0 %862
    %v864 = vsel %vm255, %v863, 0
    %866 = vmatprep.subr.mxu0 0.0
    %867 = vmatpush1.msra.mxu0 %v50
    %868 = vmatprep.subr.mxu0 0.0
    %869 = vmatpush1.msra.mxu0 %v51
    %870 = vmatprep.subr.mxu0 0.0
    %871 = vmatpush1.msra.mxu0 %v52
    %872 = vmatprep.subr.mxu0 0.0
    %873 = vmatpush1.msra.mxu0 %v53
    %874 = vmatprep.subr.mxu0 0.0
    %875 = vmatpush1.msra.mxu0 0.0
    %876 = vmatprep.subr.mxu0 0.0
    %877 = vmatpush1.msra.mxu0 0.0
    %878 = vmatprep.subr.mxu0 0.0
    %879 = vmatpush1.msra.mxu0 0.0
    %880 = vmatprep.subr.mxu0 0.0
    %881 = vmatpush1.msra.mxu0 0.0
    %882 = vmatprep.subr.mxu0 0.0
    %883 = vmatpush1.msra.mxu0 0.0
    %884 = vmatprep.subr.mxu0 0.0
    %885 = vmatpush1.msra.mxu0 0.0
    %886 = vmatprep.subr.mxu0 0.0
    %887 = vmatpush1.msra.mxu0 0.0
    %888 = vmatprep.subr.mxu0 0.0
    %889 = vmatpush1.msra.mxu0 0.0
    %890 = vmatprep.subr.mxu0 0.0
    %891 = vmatpush1.msra.mxu0 0.0
    %892 = vmatprep.subr.mxu0 0.0
    %893 = vmatpush1.msra.mxu0 0.0
    %894 = vmatprep.subr.mxu0 0.0
    %895 = vmatpush1.msra.mxu0 0.0
    %896 = vmatprep.subr.mxu0 0.0
    %897 = vmatpush1.msra.mxu0 0.0
    %898 = vmatprep.subr.mxu0 0.0
    %899 = vmatpush1.msra.mxu0 0.0
    %900 = vmatprep.subr.mxu0 0.0
    %901 = vmatpush1.msra.mxu0 0.0
    %902 = vmatprep.subr.mxu0 0.0
    %903 = vmatpush1.msra.mxu0 0.0
    %904 = vmatprep.subr.mxu0 0.0
    %905 = vmatpush1.msra.mxu0 0.0
    %906 = vmatprep.subr.mxu0 0.0
    %907 = vmatpush1.msra.mxu0 0.0
    %908 = vmatprep.subr.mxu0 0.0
    %909 = vmatpush1.msra.mxu0 0.0
    %910 = vmatprep.subr.mxu0 0.0
    %911 = vmatpush1.msra.mxu0 0.0
    %912 = vmatprep.subr.mxu0 0.0
    %913 = vmatpush1.msra.mxu0 0.0
    %914 = vmatprep.subr.mxu0 0.0
    %915 = vmatpush1.msra.mxu0 0.0
    %916 = vmatprep.subr.mxu0 0.0
    %917 = vmatpush1.msra.mxu0 0.0
    %918 = vmatprep.subr.mxu0 0.0
    %919 = vmatpush1.msra.mxu0 0.0
    %920 = vmatprep.subr.mxu0 0.0
    %921 = vmatpush1.msra.mxu0 0.0
    %922 = vmatprep.subr.mxu0 0.0
    %923 = vmatpush1.msra.mxu0 0.0
    %924 = vmatprep.subr.mxu0 0.0
    %925 = vmatpush1.msra.mxu0 0.0
    %926 = vmatprep.subr.mxu0 0.0
    %927 = vmatpush1.msra.mxu0 0.0
    %928 = vmatprep.subr.mxu0 0.0
    %929 = vmatpush1.msra.mxu0 0.0
    %930 = vmatprep.mubr.f32.mxu0 0.0
    %931 = vmatmul.mubr.f32.gmra.mrb[0].mxu0 %v864
    %v932 = vpop.f32.mrb[0].mxu0
    %v933 = vadd.f32 0.0, %v932
    %v934 = vpop.f32.mrb[0].mxu0
    %935 = vdwg.mxu0
    %v937 = vrot.slane %v933, 6
    %v938 = vrot.slane %v933, 7
    %v939 = vrot.slane %v933, 1
    %v940 = vrot.slane %v933, 2
    %v941 = vrot.slane %v933, 3
    %v942 = vrot.slane %v933, 4
    %v943 = vrot.slane %v933, 5
    %v952 = vadd.f32 %v177, %v937
    %v953 = vadd.f32 %v187, %v938
    %v954 = vadd.f32 %v197, %v933
    %v955 = vadd.f32 %v207, %v939
    %v956 = vadd.f32 %v217, %v940
    %v957 = vadd.f32 %v227, %v941
    %v958 = vadd.f32 %v237, %v942
    %v959 = vadd.f32 %v247, %v943
    %v960 = vmul.f32 %v952, 0.5
    %v961 = vmul.f32 %v953, 0.5
    %v962 = vmul.f32 %v954, 0.5
    %v963 = vmul.f32 %v955, 0.5
    %v964 = vmul.f32 %v956, 0.5
    %v965 = vmul.f32 %v957, 0.5
    %v966 = vmul.f32 %v958, 0.5
    %v967 = vmul.f32 %v959, 0.5
    %v968 = vtanh.pop %v960
    %v969 = vtanh.pop %v961
    %v970 = vtanh.pop %v962
    %v971 = vtanh.pop %v963
    %v972 = vtanh.pop %v964
    %v973 = vtanh.pop %v965
    %v974 = vtanh.pop %v966
    %v975 = vtanh.pop %v967
    %v976 = vadd.f32 %v968, 1.0
    %v977 = vadd.f32 %v969, 1.0
    %v978 = vadd.f32 %v970, 1.0
    %v979 = vadd.f32 %v971, 1.0
    %v980 = vadd.f32 %v972, 1.0
    %v981 = vadd.f32 %v973, 1.0
    %v982 = vadd.f32 %v974, 1.0
    %v983 = vadd.f32 %v975, 1.0
    %v984 = vmul.f32 %v976, 0.5
    %v985 = vmul.f32 %v977, 0.5
    %v986 = vmul.f32 %v978, 0.5
    %v987 = vmul.f32 %v979, 0.5
    %v988 = vmul.f32 %v980, 0.5
    %v989 = vmul.f32 %v981, 0.5
    %v990 = vmul.f32 %v982, 0.5
    %v991 = vmul.f32 %v983, 0.5
    %v1000 = vrot.slane %v784, 7
    %v1001 = vrot.slane %v785, 7
    %v1002 = vrot.slane %v786, 7
    %v1003 = vrot.slane %v787, 7
    %v1004 = vrot.slane %v788, 7
    %v1005 = vrot.slane %v789, 7
    %v1006 = vrot.slane %v790, 7
    %v1007 = vrot.slane %v791, 7
    %v1016 = vmul.f32 %v984, %v1000
    %v1017 = vmul.f32 %v985, %v1001
    %v1018 = vmul.f32 %v986, %v1002
    %v1019 = vmul.f32 %v987, %v1003
    %v1020 = vmul.f32 %v988, %v1004
    %v1021 = vmul.f32 %v989, %v1005
    %v1022 = vmul.f32 %v990, %v1006
    %v1023 = vmul.f32 %v991, %v1007
    %1032 = vrot.lane.b32.xlu0 %v968, 64
    %v1033 = vpop.permute.xlu0 %1032
    %1034 = vrot.lane.b32.xlu0 %v969, 64
    %v1035 = vpop.permute.xlu0 %1034
    %1036 = vrot.lane.b32.xlu0 %v970, 64
    %v1037 = vpop.permute.xlu0 %1036
    %1038 = vrot.lane.b32.xlu0 %v971, 64
    %v1039 = vpop.permute.xlu0 %1038
    %1040 = vrot.lane.b32.xlu0 %v972, 64
    %v1041 = vpop.permute.xlu0 %1040
    %1042 = vrot.lane.b32.xlu0 %v973, 64
    %v1043 = vpop.permute.xlu0 %1042
    %1044 = vrot.lane.b32.xlu0 %v974, 64
    %v1045 = vpop.permute.xlu0 %1044
    %1046 = vrot.lane.b32.xlu0 %v975, 64
    %v1047 = vpop.permute.xlu0 %1046
    %v1056 = vmul.f32 %v984, %v1033
    %v1057 = vmul.f32 %v985, %v1035
    %v1058 = vmul.f32 %v986, %v1037
    %v1059 = vmul.f32 %v987, %v1039
    %v1060 = vmul.f32 %v988, %v1041
    %v1061 = vmul.f32 %v989, %v1043
    %v1062 = vmul.f32 %v990, %v1045
    %v1063 = vmul.f32 %v991, %v1047
    %1072 = vrot.lane.b32.xlu0 %v1056, 32
    %v1073 = vpop.permute.xlu0 %1072
    %1074 = vrot.lane.b32.xlu0 %v1057, 32
    %v1075 = vpop.permute.xlu0 %1074
    %1076 = vrot.lane.b32.xlu0 %v1058, 32
    %v1077 = vpop.permute.xlu0 %1076
    %1078 = vrot.lane.b32.xlu0 %v1059, 32
    %v1079 = vpop.permute.xlu0 %1078
    %1080 = vrot.lane.b32.xlu0 %v1060, 32
    %v1081 = vpop.permute.xlu0 %1080
    %1082 = vrot.lane.b32.xlu0 %v1061, 32
    %v1083 = vpop.permute.xlu0 %1082
    %1084 = vrot.lane.b32.xlu0 %v1062, 32
    %v1085 = vpop.permute.xlu0 %1084
    %1086 = vrot.lane.b32.xlu0 %v1063, 32
    %v1087 = vpop.permute.xlu0 %1086
    %v1096 = vadd.f32 %v1016, %v1073
    %v1097 = vadd.f32 %v1017, %v1075
    %v1098 = vadd.f32 %v1018, %v1077
    %v1099 = vadd.f32 %v1019, %v1079
    %v1100 = vadd.f32 %v1020, %v1081
    %v1101 = vadd.f32 %v1021, %v1083
    %v1102 = vadd.f32 %v1022, %v1085
    %v1103 = vadd.f32 %v1023, %v1087
    %v1104 = vtanh.pop %v1096
    %v1105 = vtanh.pop %v1097
    %v1106 = vtanh.pop %v1098
    %v1107 = vtanh.pop %v1099
    %v1108 = vtanh.pop %v1100
    %v1109 = vtanh.pop %v1101
    %v1110 = vtanh.pop %v1102
    %v1111 = vtanh.pop %v1103
    %1120 = vrot.lane.b32.xlu0 %v1104, 64
    %v1121 = vpop.permute.xlu0 %1120
    %1122 = vrot.lane.b32.xlu0 %v1105, 64
    %v1123 = vpop.permute.xlu0 %1122
    %1124 = vrot.lane.b32.xlu0 %v1106, 64
    %v1125 = vpop.permute.xlu0 %1124
    %1126 = vrot.lane.b32.xlu0 %v1107, 64
    %v1127 = vpop.permute.xlu0 %1126
    %1128 = vrot.lane.b32.xlu0 %v1108, 64
    %v1129 = vpop.permute.xlu0 %1128
    %1130 = vrot.lane.b32.xlu0 %v1109, 64
    %v1131 = vpop.permute.xlu0 %1130
    %1132 = vrot.lane.b32.xlu0 %v1110, 64
    %v1133 = vpop.permute.xlu0 %1132
    %1134 = vrot.lane.b32.xlu0 %v1111, 64
    %v1135 = vpop.permute.xlu0 %1134
    %v1144 = vmul.f32 %v984, %v1121
    %v1145 = vmul.f32 %v985, %v1123
    %v1146 = vmul.f32 %v986, %v1125
    %v1147 = vmul.f32 %v987, %v1127
    %v1148 = vmul.f32 %v988, %v1129
    %v1149 = vmul.f32 %v989, %v1131
    %v1150 = vmul.f32 %v990, %v1133
    %v1151 = vmul.f32 %v991, %v1135
    %v1160 = vrot.slane %v1144, 2
    %v1161 = vrot.slane %v1145, 1
    %v1162 = vsel %vm530, %v1161, %v1160
    %v1163 = vsel %vm533, %v1146, %v1162
    %v1164 = vrot.slane %v1147, 7
    %v1165 = vsel %vm536, %v1164, %v1163
    %v1166 = vrot.slane %v1148, 6
    %v1167 = vsel %vm539, %v1166, %v1165
    %v1168 = vrot.slane %v1149, 5
    %v1169 = vsel %vm542, %v1168, %v1167
    %v1170 = vrot.slane %v1150, 4
    %v1171 = vsel %vm545, %v1170, %v1169
    %v1172 = vrot.slane %v1151, 3
    %v1173 = vsel %vm548, %v1172, %v1171
    %1174 = vrot.lane.b32.xlu0 %v1173, 32
    %v1175 = vpop.permute.xlu0 %1174
    %v1176 = vsel %vm255, %v1175, 0
    %1178 = vmatprep.subr.mxu0 0.0
    %1179 = vmatpush1.msra.mxu0 %v50
    %1180 = vmatprep.subr.mxu0 0.0
    %1181 = vmatpush1.msra.mxu0 %v51
    %1182 = vmatprep.subr.mxu0 0.0
    %1183 = vmatpush1.msra.mxu0 %v52
    %1184 = vmatprep.subr.mxu0 0.0
    %1185 = vmatpush1.msra.mxu0 %v53
    %1186 = vmatprep.subr.mxu0 0.0
    %1187 = vmatpush1.msra.mxu0 0.0
    %1188 = vmatprep.subr.mxu0 0.0
    %1189 = vmatpush1.msra.mxu0 0.0
    %1190 = vmatprep.subr.mxu0 0.0
    %1191 = vmatpush1.msra.mxu0 0.0
    %1192 = vmatprep.subr.mxu0 0.0
    %1193 = vmatpush1.msra.mxu0 0.0
    %1194 = vmatprep.subr.mxu0 0.0
    %1195 = vmatpush1.msra.mxu0 0.0
    %1196 = vmatprep.subr.mxu0 0.0
    %1197 = vmatpush1.msra.mxu0 0.0
    %1198 = vmatprep.subr.mxu0 0.0
    %1199 = vmatpush1.msra.mxu0 0.0
    %1200 = vmatprep.subr.mxu0 0.0
    %1201 = vmatpush1.msra.mxu0 0.0
    %1202 = vmatprep.subr.mxu0 0.0
    %1203 = vmatpush1.msra.mxu0 0.0
    %1204 = vmatprep.subr.mxu0 0.0
    %1205 = vmatpush1.msra.mxu0 0.0
    %1206 = vmatprep.subr.mxu0 0.0
    %1207 = vmatpush1.msra.mxu0 0.0
    %1208 = vmatprep.subr.mxu0 0.0
    %1209 = vmatpush1.msra.mxu0 0.0
    %1210 = vmatprep.subr.mxu0 0.0
    %1211 = vmatpush1.msra.mxu0 0.0
    %1212 = vmatprep.subr.mxu0 0.0
    %1213 = vmatpush1.msra.mxu0 0.0
    %1214 = vmatprep.subr.mxu0 0.0
    %1215 = vmatpush1.msra.mxu0 0.0
    %1216 = vmatprep.subr.mxu0 0.0
    %1217 = vmatpush1.msra.mxu0 0.0
    %1218 = vmatprep.subr.mxu0 0.0
    %1219 = vmatpush1.msra.mxu0 0.0
    %1220 = vmatprep.subr.mxu0 0.0
    %1221 = vmatpush1.msra.mxu0 0.0
    %1222 = vmatprep.subr.mxu0 0.0
    %1223 = vmatpush1.msra.mxu0 0.0
    %1224 = vmatprep.subr.mxu0 0.0
    %1225 = vmatpush1.msra.mxu0 0.0
    %1226 = vmatprep.subr.mxu0 0.0
    %1227 = vmatpush1.msra.mxu0 0.0
    %1228 = vmatprep.subr.mxu0 0.0
    %1229 = vmatpush1.msra.mxu0 0.0
    %1230 = vmatprep.subr.mxu0 0.0
    %1231 = vmatpush1.msra.mxu0 0.0
    %1232 = vmatprep.subr.mxu0 0.0
    %1233 = vmatpush1.msra.mxu0 0.0
    %1234 = vmatprep.subr.mxu0 0.0
    %1235 = vmatpush1.msra.mxu0 0.0
    %1236 = vmatprep.subr.mxu0 0.0
    %1237 = vmatpush1.msra.mxu0 0.0
    %1238 = vmatprep.subr.mxu0 0.0
    %1239 = vmatpush1.msra.mxu0 0.0
    %1240 = vmatprep.subr.mxu0 0.0
    %1241 = vmatpush1.msra.mxu0 0.0
    %1242 = vmatprep.mubr.f32.mxu0 0.0
    %1243 = vmatmul.mubr.f32.gmra.mrb[0].mxu0 %v1176
    %v1244 = vpop.f32.mrb[0].mxu0
    %v1245 = vadd.f32 0.0, %v1244
    %v1246 = vpop.f32.mrb[0].mxu0
    %1247 = vdwg.mxu0
    %v1249 = vrot.slane %v1245, 5
    %v1250 = vrot.slane %v1245, 6
    %v1251 = vrot.slane %v1245, 7
    %v1252 = vrot.slane %v1245, 1
    %v1253 = vrot.slane %v1245, 2
    %v1254 = vrot.slane %v1245, 3
    %v1255 = vrot.slane %v1245, 4
    %v1264 = vadd.f32 %v177, %v1249
    %v1265 = vadd.f32 %v187, %v1250
    %v1266 = vadd.f32 %v197, %v1251
    %v1267 = vadd.f32 %v207, %v1245
    %v1268 = vadd.f32 %v217, %v1252
    %v1269 = vadd.f32 %v227, %v1253
    %v1270 = vadd.f32 %v237, %v1254
    %v1271 = vadd.f32 %v247, %v1255
    %v1272 = vmul.f32 %v1264, 0.5
    %v1273 = vmul.f32 %v1265, 0.5
    %v1274 = vmul.f32 %v1266, 0.5
    %v1275 = vmul.f32 %v1267, 0.5
    %v1276 = vmul.f32 %v1268, 0.5
    %v1277 = vmul.f32 %v1269, 0.5
    %v1278 = vmul.f32 %v1270, 0.5
    %v1279 = vmul.f32 %v1271, 0.5
    %v1280 = vtanh.pop %v1272
    %v1281 = vtanh.pop %v1273
    %v1282 = vtanh.pop %v1274
    %v1283 = vtanh.pop %v1275
    %v1284 = vtanh.pop %v1276
    %v1285 = vtanh.pop %v1277
    %v1286 = vtanh.pop %v1278
    %v1287 = vtanh.pop %v1279
    %v1288 = vadd.f32 %v1280, 1.0
    %v1289 = vadd.f32 %v1281, 1.0
    %v1290 = vadd.f32 %v1282, 1.0
    %v1291 = vadd.f32 %v1283, 1.0
    %v1292 = vadd.f32 %v1284, 1.0
    %v1293 = vadd.f32 %v1285, 1.0
    %v1294 = vadd.f32 %v1286, 1.0
    %v1295 = vadd.f32 %v1287, 1.0
    %v1296 = vmul.f32 %v1288, 0.5
    %v1297 = vmul.f32 %v1289, 0.5
    %v1298 = vmul.f32 %v1290, 0.5
    %v1299 = vmul.f32 %v1291, 0.5
    %v1300 = vmul.f32 %v1292, 0.5
    %v1301 = vmul.f32 %v1293, 0.5
    %v1302 = vmul.f32 %v1294, 0.5
    %v1303 = vmul.f32 %v1295, 0.5
    %v1312 = vrot.slane %v1096, 7
    %v1313 = vrot.slane %v1097, 7
    %v1314 = vrot.slane %v1098, 7
    %v1315 = vrot.slane %v1099, 7
    %v1316 = vrot.slane %v1100, 7
    %v1317 = vrot.slane %v1101, 7
    %v1318 = vrot.slane %v1102, 7
    %v1319 = vrot.slane %v1103, 7
    %v1328 = vmul.f32 %v1296, %v1312
    %v1329 = vmul.f32 %v1297, %v1313
    %v1330 = vmul.f32 %v1298, %v1314
    %v1331 = vmul.f32 %v1299, %v1315
    %v1332 = vmul.f32 %v1300, %v1316
    %v1333 = vmul.f32 %v1301, %v1317
    %v1334 = vmul.f32 %v1302, %v1318
    %v1335 = vmul.f32 %v1303, %v1319
    %1344 = vrot.lane.b32.xlu0 %v1280, 64
    %v1345 = vpop.permute.xlu0 %1344
    %1346 = vrot.lane.b32.xlu0 %v1281, 64
    %v1347 = vpop.permute.xlu0 %1346
    %1348 = vrot.lane.b32.xlu0 %v1282, 64
    %v1349 = vpop.permute.xlu0 %1348
    %1350 = vrot.lane.b32.xlu0 %v1283, 64
    %v1351 = vpop.permute.xlu0 %1350
    %1352 = vrot.lane.b32.xlu0 %v1284, 64
    %v1353 = vpop.permute.xlu0 %1352
    %1354 = vrot.lane.b32.xlu0 %v1285, 64
    %v1355 = vpop.permute.xlu0 %1354
    %1356 = vrot.lane.b32.xlu0 %v1286, 64
    %v1357 = vpop.permute.xlu0 %1356
    %1358 = vrot.lane.b32.xlu0 %v1287, 64
    %v1359 = vpop.permute.xlu0 %1358
    %v1368 = vmul.f32 %v1296, %v1345
    %v1369 = vmul.f32 %v1297, %v1347
    %v1370 = vmul.f32 %v1298, %v1349
    %v1371 = vmul.f32 %v1299, %v1351
    %v1372 = vmul.f32 %v1300, %v1353
    %v1373 = vmul.f32 %v1301, %v1355
    %v1374 = vmul.f32 %v1302, %v1357
    %v1375 = vmul.f32 %v1303, %v1359
    %1384 = vrot.lane.b32.xlu0 %v1368, 32
    %v1385 = vpop.permute.xlu0 %1384
    %1386 = vrot.lane.b32.xlu0 %v1369, 32
    %v1387 = vpop.permute.xlu0 %1386
    %1388 = vrot.lane.b32.xlu0 %v1370, 32
    %v1389 = vpop.permute.xlu0 %1388
    %1390 = vrot.lane.b32.xlu0 %v1371, 32
    %v1391 = vpop.permute.xlu0 %1390
    %1392 = vrot.lane.b32.xlu0 %v1372, 32
    %v1393 = vpop.permute.xlu0 %1392
    %1394 = vrot.lane.b32.xlu0 %v1373, 32
    %v1395 = vpop.permute.xlu0 %1394
    %1396 = vrot.lane.b32.xlu0 %v1374, 32
    %v1397 = vpop.permute.xlu0 %1396
    %1398 = vrot.lane.b32.xlu0 %v1375, 32
    %v1399 = vpop.permute.xlu0 %1398
    %v1408 = vadd.f32 %v1328, %v1385
    %v1409 = vadd.f32 %v1329, %v1387
    %v1410 = vadd.f32 %v1330, %v1389
    %v1411 = vadd.f32 %v1331, %v1391
    %v1412 = vadd.f32 %v1332, %v1393
    %v1413 = vadd.f32 %v1333, %v1395
    %v1414 = vadd.f32 %v1334, %v1397
    %v1415 = vadd.f32 %v1335, %v1399
    %v1416 = vtanh.pop %v1408
    %v1417 = vtanh.pop %v1409
    %v1418 = vtanh.pop %v1410
    %v1419 = vtanh.pop %v1411
    %v1420 = vtanh.pop %v1412
    %v1421 = vtanh.pop %v1413
    %v1422 = vtanh.pop %v1414
    %v1423 = vtanh.pop %v1415
    %1432 = vrot.lane.b32.xlu0 %v1416, 64
    %v1433 = vpop.permute.xlu0 %1432
    %1434 = vrot.lane.b32.xlu0 %v1417, 64
    %v1435 = vpop.permute.xlu0 %1434
    %1436 = vrot.lane.b32.xlu0 %v1418, 64
    %v1437 = vpop.permute.xlu0 %1436
    %1438 = vrot.lane.b32.xlu0 %v1419, 64
    %v1439 = vpop.permute.xlu0 %1438
    %1440 = vrot.lane.b32.xlu0 %v1420, 64
    %v1441 = vpop.permute.xlu0 %1440
    %1442 = vrot.lane.b32.xlu0 %v1421, 64
    %v1443 = vpop.permute.xlu0 %1442
    %1444 = vrot.lane.b32.xlu0 %v1422, 64
    %v1445 = vpop.permute.xlu0 %1444
    %1446 = vrot.lane.b32.xlu0 %v1423, 64
    %v1447 = vpop.permute.xlu0 %1446
    %v1456 = vmul.f32 %v1296, %v1433
    %v1457 = vmul.f32 %v1297, %v1435
    %v1458 = vmul.f32 %v1298, %v1437
    %v1459 = vmul.f32 %v1299, %v1439
    %v1460 = vmul.f32 %v1300, %v1441
    %v1461 = vmul.f32 %v1301, %v1443
    %v1462 = vmul.f32 %v1302, %v1445
    %v1463 = vmul.f32 %v1303, %v1447
    %v1472 = vrot.slane %v1456, 3
    %v1473 = vrot.slane %v1457, 2
    %v1474 = vsel %vm530, %v1473, %v1472
    %v1475 = vrot.slane %v1458, 1
    %v1476 = vsel %vm533, %v1475, %v1474
    %v1477 = vsel %vm536, %v1459, %v1476
    %v1478 = vrot.slane %v1460, 7
    %v1479 = vsel %vm539, %v1478, %v1477
    %v1480 = vrot.slane %v1461, 6
    %v1481 = vsel %vm542, %v1480, %v1479
    %v1482 = vrot.slane %v1462, 5
    %v1483 = vsel %vm545, %v1482, %v1481
    %v1484 = vrot.slane %v1463, 4
    %v1485 = vsel %vm548, %v1484, %v1483
    %1486 = vrot.lane.b32.xlu0 %v1485, 32
    %v1487 = vpop.permute.xlu0 %1486
    %v1488 = vsel %vm255, %v1487, 0
    %1490 = vmatprep.subr.mxu0 0.0
    %1491 = vmatpush1.msra.mxu0 %v50
    %1492 = vmatprep.subr.mxu0 0.0
    %1493 = vmatpush1.msra.mxu0 %v51
    %1494 = vmatprep.subr.mxu0 0.0
    %1495 = vmatpush1.msra.mxu0 %v52
    %1496 = vmatprep.subr.mxu0 0.0
    %1497 = vmatpush1.msra.mxu0 %v53
    %1498 = vmatprep.subr.mxu0 0.0
    %1499 = vmatpush1.msra.mxu0 0.0
    %1500 = vmatprep.subr.mxu0 0.0
    %1501 = vmatpush1.msra.mxu0 0.0
    %1502 = vmatprep.subr.mxu0 0.0
    %1503 = vmatpush1.msra.mxu0 0.0
    %1504 = vmatprep.subr.mxu0 0.0
    %1505 = vmatpush1.msra.mxu0 0.0
    %1506 = vmatprep.subr.mxu0 0.0
    %1507 = vmatpush1.msra.mxu0 0.0
    %1508 = vmatprep.subr.mxu0 0.0
    %1509 = vmatpush1.msra.mxu0 0.0
    %1510 = vmatprep.subr.mxu0 0.0
    %1511 = vmatpush1.msra.mxu0 0.0
    %1512 = vmatprep.subr.mxu0 0.0
    %1513 = vmatpush1.msra.mxu0 0.0
    %1514 = vmatprep.subr.mxu0 0.0
    %1515 = vmatpush1.msra.mxu0 0.0
    %1516 = vmatprep.subr.mxu0 0.0
    %1517 = vmatpush1.msra.mxu0 0.0
    %1518 = vmatprep.subr.mxu0 0.0
    %1519 = vmatpush1.msra.mxu0 0.0
    %1520 = vmatprep.subr.mxu0 0.0
    %1521 = vmatpush1.msra.mxu0 0.0
    %1522 = vmatprep.subr.mxu0 0.0
    %1523 = vmatpush1.msra.mxu0 0.0
    %1524 = vmatprep.subr.mxu0 0.0
    %1525 = vmatpush1.msra.mxu0 0.0
    %1526 = vmatprep.subr.mxu0 0.0
    %1527 = vmatpush1.msra.mxu0 0.0
    %1528 = vmatprep.subr.mxu0 0.0
    %1529 = vmatpush1.msra.mxu0 0.0
    %1530 = vmatprep.subr.mxu0 0.0
    %1531 = vmatpush1.msra.mxu0 0.0
    %1532 = vmatprep.subr.mxu0 0.0
    %1533 = vmatpush1.msra.mxu0 0.0
    %1534 = vmatprep.subr.mxu0 0.0
    %1535 = vmatpush1.msra.mxu0 0.0
    %1536 = vmatprep.subr.mxu0 0.0
    %1537 = vmatpush1.msra.mxu0 0.0
    %1538 = vmatprep.subr.mxu0 0.0
    %1539 = vmatpush1.msra.mxu0 0.0
    %1540 = vmatprep.subr.mxu0 0.0
    %1541 = vmatpush1.msra.mxu0 0.0
    %1542 = vmatprep.subr.mxu0 0.0
    %1543 = vmatpush1.msra.mxu0 0.0
    %1544 = vmatprep.subr.mxu0 0.0
    %1545 = vmatpush1.msra.mxu0 0.0
    %1546 = vmatprep.subr.mxu0 0.0
    %1547 = vmatpush1.msra.mxu0 0.0
    %1548 = vmatprep.subr.mxu0 0.0
    %1549 = vmatpush1.msra.mxu0 0.0
    %1550 = vmatprep.subr.mxu0 0.0
    %1551 = vmatpush1.msra.mxu0 0.0
    %1552 = vmatprep.subr.mxu0 0.0
    %1553 = vmatpush1.msra.mxu0 0.0
    %1554 = vmatprep.mubr.f32.mxu0 0.0
    %1555 = vmatmul.mubr.f32.gmra.mrb[0].mxu0 %v1488
    %v1556 = vpop.f32.mrb[0].mxu0
    %v1557 = vadd.f32 0.0, %v1556
    %v1558 = vpop.f32.mrb[0].mxu0
    %1559 = vdwg.mxu0
    %v1561 = vrot.slane %v1557, 4
    %v1562 = vrot.slane %v1557, 5
    %v1563 = vrot.slane %v1557, 6
    %v1564 = vrot.slane %v1557, 7
    %v1565 = vrot.slane %v1557, 1
    %v1566 = vrot.slane %v1557, 2
    %v1567 = vrot.slane %v1557, 3
    %v1576 = vadd.f32 %v177, %v1561
    %v1577 = vadd.f32 %v187, %v1562
    %v1578 = vadd.f32 %v197, %v1563
    %v1579 = vadd.f32 %v207, %v1564
    %v1580 = vadd.f32 %v217, %v1557
    %v1581 = vadd.f32 %v227, %v1565
    %v1582 = vadd.f32 %v237, %v1566
    %v1583 = vadd.f32 %v247, %v1567
    %v1584 = vmul.f32 %v1576, 0.5
    %v1585 = vmul.f32 %v1577, 0.5
    %v1586 = vmul.f32 %v1578, 0.5
    %v1587 = vmul.f32 %v1579, 0.5
    %v1588 = vmul.f32 %v1580, 0.5
    %v1589 = vmul.f32 %v1581, 0.5
    %v1590 = vmul.f32 %v1582, 0.5
    %v1591 = vmul.f32 %v1583, 0.5
    %v1592 = vtanh.pop %v1584
    %v1593 = vtanh.pop %v1585
    %v1594 = vtanh.pop %v1586
    %v1595 = vtanh.pop %v1587
    %v1596 = vtanh.pop %v1588
    %v1597 = vtanh.pop %v1589
    %v1598 = vtanh.pop %v1590
    %v1599 = vtanh.pop %v1591
    %v1600 = vadd.f32 %v1592, 1.0
    %v1601 = vadd.f32 %v1593, 1.0
    %v1602 = vadd.f32 %v1594, 1.0
    %v1603 = vadd.f32 %v1595, 1.0
    %v1604 = vadd.f32 %v1596, 1.0
    %v1605 = vadd.f32 %v1597, 1.0
    %v1606 = vadd.f32 %v1598, 1.0
    %v1607 = vadd.f32 %v1599, 1.0
    %v1608 = vmul.f32 %v1600, 0.5
    %v1609 = vmul.f32 %v1601, 0.5
    %v1610 = vmul.f32 %v1602, 0.5
    %v1611 = vmul.f32 %v1603, 0.5
    %v1612 = vmul.f32 %v1604, 0.5
    %v1613 = vmul.f32 %v1605, 0.5
    %v1614 = vmul.f32 %v1606, 0.5
    %v1615 = vmul.f32 %v1607, 0.5
    %v1624 = vrot.slane %v1408, 7
    %v1625 = vrot.slane %v1409, 7
    %v1626 = vrot.slane %v1410, 7
    %v1627 = vrot.slane %v1411, 7
    %v1628 = vrot.slane %v1412, 7
    %v1629 = vrot.slane %v1413, 7
    %v1630 = vrot.slane %v1414, 7
    %v1631 = vrot.slane %v1415, 7
    %v1640 = vmul.f32 %v1608, %v1624
    %v1641 = vmul.f32 %v1609, %v1625
    %v1642 = vmul.f32 %v1610, %v1626
    %v1643 = vmul.f32 %v1611, %v1627
    %v1644 = vmul.f32 %v1612, %v1628
    %v1645 = vmul.f32 %v1613, %v1629
    %v1646 = vmul.f32 %v1614, %v1630
    %v1647 = vmul.f32 %v1615, %v1631
    %1656 = vrot.lane.b32.xlu0 %v1592, 64
    %v1657 = vpop.permute.xlu0 %1656
    %1658 = vrot.lane.b32.xlu0 %v1593, 64
    %v1659 = vpop.permute.xlu0 %1658
    %1660 = vrot.lane.b32.xlu0 %v1594, 64
    %v1661 = vpop.permute.xlu0 %1660
    %1662 = vrot.lane.b32.xlu0 %v1595, 64
    %v1663 = vpop.permute.xlu0 %1662
    %1664 = vrot.lane.b32.xlu0 %v1596, 64
    %v1665 = vpop.permute.xlu0 %1664
    %1666 = vrot.lane.b32.xlu0 %v1597, 64
    %v1667 = vpop.permute.xlu0 %1666
    %1668 = vrot.lane.b32.xlu0 %v1598, 64
    %v1669 = vpop.permute.xlu0 %1668
    %1670 = vrot.lane.b32.xlu0 %v1599, 64
    %v1671 = vpop.permute.xlu0 %1670
    %v1680 = vmul.f32 %v1608, %v1657
    %v1681 = vmul.f32 %v1609, %v1659
    %v1682 = vmul.f32 %v1610, %v1661
    %v1683 = vmul.f32 %v1611, %v1663
    %v1684 = vmul.f32 %v1612, %v1665
    %v1685 = vmul.f32 %v1613, %v1667
    %v1686 = vmul.f32 %v1614, %v1669
    %v1687 = vmul.f32 %v1615, %v1671
    %1696 = vrot.lane.b32.xlu0 %v1680, 32
    %v1697 = vpop.permute.xlu0 %1696
    %1698 = vrot.lane.b32.xlu0 %v1681, 32
    %v1699 = vpop.permute.xlu0 %1698
    %1700 = vrot.lane.b32.xlu0 %v1682, 32
    %v1701 = vpop.permute.xlu0 %1700
    %1702 = vrot.lane.b32.xlu0 %v1683, 32
    %v1703 = vpop.permute.xlu0 %1702
    %1704 = vrot.lane.b32.xlu0 %v1684, 32
    %v1705 = vpop.permute.xlu0 %1704
    %1706 = vrot.lane.b32.xlu0 %v1685, 32
    %v1707 = vpop.permute.xlu0 %1706
    %1708 = vrot.lane.b32.xlu0 %v1686, 32
    %v1709 = vpop.permute.xlu0 %1708
    %1710 = vrot.lane.b32.xlu0 %v1687, 32
    %v1711 = vpop.permute.xlu0 %1710
    %v1720 = vadd.f32 %v1640, %v1697
    %v1721 = vadd.f32 %v1641, %v1699
    %v1722 = vadd.f32 %v1642, %v1701
    %v1723 = vadd.f32 %v1643, %v1703
    %v1724 = vadd.f32 %v1644, %v1705
    %v1725 = vadd.f32 %v1645, %v1707
    %v1726 = vadd.f32 %v1646, %v1709
    %v1727 = vadd.f32 %v1647, %v1711
    %v1728 = vtanh.pop %v1720
    %v1729 = vtanh.pop %v1721
    %v1730 = vtanh.pop %v1722
    %v1731 = vtanh.pop %v1723
    %v1732 = vtanh.pop %v1724
    %v1733 = vtanh.pop %v1725
    %v1734 = vtanh.pop %v1726
    %v1735 = vtanh.pop %v1727
    %1744 = vrot.lane.b32.xlu0 %v1728, 64
    %v1745 = vpop.permute.xlu0 %1744
    %1746 = vrot.lane.b32.xlu0 %v1729, 64
    %v1747 = vpop.permute.xlu0 %1746
    %1748 = vrot.lane.b32.xlu0 %v1730, 64
    %v1749 = vpop.permute.xlu0 %1748
    %1750 = vrot.lane.b32.xlu0 %v1731, 64
    %v1751 = vpop.permute.xlu0 %1750
    %1752 = vrot.lane.b32.xlu0 %v1732, 64
    %v1753 = vpop.permute.xlu0 %1752
    %1754 = vrot.lane.b32.xlu0 %v1733, 64
    %v1755 = vpop.permute.xlu0 %1754
    %1756 = vrot.lane.b32.xlu0 %v1734, 64
    %v1757 = vpop.permute.xlu0 %1756
    %1758 = vrot.lane.b32.xlu0 %v1735, 64
    %v1759 = vpop.permute.xlu0 %1758
    %v1768 = vmul.f32 %v1608, %v1745
    %v1769 = vmul.f32 %v1609, %v1747
    %v1770 = vmul.f32 %v1610, %v1749
    %v1771 = vmul.f32 %v1611, %v1751
    %v1772 = vmul.f32 %v1612, %v1753
    %v1773 = vmul.f32 %v1613, %v1755
    %v1774 = vmul.f32 %v1614, %v1757
    %v1775 = vmul.f32 %v1615, %v1759
    %v1784 = vrot.slane %v1768, 4
    %v1785 = vrot.slane %v1769, 3
    %v1786 = vsel %vm530, %v1785, %v1784
    %v1787 = vrot.slane %v1770, 2
    %v1788 = vsel %vm533, %v1787, %v1786
    %v1789 = vrot.slane %v1771, 1
    %v1790 = vsel %vm536, %v1789, %v1788
    %v1791 = vsel %vm539, %v1772, %v1790
    %v1792 = vrot.slane %v1773, 7
    %v1793 = vsel %vm542, %v1792, %v1791
    %v1794 = vrot.slane %v1774, 6
    %v1795 = vsel %vm545, %v1794, %v1793
    %v1796 = vrot.slane %v1775, 5
    %v1797 = vsel %vm548, %v1796, %v1795
    %1798 = vrot.lane.b32.xlu0 %v1797, 32
    %v1799 = vpop.permute.xlu0 %1798
    %v1800 = vsel %vm255, %v1799, 0
    %1802 = vmatprep.subr.mxu0 0.0
    %1803 = vmatpush1.msra.mxu0 %v50
    %1804 = vmatprep.subr.mxu0 0.0
    %1805 = vmatpush1.msra.mxu0 %v51
    %1806 = vmatprep.subr.mxu0 0.0
    %1807 = vmatpush1.msra.mxu0 %v52
    %1808 = vmatprep.subr.mxu0 0.0
    %1809 = vmatpush1.msra.mxu0 %v53
    %1810 = vmatprep.subr.mxu0 0.0
    %1811 = vmatpush1.msra.mxu0 0.0
    %1812 = vmatprep.subr.mxu0 0.0
    %1813 = vmatpush1.msra.mxu0 0.0
    %1814 = vmatprep.subr.mxu0 0.0
    %1815 = vmatpush1.msra.mxu0 0.0
    %1816 = vmatprep.subr.mxu0 0.0
    %1817 = vmatpush1.msra.mxu0 0.0
    %1818 = vmatprep.subr.mxu0 0.0
    %1819 = vmatpush1.msra.mxu0 0.0
    %1820 = vmatprep.subr.mxu0 0.0
    %1821 = vmatpush1.msra.mxu0 0.0
    %1822 = vmatprep.subr.mxu0 0.0
    %1823 = vmatpush1.msra.mxu0 0.0
    %1824 = vmatprep.subr.mxu0 0.0
    %1825 = vmatpush1.msra.mxu0 0.0
    %1826 = vmatprep.subr.mxu0 0.0
    %1827 = vmatpush1.msra.mxu0 0.0
    %1828 = vmatprep.subr.mxu0 0.0
    %1829 = vmatpush1.msra.mxu0 0.0
    %1830 = vmatprep.subr.mxu0 0.0
    %1831 = vmatpush1.msra.mxu0 0.0
    %1832 = vmatprep.subr.mxu0 0.0
    %1833 = vmatpush1.msra.mxu0 0.0
    %1834 = vmatprep.subr.mxu0 0.0
    %1835 = vmatpush1.msra.mxu0 0.0
    %1836 = vmatprep.subr.mxu0 0.0
    %1837 = vmatpush1.msra.mxu0 0.0
    %1838 = vmatprep.subr.mxu0 0.0
    %1839 = vmatpush1.msra.mxu0 0.0
    %1840 = vmatprep.subr.mxu0 0.0
    %1841 = vmatpush1.msra.mxu0 0.0
    %1842 = vmatprep.subr.mxu0 0.0
    %1843 = vmatpush1.msra.mxu0 0.0
    %1844 = vmatprep.subr.mxu0 0.0
    %1845 = vmatpush1.msra.mxu0 0.0
    %1846 = vmatprep.subr.mxu0 0.0
    %1847 = vmatpush1.msra.mxu0 0.0
    %1848 = vmatprep.subr.mxu0 0.0
    %1849 = vmatpush1.msra.mxu0 0.0
    %1850 = vmatprep.subr.mxu0 0.0
    %1851 = vmatpush1.msra.mxu0 0.0
    %1852 = vmatprep.subr.mxu0 0.0
    %1853 = vmatpush1.msra.mxu0 0.0
    %1854 = vmatprep.subr.mxu0 0.0
    %1855 = vmatpush1.msra.mxu0 0.0
    %1856 = vmatprep.subr.mxu0 0.0
    %1857 = vmatpush1.msra.mxu0 0.0
    %1858 = vmatprep.subr.mxu0 0.0
    %1859 = vmatpush1.msra.mxu0 0.0
    %1860 = vmatprep.subr.mxu0 0.0
    %1861 = vmatpush1.msra.mxu0 0.0
    %1862 = vmatprep.subr.mxu0 0.0
    %1863 = vmatpush1.msra.mxu0 0.0
    %1864 = vmatprep.subr.mxu0 0.0
    %1865 = vmatpush1.msra.mxu0 0.0
    %1866 = vmatprep.mubr.f32.mxu0 0.0
    %1867 = vmatmul.mubr.f32.gmra.mrb[0].mxu0 %v1800
    %v1868 = vpop.f32.mrb[0].mxu0
    %v1869 = vadd.f32 0.0, %v1868
    %v1870 = vpop.f32.mrb[0].mxu0
    %1871 = vdwg.mxu0
    %v1873 = vrot.slane %v1869, 3
    %v1874 = vrot.slane %v1869, 4
    %v1875 = vrot.slane %v1869, 5
    %v1876 = vrot.slane %v1869, 6
    %v1877 = vrot.slane %v1869, 7
    %v1878 = vrot.slane %v1869, 1
    %v1879 = vrot.slane %v1869, 2
    %v1888 = vadd.f32 %v177, %v1873
    %v1889 = vadd.f32 %v187, %v1874
    %v1890 = vadd.f32 %v197, %v1875
    %v1891 = vadd.f32 %v207, %v1876
    %v1892 = vadd.f32 %v217, %v1877
    %v1893 = vadd.f32 %v227, %v1869
    %v1894 = vadd.f32 %v237, %v1878
    %v1895 = vadd.f32 %v247, %v1879
    %v1896 = vmul.f32 %v1888, 0.5
    %v1897 = vmul.f32 %v1889, 0.5
    %v1898 = vmul.f32 %v1890, 0.5
    %v1899 = vmul.f32 %v1891, 0.5
    %v1900 = vmul.f32 %v1892, 0.5
    %v1901 = vmul.f32 %v1893, 0.5
    %v1902 = vmul.f32 %v1894, 0.5
    %v1903 = vmul.f32 %v1895, 0.5
    %v1904 = vtanh.pop %v1896
    %v1905 = vtanh.pop %v1897
    %v1906 = vtanh.pop %v1898
    %v1907 = vtanh.pop %v1899
    %v1908 = vtanh.pop %v1900
    %v1909 = vtanh.pop %v1901
    %v1910 = vtanh.pop %v1902
    %v1911 = vtanh.pop %v1903
    %v1912 = vadd.f32 %v1904, 1.0
    %v1913 = vadd.f32 %v1905, 1.0
    %v1914 = vadd.f32 %v1906, 1.0
    %v1915 = vadd.f32 %v1907, 1.0
    %v1916 = vadd.f32 %v1908, 1.0
    %v1917 = vadd.f32 %v1909, 1.0
    %v1918 = vadd.f32 %v1910, 1.0
    %v1919 = vadd.f32 %v1911, 1.0
    %v1920 = vmul.f32 %v1912, 0.5
    %v1921 = vmul.f32 %v1913, 0.5
    %v1922 = vmul.f32 %v1914, 0.5
    %v1923 = vmul.f32 %v1915, 0.5
    %v1924 = vmul.f32 %v1916, 0.5
    %v1925 = vmul.f32 %v1917, 0.5
    %v1926 = vmul.f32 %v1918, 0.5
    %v1927 = vmul.f32 %v1919, 0.5
    %v1936 = vrot.slane %v1720, 7
    %v1937 = vrot.slane %v1721, 7
    %v1938 = vrot.slane %v1722, 7
    %v1939 = vrot.slane %v1723, 7
    %v1940 = vrot.slane %v1724, 7
    %v1941 = vrot.slane %v1725, 7
    %v1942 = vrot.slane %v1726, 7
    %v1943 = vrot.slane %v1727, 7
    %v1952 = vmul.f32 %v1920, %v1936
    %v1953 = vmul.f32 %v1921, %v1937
    %v1954 = vmul.f32 %v1922, %v1938
    %v1955 = vmul.f32 %v1923, %v1939
    %v1956 = vmul.f32 %v1924, %v1940
    %v1957 = vmul.f32 %v1925, %v1941
    %v1958 = vmul.f32 %v1926, %v1942
    %v1959 = vmul.f32 %v1927, %v1943
    %1968 = vrot.lane.b32.xlu0 %v1904, 64
    %v1969 = vpop.permute.xlu0 %1968
    %1970 = vrot.lane.b32.xlu0 %v1905, 64
    %v1971 = vpop.permute.xlu0 %1970
    %1972 = vrot.lane.b32.xlu0 %v1906, 64
    %v1973 = vpop.permute.xlu0 %1972
    %1974 = vrot.lane.b32.xlu0 %v1907, 64
    %v1975 = vpop.permute.xlu0 %1974
    %1976 = vrot.lane.b32.xlu0 %v1908, 64
    %v1977 = vpop.permute.xlu0 %1976
    %1978 = vrot.lane.b32.xlu0 %v1909, 64
    %v1979 = vpop.permute.xlu0 %1978
    %1980 = vrot.lane.b32.xlu0 %v1910, 64
    %v1981 = vpop.permute.xlu0 %1980
    %1982 = vrot.lane.b32.xlu0 %v1911, 64
    %v1983 = vpop.permute.xlu0 %1982
    %v1992 = vmul.f32 %v1920, %v1969
    %v1993 = vmul.f32 %v1921, %v1971
    %v1994 = vmul.f32 %v1922, %v1973
    %v1995 = vmul.f32 %v1923, %v1975
    %v1996 = vmul.f32 %v1924, %v1977
    %v1997 = vmul.f32 %v1925, %v1979
    %v1998 = vmul.f32 %v1926, %v1981
    %v1999 = vmul.f32 %v1927, %v1983
    %2008 = vrot.lane.b32.xlu0 %v1992, 32
    %v2009 = vpop.permute.xlu0 %2008
    %2010 = vrot.lane.b32.xlu0 %v1993, 32
    %v2011 = vpop.permute.xlu0 %2010
    %2012 = vrot.lane.b32.xlu0 %v1994, 32
    %v2013 = vpop.permute.xlu0 %2012
    %2014 = vrot.lane.b32.xlu0 %v1995, 32
    %v2015 = vpop.permute.xlu0 %2014
    %2016 = vrot.lane.b32.xlu0 %v1996, 32
    %v2017 = vpop.permute.xlu0 %2016
    %2018 = vrot.lane.b32.xlu0 %v1997, 32
    %v2019 = vpop.permute.xlu0 %2018
    %2020 = vrot.lane.b32.xlu0 %v1998, 32
    %v2021 = vpop.permute.xlu0 %2020
    %2022 = vrot.lane.b32.xlu0 %v1999, 32
    %v2023 = vpop.permute.xlu0 %2022
    %v2032 = vadd.f32 %v1952, %v2009
    %v2033 = vadd.f32 %v1953, %v2011
    %v2034 = vadd.f32 %v1954, %v2013
    %v2035 = vadd.f32 %v1955, %v2015
    %v2036 = vadd.f32 %v1956, %v2017
    %v2037 = vadd.f32 %v1957, %v2019
    %v2038 = vadd.f32 %v1958, %v2021
    %v2039 = vadd.f32 %v1959, %v2023
    %v2040 = vtanh.pop %v2032
    %v2041 = vtanh.pop %v2033
    %v2042 = vtanh.pop %v2034
    %v2043 = vtanh.pop %v2035
    %v2044 = vtanh.pop %v2036
    %v2045 = vtanh.pop %v2037
    %v2046 = vtanh.pop %v2038
    %v2047 = vtanh.pop %v2039
    %2056 = vrot.lane.b32.xlu0 %v2040, 64
    %v2057 = vpop.permute.xlu0 %2056
    %2058 = vrot.lane.b32.xlu0 %v2041, 64
    %v2059 = vpop.permute.xlu0 %2058
    %2060 = vrot.lane.b32.xlu0 %v2042, 64
    %v2061 = vpop.permute.xlu0 %2060
    %2062 = vrot.lane.b32.xlu0 %v2043, 64
    %v2063 = vpop.permute.xlu0 %2062
    %2064 = vrot.lane.b32.xlu0 %v2044, 64
    %v2065 = vpop.permute.xlu0 %2064
    %2066 = vrot.lane.b32.xlu0 %v2045, 64
    %v2067 = vpop.permute.xlu0 %2066
    %2068 = vrot.lane.b32.xlu0 %v2046, 64
    %v2069 = vpop.permute.xlu0 %2068
    %2070 = vrot.lane.b32.xlu0 %v2047, 64
    %v2071 = vpop.permute.xlu0 %2070
    %v2080 = vmul.f32 %v1920, %v2057
    %v2081 = vmul.f32 %v1921, %v2059
    %v2082 = vmul.f32 %v1922, %v2061
    %v2083 = vmul.f32 %v1923, %v2063
    %v2084 = vmul.f32 %v1924, %v2065
    %v2085 = vmul.f32 %v1925, %v2067
    %v2086 = vmul.f32 %v1926, %v2069
    %v2087 = vmul.f32 %v1927, %v2071
    %v2096 = vrot.slane %v2080, 5
    %v2097 = vrot.slane %v2081, 4
    %v2098 = vsel %vm530, %v2097, %v2096
    %v2099 = vrot.slane %v2082, 3
    %v2100 = vsel %vm533, %v2099, %v2098
    %v2101 = vrot.slane %v2083, 2
    %v2102 = vsel %vm536, %v2101, %v2100
    %v2103 = vrot.slane %v2084, 1
    %v2104 = vsel %vm539, %v2103, %v2102
    %v2105 = vsel %vm542, %v2085, %v2104
    %v2106 = vrot.slane %v2086, 7
    %v2107 = vsel %vm545, %v2106, %v2105
    %v2108 = vrot.slane %v2087, 6
    %v2109 = vsel %vm548, %v2108, %v2107
    %2110 = vrot.lane.b32.xlu0 %v2109, 32
    %v2111 = vpop.permute.xlu0 %2110
    %v2112 = vsel %vm255, %v2111, 0
    %2114 = vmatprep.subr.mxu0 0.0
    %2115 = vmatpush1.msra.mxu0 %v50
    %2116 = vmatprep.subr.mxu0 0.0
    %2117 = vmatpush1.msra.mxu0 %v51
    %2118 = vmatprep.subr.mxu0 0.0
    %2119 = vmatpush1.msra.mxu0 %v52
    %2120 = vmatprep.subr.mxu0 0.0
    %2121 = vmatpush1.msra.mxu0 %v53
    %2122 = vmatprep.subr.mxu0 0.0
    %2123 = vmatpush1.msra.mxu0 0.0
    %2124 = vmatprep.subr.mxu0 0.0
    %2125 = vmatpush1.msra.mxu0 0.0
    %2126 = vmatprep.subr.mxu0 0.0
    %2127 = vmatpush1.msra.mxu0 0.0
    %2128 = vmatprep.subr.mxu0 0.0
    %2129 = vmatpush1.msra.mxu0 0.0
    %2130 = vmatprep.subr.mxu0 0.0
    %2131 = vmatpush1.msra.mxu0 0.0
    %2132 = vmatprep.subr.mxu0 0.0
    %2133 = vmatpush1.msra.mxu0 0.0
    %2134 = vmatprep.subr.mxu0 0.0
    %2135 = vmatpush1.msra.mxu0 0.0
    %2136 = vmatprep.subr.mxu0 0.0
    %2137 = vmatpush1.msra.mxu0 0.0
    %2138 = vmatprep.subr.mxu0 0.0
    %2139 = vmatpush1.msra.mxu0 0.0
    %2140 = vmatprep.subr.mxu0 0.0
    %2141 = vmatpush1.msra.mxu0 0.0
    %2142 = vmatprep.subr.mxu0 0.0
    %2143 = vmatpush1.msra.mxu0 0.0
    %2144 = vmatprep.subr.mxu0 0.0
    %2145 = vmatpush1.msra.mxu0 0.0
    %2146 = vmatprep.subr.mxu0 0.0
    %2147 = vmatpush1.msra.mxu0 0.0
    %2148 = vmatprep.subr.mxu0 0.0
    %2149 = vmatpush1.msra.mxu0 0.0
    %2150 = vmatprep.subr.mxu0 0.0
    %2151 = vmatpush1.msra.mxu0 0.0
    %2152 = vmatprep.subr.mxu0 0.0
    %2153 = vmatpush1.msra.mxu0 0.0
    %2154 = vmatprep.subr.mxu0 0.0
    %2155 = vmatpush1.msra.mxu0 0.0
    %2156 = vmatprep.subr.mxu0 0.0
    %2157 = vmatpush1.msra.mxu0 0.0
    %2158 = vmatprep.subr.mxu0 0.0
    %2159 = vmatpush1.msra.mxu0 0.0
    %2160 = vmatprep.subr.mxu0 0.0
    %2161 = vmatpush1.msra.mxu0 0.0
    %2162 = vmatprep.subr.mxu0 0.0
    %2163 = vmatpush1.msra.mxu0 0.0
    %2164 = vmatprep.subr.mxu0 0.0
    %2165 = vmatpush1.msra.mxu0 0.0
    %2166 = vmatprep.subr.mxu0 0.0
    %2167 = vmatpush1.msra.mxu0 0.0
    %2168 = vmatprep.subr.mxu0 0.0
    %2169 = vmatpush1.msra.mxu0 0.0
    %2170 = vmatprep.subr.mxu0 0.0
    %2171 = vmatpush1.msra.mxu0 0.0
    %2172 = vmatprep.subr.mxu0 0.0
    %2173 = vmatpush1.msra.mxu0 0.0
    %2174 = vmatprep.subr.mxu0 0.0
    %2175 = vmatpush1.msra.mxu0 0.0
    %2176 = vmatprep.subr.mxu0 0.0
    %2177 = vmatpush1.msra.mxu0 0.0
    %2178 = vmatprep.mubr.f32.mxu0 0.0
    %2179 = vmatmul.mubr.f32.gmra.mrb[0].mxu0 %v2112
    %v2180 = vpop.f32.mrb[0].mxu0
    %v2181 = vadd.f32 0.0, %v2180
    %v2182 = vpop.f32.mrb[0].mxu0
    %2183 = vdwg.mxu0
    %v2185 = vrot.slane %v2181, 2
    %v2186 = vrot.slane %v2181, 3
    %v2187 = vrot.slane %v2181, 4
    %v2188 = vrot.slane %v2181, 5
    %v2189 = vrot.slane %v2181, 6
    %v2190 = vrot.slane %v2181, 7
    %v2191 = vrot.slane %v2181, 1
    %v2200 = vadd.f32 %v177, %v2185
    %v2201 = vadd.f32 %v187, %v2186
    %v2202 = vadd.f32 %v197, %v2187
    %v2203 = vadd.f32 %v207, %v2188
    %v2204 = vadd.f32 %v217, %v2189
    %v2205 = vadd.f32 %v227, %v2190
    %v2206 = vadd.f32 %v237, %v2181
    %v2207 = vadd.f32 %v247, %v2191
    %v2208 = vmul.f32 %v2200, 0.5
    %v2209 = vmul.f32 %v2201, 0.5
    %v2210 = vmul.f32 %v2202, 0.5
    %v2211 = vmul.f32 %v2203, 0.5
    %v2212 = vmul.f32 %v2204, 0.5
    %v2213 = vmul.f32 %v2205, 0.5
    %v2214 = vmul.f32 %v2206, 0.5
    %v2215 = vmul.f32 %v2207, 0.5
    %v2216 = vtanh.pop %v2208
    %v2217 = vtanh.pop %v2209
    %v2218 = vtanh.pop %v2210
    %v2219 = vtanh.pop %v2211
    %v2220 = vtanh.pop %v2212
    %v2221 = vtanh.pop %v2213
    %v2222 = vtanh.pop %v2214
    %v2223 = vtanh.pop %v2215
    %v2224 = vadd.f32 %v2216, 1.0
    %v2225 = vadd.f32 %v2217, 1.0
    %v2226 = vadd.f32 %v2218, 1.0
    %v2227 = vadd.f32 %v2219, 1.0
    %v2228 = vadd.f32 %v2220, 1.0
    %v2229 = vadd.f32 %v2221, 1.0
    %v2230 = vadd.f32 %v2222, 1.0
    %v2231 = vadd.f32 %v2223, 1.0
    %v2232 = vmul.f32 %v2224, 0.5
    %v2233 = vmul.f32 %v2225, 0.5
    %v2234 = vmul.f32 %v2226, 0.5
    %v2235 = vmul.f32 %v2227, 0.5
    %v2236 = vmul.f32 %v2228, 0.5
    %v2237 = vmul.f32 %v2229, 0.5
    %v2238 = vmul.f32 %v2230, 0.5
    %v2239 = vmul.f32 %v2231, 0.5
    %v2248 = vrot.slane %v2032, 7
    %v2249 = vrot.slane %v2033, 7
    %v2250 = vrot.slane %v2034, 7
    %v2251 = vrot.slane %v2035, 7
    %v2252 = vrot.slane %v2036, 7
    %v2253 = vrot.slane %v2037, 7
    %v2254 = vrot.slane %v2038, 7
    %v2255 = vrot.slane %v2039, 7
    %v2264 = vmul.f32 %v2232, %v2248
    %v2265 = vmul.f32 %v2233, %v2249
    %v2266 = vmul.f32 %v2234, %v2250
    %v2267 = vmul.f32 %v2235, %v2251
    %v2268 = vmul.f32 %v2236, %v2252
    %v2269 = vmul.f32 %v2237, %v2253
    %v2270 = vmul.f32 %v2238, %v2254
    %v2271 = vmul.f32 %v2239, %v2255
    %2280 = vrot.lane.b32.xlu0 %v2216, 64
    %v2281 = vpop.permute.xlu0 %2280
    %2282 = vrot.lane.b32.xlu0 %v2217, 64
    %v2283 = vpop.permute.xlu0 %2282
    %2284 = vrot.lane.b32.xlu0 %v2218, 64
    %v2285 = vpop.permute.xlu0 %2284
    %2286 = vrot.lane.b32.xlu0 %v2219, 64
    %v2287 = vpop.permute.xlu0 %2286
    %2288 = vrot.lane.b32.xlu0 %v2220, 64
    %v2289 = vpop.permute.xlu0 %2288
    %2290 = vrot.lane.b32.xlu0 %v2221, 64
    %v2291 = vpop.permute.xlu0 %2290
    %2292 = vrot.lane.b32.xlu0 %v2222, 64
    %v2293 = vpop.permute.xlu0 %2292
    %2294 = vrot.lane.b32.xlu0 %v2223, 64
    %v2295 = vpop.permute.xlu0 %2294
    %v2304 = vmul.f32 %v2232, %v2281
    %v2305 = vmul.f32 %v2233, %v2283
    %v2306 = vmul.f32 %v2234, %v2285
    %v2307 = vmul.f32 %v2235, %v2287
    %v2308 = vmul.f32 %v2236, %v2289
    %v2309 = vmul.f32 %v2237, %v2291
    %v2310 = vmul.f32 %v2238, %v2293
    %v2311 = vmul.f32 %v2239, %v2295
    %2320 = vrot.lane.b32.xlu0 %v2304, 32
    %v2321 = vpop.permute.xlu0 %2320
    %2322 = vrot.lane.b32.xlu0 %v2305, 32
    %v2323 = vpop.permute.xlu0 %2322
    %2324 = vrot.lane.b32.xlu0 %v2306, 32
    %v2325 = vpop.permute.xlu0 %2324
    %2326 = vrot.lane.b32.xlu0 %v2307, 32
    %v2327 = vpop.permute.xlu0 %2326
    %2328 = vrot.lane.b32.xlu0 %v2308, 32
    %v2329 = vpop.permute.xlu0 %2328
    %2330 = vrot.lane.b32.xlu0 %v2309, 32
    %v2331 = vpop.permute.xlu0 %2330
    %2332 = vrot.lane.b32.xlu0 %v2310, 32
    %v2333 = vpop.permute.xlu0 %2332
    %2334 = vrot.lane.b32.xlu0 %v2311, 32
    %v2335 = vpop.permute.xlu0 %2334
    %v2344 = vadd.f32 %v2264, %v2321
    %v2345 = vadd.f32 %v2265, %v2323
    %v2346 = vadd.f32 %v2266, %v2325
    %v2347 = vadd.f32 %v2267, %v2327
    %v2348 = vadd.f32 %v2268, %v2329
    %v2349 = vadd.f32 %v2269, %v2331
    %v2350 = vadd.f32 %v2270, %v2333
    %v2351 = vadd.f32 %v2271, %v2335
    %v2352 = vtanh.pop %v2344
    %v2353 = vtanh.pop %v2345
    %v2354 = vtanh.pop %v2346
    %v2355 = vtanh.pop %v2347
    %v2356 = vtanh.pop %v2348
    %v2357 = vtanh.pop %v2349
    %v2358 = vtanh.pop %v2350
    %v2359 = vtanh.pop %v2351
    %2368 = vrot.lane.b32.xlu0 %v2352, 64
    %v2369 = vpop.permute.xlu0 %2368
    %2370 = vrot.lane.b32.xlu0 %v2353, 64
    %v2371 = vpop.permute.xlu0 %2370
    %2372 = vrot.lane.b32.xlu0 %v2354, 64
    %v2373 = vpop.permute.xlu0 %2372
    %2374 = vrot.lane.b32.xlu0 %v2355, 64
    %v2375 = vpop.permute.xlu0 %2374
    %2376 = vrot.lane.b32.xlu0 %v2356, 64
    %v2377 = vpop.permute.xlu0 %2376
    %2378 = vrot.lane.b32.xlu0 %v2357, 64
    %v2379 = vpop.permute.xlu0 %2378
    %2380 = vrot.lane.b32.xlu0 %v2358, 64
    %v2381 = vpop.permute.xlu0 %2380
    %2382 = vrot.lane.b32.xlu0 %v2359, 64
    %v2383 = vpop.permute.xlu0 %2382
    %v2392 = vmul.f32 %v2232, %v2369
    %v2393 = vmul.f32 %v2233, %v2371
    %v2394 = vmul.f32 %v2234, %v2373
    %v2395 = vmul.f32 %v2235, %v2375
    %v2396 = vmul.f32 %v2236, %v2377
    %v2397 = vmul.f32 %v2237, %v2379
    %v2398 = vmul.f32 %v2238, %v2381
    %v2399 = vmul.f32 %v2239, %v2383
    %v2408 = vrot.slane %v2392, 6
    %v2409 = vrot.slane %v2393, 5
    %v2410 = vsel %vm530, %v2409, %v2408
    %v2411 = vrot.slane %v2394, 4
    %v2412 = vsel %vm533, %v2411, %v2410
    %v2413 = vrot.slane %v2395, 3
    %v2414 = vsel %vm536, %v2413, %v2412
    %v2415 = vrot.slane %v2396, 2
    %v2416 = vsel %vm539, %v2415, %v2414
    %v2417 = vrot.slane %v2397, 1
    %v2418 = vsel %vm542, %v2417, %v2416
    %v2419 = vsel %vm545, %v2398, %v2418
    %v2420 = vrot.slane %v2399, 7
    %v2421 = vsel %vm548, %v2420, %v2419
    %2422 = vrot.lane.b32.xlu0 %v2421, 32
    %v2423 = vpop.permute.xlu0 %2422
    %v2424 = vsel %vm255, %v2423, 0
    %2426 = vmatprep.subr.mxu0 0.0
    %2427 = vmatpush1.msra.mxu0 %v50
    %2428 = vmatprep.subr.mxu0 0.0
    %2429 = vmatpush1.msra.mxu0 %v51
    %2430 = vmatprep.subr.mxu0 0.0
    %2431 = vmatpush1.msra.mxu0 %v52
    %2432 = vmatprep.subr.mxu0 0.0
    %2433 = vmatpush1.msra.mxu0 %v53
    %2434 = vmatprep.subr.mxu0 0.0
    %2435 = vmatpush1.msra.mxu0 0.0
    %2436 = vmatprep.subr.mxu0 0.0
    %2437 = vmatpush1.msra.mxu0 0.0
    %2438 = vmatprep.subr.mxu0 0.0
    %2439 = vmatpush1.msra.mxu0 0.0
    %2440 = vmatprep.subr.mxu0 0.0
    %2441 = vmatpush1.msra.mxu0 0.0
    %2442 = vmatprep.subr.mxu0 0.0
    %2443 = vmatpush1.msra.mxu0 0.0
    %2444 = vmatprep.subr.mxu0 0.0
    %2445 = vmatpush1.msra.mxu0 0.0
    %2446 = vmatprep.subr.mxu0 0.0
    %2447 = vmatpush1.msra.mxu0 0.0
    %2448 = vmatprep.subr.mxu0 0.0
    %2449 = vmatpush1.msra.mxu0 0.0
    %2450 = vmatprep.subr.mxu0 0.0
    %2451 = vmatpush1.msra.mxu0 0.0
    %2452 = vmatprep.subr.mxu0 0.0
    %2453 = vmatpush1.msra.mxu0 0.0
    %2454 = vmatprep.subr.mxu0 0.0
    %2455 = vmatpush1.msra.mxu0 0.0
    %2456 = vmatprep.subr.mxu0 0.0
    %2457 = vmatpush1.msra.mxu0 0.0
    %2458 = vmatprep.subr.mxu0 0.0
    %2459 = vmatpush1.msra.mxu0 0.0
    %2460 = vmatprep.subr.mxu0 0.0
    %2461 = vmatpush1.msra.mxu0 0.0
    %2462 = vmatprep.subr.mxu0 0.0
    %2463 = vmatpush1.msra.mxu0 0.0
    %2464 = vmatprep.subr.mxu0 0.0
    %2465 = vmatpush1.msra.mxu0 0.0
    %2466 = vmatprep.subr.mxu0 0.0
    %2467 = vmatpush1.msra.mxu0 0.0
    %2468 = vmatprep.subr.mxu0 0.0
    %2469 = vmatpush1.msra.mxu0 0.0
    %2470 = vmatprep.subr.mxu0 0.0
    %2471 = vmatpush1.msra.mxu0 0.0
    %2472 = vmatprep.subr.mxu0 0.0
    %2473 = vmatpush1.msra.mxu0 0.0
    %2474 = vmatprep.subr.mxu0 0.0
    %2475 = vmatpush1.msra.mxu0 0.0
    %2476 = vmatprep.subr.mxu0 0.0
    %2477 = vmatpush1.msra.mxu0 0.0
    %2478 = vmatprep.subr.mxu0 0.0
    %2479 = vmatpush1.msra.mxu0 0.0
    %2480 = vmatprep.subr.mxu0 0.0
    %2481 = vmatpush1.msra.mxu0 0.0
    %2482 = vmatprep.subr.mxu0 0.0
    %2483 = vmatpush1.msra.mxu0 0.0
    %2484 = vmatprep.subr.mxu0 0.0
    %2485 = vmatpush1.msra.mxu0 0.0
    %2486 = vmatprep.subr.mxu0 0.0
    %2487 = vmatpush1.msra.mxu0 0.0
    %2488 = vmatprep.subr.mxu0 0.0
    %2489 = vmatpush1.msra.mxu0 0.0
    %2490 = vmatprep.mubr.f32.mxu0 0.0
    %2491 = vmatmul.mubr.f32.gmra.mrb[0].mxu0 %v2424
    %v2492 = vpop.f32.mrb[0].mxu0
    %v2493 = vadd.f32 0.0, %v2492
    %v2494 = vpop.f32.mrb[0].mxu0
    %2495 = vdwg.mxu0
    %v2497 = vrot.slane %v2493, 1
    %v2498 = vrot.slane %v2493, 2
    %v2499 = vrot.slane %v2493, 3
    %v2500 = vrot.slane %v2493, 4
    %v2501 = vrot.slane %v2493, 5
    %v2502 = vrot.slane %v2493, 6
    %v2503 = vrot.slane %v2493, 7
    %v2512 = vadd.f32 %v177, %v2497
    %v2513 = vadd.f32 %v187, %v2498
    %v2514 = vadd.f32 %v197, %v2499
    %v2515 = vadd.f32 %v207, %v2500
    %v2516 = vadd.f32 %v217, %v2501
    %v2517 = vadd.f32 %v227, %v2502
    %v2518 = vadd.f32 %v237, %v2503
    %v2519 = vadd.f32 %v247, %v2493
    %v2520 = vmul.f32 %v2512, 0.5
    %v2521 = vmul.f32 %v2513, 0.5
    %v2522 = vmul.f32 %v2514, 0.5
    %v2523 = vmul.f32 %v2515, 0.5
    %v2524 = vmul.f32 %v2516, 0.5
    %v2525 = vmul.f32 %v2517, 0.5
    %v2526 = vmul.f32 %v2518, 0.5
    %v2527 = vmul.f32 %v2519, 0.5
    %v2528 = vtanh.pop %v2520
    %v2529 = vtanh.pop %v2521
    %v2530 = vtanh.pop %v2522
    %v2531 = vtanh.pop %v2523
    %v2532 = vtanh.pop %v2524
    %v2533 = vtanh.pop %v2525
    %v2534 = vtanh.pop %v2526
    %v2535 = vtanh.pop %v2527
    %v2536 = vadd.f32 %v2528, 1.0
    %v2537 = vadd.f32 %v2529, 1.0
    %v2538 = vadd.f32 %v2530, 1.0
    %v2539 = vadd.f32 %v2531, 1.0
    %v2540 = vadd.f32 %v2532, 1.0
    %v2541 = vadd.f32 %v2533, 1.0
    %v2542 = vadd.f32 %v2534, 1.0
    %v2543 = vadd.f32 %v2535, 1.0
    %v2544 = vmul.f32 %v2536, 0.5
    %v2545 = vmul.f32 %v2537, 0.5
    %v2546 = vmul.f32 %v2538, 0.5
    %v2547 = vmul.f32 %v2539, 0.5
    %v2548 = vmul.f32 %v2540, 0.5
    %v2549 = vmul.f32 %v2541, 0.5
    %v2550 = vmul.f32 %v2542, 0.5
    %v2551 = vmul.f32 %v2543, 0.5
    %v2560 = vrot.slane %v2344, 7
    %v2561 = vrot.slane %v2345, 7
    %v2562 = vrot.slane %v2346, 7
    %v2563 = vrot.slane %v2347, 7
    %v2564 = vrot.slane %v2348, 7
    %v2565 = vrot.slane %v2349, 7
    %v2566 = vrot.slane %v2350, 7
    %v2567 = vrot.slane %v2351, 7
    %v2576 = vmul.f32 %v2544, %v2560
    %v2577 = vmul.f32 %v2545, %v2561
    %v2578 = vmul.f32 %v2546, %v2562
    %v2579 = vmul.f32 %v2547, %v2563
    %v2580 = vmul.f32 %v2548, %v2564
    %v2581 = vmul.f32 %v2549, %v2565
    %v2582 = vmul.f32 %v2550, %v2566
    %v2583 = vmul.f32 %v2551, %v2567
    %2592 = vrot.lane.b32.xlu0 %v2528, 64
    %v2593 = vpop.permute.xlu0 %2592
    %2594 = vrot.lane.b32.xlu0 %v2529, 64
    %v2595 = vpop.permute.xlu0 %2594
    %2596 = vrot.lane.b32.xlu0 %v2530, 64
    %v2597 = vpop.permute.xlu0 %2596
    %2598 = vrot.lane.b32.xlu0 %v2531, 64
    %v2599 = vpop.permute.xlu0 %2598
    %2600 = vrot.lane.b32.xlu0 %v2532, 64
    %v2601 = vpop.permute.xlu0 %2600
    %2602 = vrot.lane.b32.xlu0 %v2533, 64
    %v2603 = vpop.permute.xlu0 %2602
    %2604 = vrot.lane.b32.xlu0 %v2534, 64
    %v2605 = vpop.permute.xlu0 %2604
    %2606 = vrot.lane.b32.xlu0 %v2535, 64
    %v2607 = vpop.permute.xlu0 %2606
    %v2616 = vmul.f32 %v2544, %v2593
    %v2617 = vmul.f32 %v2545, %v2595
    %v2618 = vmul.f32 %v2546, %v2597
    %v2619 = vmul.f32 %v2547, %v2599
    %v2620 = vmul.f32 %v2548, %v2601
    %v2621 = vmul.f32 %v2549, %v2603
    %v2622 = vmul.f32 %v2550, %v2605
    %v2623 = vmul.f32 %v2551, %v2607
    %2632 = vrot.lane.b32.xlu0 %v2616, 32
    %v2633 = vpop.permute.xlu0 %2632
    %2634 = vrot.lane.b32.xlu0 %v2617, 32
    %v2635 = vpop.permute.xlu0 %2634
    %2636 = vrot.lane.b32.xlu0 %v2618, 32
    %v2637 = vpop.permute.xlu0 %2636
    %2638 = vrot.lane.b32.xlu0 %v2619, 32
    %v2639 = vpop.permute.xlu0 %2638
    %2640 = vrot.lane.b32.xlu0 %v2620, 32
    %v2641 = vpop.permute.xlu0 %2640
    %2642 = vrot.lane.b32.xlu0 %v2621, 32
    %v2643 = vpop.permute.xlu0 %2642
    %2644 = vrot.lane.b32.xlu0 %v2622, 32
    %v2645 = vpop.permute.xlu0 %2644
    %2646 = vrot.lane.b32.xlu0 %v2623, 32
    %v2647 = vpop.permute.xlu0 %2646
    %v2656 = vadd.f32 %v2576, %v2633
    %v2657 = vadd.f32 %v2577, %v2635
    %v2658 = vadd.f32 %v2578, %v2637
    %v2659 = vadd.f32 %v2579, %v2639
    %v2660 = vadd.f32 %v2580, %v2641
    %v2661 = vadd.f32 %v2581, %v2643
    %v2662 = vadd.f32 %v2582, %v2645
    %v2663 = vadd.f32 %v2583, %v2647
    %v2664 = vtanh.pop %v2656
    %v2665 = vtanh.pop %v2657
    %v2666 = vtanh.pop %v2658
    %v2667 = vtanh.pop %v2659
    %v2668 = vtanh.pop %v2660
    %v2669 = vtanh.pop %v2661
    %v2670 = vtanh.pop %v2662
    %v2671 = vtanh.pop %v2663
    %2680 = vrot.lane.b32.xlu0 %v2664, 64
    %v2681 = vpop.permute.xlu0 %2680
    %2682 = vrot.lane.b32.xlu0 %v2665, 64
    %v2683 = vpop.permute.xlu0 %2682
    %2684 = vrot.lane.b32.xlu0 %v2666, 64
    %v2685 = vpop.permute.xlu0 %2684
    %2686 = vrot.lane.b32.xlu0 %v2667, 64
    %v2687 = vpop.permute.xlu0 %2686
    %2688 = vrot.lane.b32.xlu0 %v2668, 64
    %v2689 = vpop.permute.xlu0 %2688
    %2690 = vrot.lane.b32.xlu0 %v2669, 64
    %v2691 = vpop.permute.xlu0 %2690
    %2692 = vrot.lane.b32.xlu0 %v2670, 64
    %v2693 = vpop.permute.xlu0 %2692
    %2694 = vrot.lane.b32.xlu0 %v2671, 64
    %v2695 = vpop.permute.xlu0 %2694
    %v2704 = vmul.f32 %v2544, %v2681
    %v2705 = vmul.f32 %v2545, %v2683
    %v2706 = vmul.f32 %v2546, %v2685
    %v2707 = vmul.f32 %v2547, %v2687
    %v2708 = vmul.f32 %v2548, %v2689
    %v2709 = vmul.f32 %v2549, %v2691
    %v2710 = vmul.f32 %v2550, %v2693
    %v2711 = vmul.f32 %v2551, %v2695
    %v2720 = vrot.slane %v2704, 7
    %v2721 = vrot.slane %v2705, 6
    %v2722 = vsel %vm530, %v2721, %v2720
    %v2723 = vrot.slane %v2706, 5
    %v2724 = vsel %vm533, %v2723, %v2722
    %v2725 = vrot.slane %v2707, 4
    %v2726 = vsel %vm536, %v2725, %v2724
    %v2727 = vrot.slane %v2708, 3
    %v2728 = vsel %vm539, %v2727, %v2726
    %v2729 = vrot.slane %v2709, 2
    %v2730 = vsel %vm542, %v2729, %v2728
    %v2731 = vrot.slane %v2710, 1
    %v2732 = vsel %vm545, %v2731, %v2730
    %v2733 = vsel %vm548, %v2711, %v2732
    %2734 = vrot.lane.b32.xlu0 %v2733, 32
    %v2735 = vpop.permute.xlu0 %2734
    %v2736 = vsel %vm255, %v2735, 0
    %2738 = vmatprep.subr.mxu0 0.0
    %2739 = vmatpush1.msra.mxu0 %v50
    %2740 = vmatprep.subr.mxu0 0.0
    %2741 = vmatpush1.msra.mxu0 %v51
    %2742 = vmatprep.subr.mxu0 0.0
    %2743 = vmatpush1.msra.mxu0 %v52
    %2744 = vmatprep.subr.mxu0 0.0
    %2745 = vmatpush1.msra.mxu0 %v53
    %2746 = vmatprep.subr.mxu0 0.0
    %2747 = vmatpush1.msra.mxu0 0.0
    %2748 = vmatprep.subr.mxu0 0.0
    %2749 = vmatpush1.msra.mxu0 0.0
    %2750 = vmatprep.subr.mxu0 0.0
    %2751 = vmatpush1.msra.mxu0 0.0
    %2752 = vmatprep.subr.mxu0 0.0
    %2753 = vmatpush1.msra.mxu0 0.0
    %2754 = vmatprep.subr.mxu0 0.0
    %2755 = vmatpush1.msra.mxu0 0.0
    %2756 = vmatprep.subr.mxu0 0.0
    %2757 = vmatpush1.msra.mxu0 0.0
    %2758 = vmatprep.subr.mxu0 0.0
    %2759 = vmatpush1.msra.mxu0 0.0
    %2760 = vmatprep.subr.mxu0 0.0
    %2761 = vmatpush1.msra.mxu0 0.0
    %2762 = vmatprep.subr.mxu0 0.0
    %2763 = vmatpush1.msra.mxu0 0.0
    %2764 = vmatprep.subr.mxu0 0.0
    %2765 = vmatpush1.msra.mxu0 0.0
    %2766 = vmatprep.subr.mxu0 0.0
    %2767 = vmatpush1.msra.mxu0 0.0
    %2768 = vmatprep.subr.mxu0 0.0
    %2769 = vmatpush1.msra.mxu0 0.0
    %2770 = vmatprep.subr.mxu0 0.0
    %2771 = vmatpush1.msra.mxu0 0.0
    %2772 = vmatprep.subr.mxu0 0.0
    %2773 = vmatpush1.msra.mxu0 0.0
    %2774 = vmatprep.subr.mxu0 0.0
    %2775 = vmatpush1.msra.mxu0 0.0
    %2776 = vmatprep.subr.mxu0 0.0
    %2777 = vmatpush1.msra.mxu0 0.0
    %2778 = vmatprep.subr.mxu0 0.0
    %2779 = vmatpush1.msra.mxu0 0.0
    %2780 = vmatprep.subr.mxu0 0.0
    %2781 = vmatpush1.msra.mxu0 0.0
    %2782 = vmatprep.subr.mxu0 0.0
    %2783 = vmatpush1.msra.mxu0 0.0
    %2784 = vmatprep.subr.mxu0 0.0
    %2785 = vmatpush1.msra.mxu0 0.0
    %2786 = vmatprep.subr.mxu0 0.0
    %2787 = vmatpush1.msra.mxu0 0.0
    %2788 = vmatprep.subr.mxu0 0.0
    %2789 = vmatpush1.msra.mxu0 0.0
    %2790 = vmatprep.subr.mxu0 0.0
    %2791 = vmatpush1.msra.mxu0 0.0
    %2792 = vmatprep.subr.mxu0 0.0
    %2793 = vmatpush1.msra.mxu0 0.0
    %2794 = vmatprep.subr.mxu0 0.0
    %2795 = vmatpush1.msra.mxu0 0.0
    %2796 = vmatprep.subr.mxu0 0.0
    %2797 = vmatpush1.msra.mxu0 0.0
    %2798 = vmatprep.subr.mxu0 0.0
    %2799 = vmatpush1.msra.mxu0 0.0
    %2800 = vmatprep.subr.mxu0 0.0
    %2801 = vmatpush1.msra.mxu0 0.0
    %2802 = vmatprep.mubr.f32.mxu0 0.0
    %2803 = vmatmul.mubr.f32.gmra.mrb[0].mxu0 %v2736
    %v2804 = vpop.f32.mrb[0].mxu0
    %v2805 = vadd.f32 0.0, %v2804
    %v2806 = vpop.f32.mrb[0].mxu0
    %2807 = vdwg.mxu0
    %v2809 = vrot.slane %v2805, 1
    %v2810 = vrot.slane %v2805, 2
    %v2811 = vrot.slane %v2805, 3
    %v2812 = vrot.slane %v2805, 4
    %v2813 = vrot.slane %v2805, 5
    %v2814 = vrot.slane %v2805, 6
    %v2815 = vrot.slane %v2805, 7
    %v2824 = vadd.f32 %v182, %v2805
    %v2825 = vadd.f32 %v192, %v2809
    %v2826 = vadd.f32 %v202, %v2810
    %v2827 = vadd.f32 %v212, %v2811
    %v2828 = vadd.f32 %v222, %v2812
    %v2829 = vadd.f32 %v232, %v2813
    %v2830 = vadd.f32 %v242, %v2814
    %v2831 = vadd.f32 %v252, %v2815
    %v2832 = vmul.f32 %v2824, 0.5
    %v2833 = vmul.f32 %v2825, 0.5
    %v2834 = vmul.f32 %v2826, 0.5
    %v2835 = vmul.f32 %v2827, 0.5
    %v2836 = vmul.f32 %v2828, 0.5
    %v2837 = vmul.f32 %v2829, 0.5
    %v2838 = vmul.f32 %v2830, 0.5
    %v2839 = vmul.f32 %v2831, 0.5
    %v2840 = vtanh.pop %v2832
    %v2841 = vtanh.pop %v2833
    %v2842 = vtanh.pop %v2834
    %v2843 = vtanh.pop %v2835
    %v2844 = vtanh.pop %v2836
    %v2845 = vtanh.pop %v2837
    %v2846 = vtanh.pop %v2838
    %v2847 = vtanh.pop %v2839
    %v2848 = vadd.f32 %v2840, 1.0
    %v2849 = vadd.f32 %v2841, 1.0
    %v2850 = vadd.f32 %v2842, 1.0
    %v2851 = vadd.f32 %v2843, 1.0
    %v2852 = vadd.f32 %v2844, 1.0
    %v2853 = vadd.f32 %v2845, 1.0
    %v2854 = vadd.f32 %v2846, 1.0
    %v2855 = vadd.f32 %v2847, 1.0
    %v2856 = vmul.f32 %v2848, 0.5
    %v2857 = vmul.f32 %v2849, 0.5
    %v2858 = vmul.f32 %v2850, 0.5
    %v2859 = vmul.f32 %v2851, 0.5
    %v2860 = vmul.f32 %v2852, 0.5
    %v2861 = vmul.f32 %v2853, 0.5
    %v2862 = vmul.f32 %v2854, 0.5
    %v2863 = vmul.f32 %v2855, 0.5
    %v2872 = vrot.slane %v2656, 7
    %v2873 = vrot.slane %v2657, 7
    %v2874 = vrot.slane %v2658, 7
    %v2875 = vrot.slane %v2659, 7
    %v2876 = vrot.slane %v2660, 7
    %v2877 = vrot.slane %v2661, 7
    %v2878 = vrot.slane %v2662, 7
    %v2879 = vrot.slane %v2663, 7
    %v2888 = vmul.f32 %v2856, %v2872
    %v2889 = vmul.f32 %v2857, %v2873
    %v2890 = vmul.f32 %v2858, %v2874
    %v2891 = vmul.f32 %v2859, %v2875
    %v2892 = vmul.f32 %v2860, %v2876
    %v2893 = vmul.f32 %v2861, %v2877
    %v2894 = vmul.f32 %v2862, %v2878
    %v2895 = vmul.f32 %v2863, %v2879
    %2904 = vrot.lane.b32.xlu0 %v2840, 64
    %v2905 = vpop.permute.xlu0 %2904
    %2906 = vrot.lane.b32.xlu0 %v2841, 64
    %v2907 = vpop.permute.xlu0 %2906
    %2908 = vrot.lane.b32.xlu0 %v2842, 64
    %v2909 = vpop.permute.xlu0 %2908
    %2910 = vrot.lane.b32.xlu0 %v2843, 64
    %v2911 = vpop.permute.xlu0 %2910
    %2912 = vrot.lane.b32.xlu0 %v2844, 64
    %v2913 = vpop.permute.xlu0 %2912
    %2914 = vrot.lane.b32.xlu0 %v2845, 64
    %v2915 = vpop.permute.xlu0 %2914
    %2916 = vrot.lane.b32.xlu0 %v2846, 64
    %v2917 = vpop.permute.xlu0 %2916
    %2918 = vrot.lane.b32.xlu0 %v2847, 64
    %v2919 = vpop.permute.xlu0 %2918
    %v2928 = vmul.f32 %v2856, %v2905
    %v2929 = vmul.f32 %v2857, %v2907
    %v2930 = vmul.f32 %v2858, %v2909
    %v2931 = vmul.f32 %v2859, %v2911
    %v2932 = vmul.f32 %v2860, %v2913
    %v2933 = vmul.f32 %v2861, %v2915
    %v2934 = vmul.f32 %v2862, %v2917
    %v2935 = vmul.f32 %v2863, %v2919
    %2944 = vrot.lane.b32.xlu0 %v2928, 32
    %v2945 = vpop.permute.xlu0 %2944
    %2946 = vrot.lane.b32.xlu0 %v2929, 32
    %v2947 = vpop.permute.xlu0 %2946
    %2948 = vrot.lane.b32.xlu0 %v2930, 32
    %v2949 = vpop.permute.xlu0 %2948
    %2950 = vrot.lane.b32.xlu0 %v2931, 32
    %v2951 = vpop.permute.xlu0 %2950
    %2952 = vrot.lane.b32.xlu0 %v2932, 32
    %v2953 = vpop.permute.xlu0 %2952
    %2954 = vrot.lane.b32.xlu0 %v2933, 32
    %v2955 = vpop.permute.xlu0 %2954
    %2956 = vrot.lane.b32.xlu0 %v2934, 32
    %v2957 = vpop.permute.xlu0 %2956
    %2958 = vrot.lane.b32.xlu0 %v2935, 32
    %v2959 = vpop.permute.xlu0 %2958
    %v2968 = vadd.f32 %v2888, %v2945
    %v2969 = vadd.f32 %v2889, %v2947
    %v2970 = vadd.f32 %v2890, %v2949
    %v2971 = vadd.f32 %v2891, %v2951
    %v2972 = vadd.f32 %v2892, %v2953
    %v2973 = vadd.f32 %v2893, %v2955
    %v2974 = vadd.f32 %v2894, %v2957
    %v2975 = vadd.f32 %v2895, %v2959
    %v2976 = vtanh.pop %v2968
    %v2977 = vtanh.pop %v2969
    %v2978 = vtanh.pop %v2970
    %v2979 = vtanh.pop %v2971
    %v2980 = vtanh.pop %v2972
    %v2981 = vtanh.pop %v2973
    %v2982 = vtanh.pop %v2974
    %v2983 = vtanh.pop %v2975
    %2992 = vrot.lane.b32.xlu0 %v2976, 64
    %v2993 = vpop.permute.xlu0 %2992
    %2994 = vrot.lane.b32.xlu0 %v2977, 64
    %v2995 = vpop.permute.xlu0 %2994
    %2996 = vrot.lane.b32.xlu0 %v2978, 64
    %v2997 = vpop.permute.xlu0 %2996
    %2998 = vrot.lane.b32.xlu0 %v2979, 64
    %v2999 = vpop.permute.xlu0 %2998
    %3000 = vrot.lane.b32.xlu0 %v2980, 64
    %v3001 = vpop.permute.xlu0 %3000
    %3002 = vrot.lane.b32.xlu0 %v2981, 64
    %v3003 = vpop.permute.xlu0 %3002
    %3004 = vrot.lane.b32.xlu0 %v2982, 64
    %v3005 = vpop.permute.xlu0 %3004
    %3006 = vrot.lane.b32.xlu0 %v2983, 64
    %v3007 = vpop.permute.xlu0 %3006
    %v3016 = vmul.f32 %v2856, %v2993
    %v3017 = vmul.f32 %v2857, %v2995
    %v3018 = vmul.f32 %v2858, %v2997
    %v3019 = vmul.f32 %v2859, %v2999
    %v3020 = vmul.f32 %v2860, %v3001
    %v3021 = vmul.f32 %v2861, %v3003
    %v3022 = vmul.f32 %v2862, %v3005
    %v3023 = vmul.f32 %v2863, %v3007
    %v3032 = vrot.slane %v3017, 7
    %v3033 = vsel %vm530, %v3032, %v3016
    %v3034 = vrot.slane %v3018, 6
    %v3035 = vsel %vm533, %v3034, %v3033
    %v3036 = vrot.slane %v3019, 5
    %v3037 = vsel %vm536, %v3036, %v3035
    %v3038 = vrot.slane %v3020, 4
    %v3039 = vsel %vm539, %v3038, %v3037
    %v3040 = vrot.slane %v3021, 3
    %v3041 = vsel %vm542, %v3040, %v3039
    %v3042 = vrot.slane %v3022, 2
    %v3043 = vsel %vm545, %v3042, %v3041
    %v3044 = vrot.slane %v3023, 1
    %v3045 = vsel %vm548, %v3044, %v3043
    %3046 = vrot.lane.b32.xlu0 %v3045, 32
    %v3047 = vpop.permute.xlu0 %3046
    %v3048 = vsel %vm255, %v3047, 0
    %3050 = vmatprep.subr.mxu0 0.0
    %3051 = vmatpush1.msra.mxu0 %v50
    %3052 = vmatprep.subr.mxu0 0.0
    %3053 = vmatpush1.msra.mxu0 %v51
    %3054 = vmatprep.subr.mxu0 0.0
    %3055 = vmatpush1.msra.mxu0 %v52
    %3056 = vmatprep.subr.mxu0 0.0
    %3057 = vmatpush1.msra.mxu0 %v53
    %3058 = vmatprep.subr.mxu0 0.0
    %3059 = vmatpush1.msra.mxu0 0.0
    %3060 = vmatprep.subr.mxu0 0.0
    %3061 = vmatpush1.msra.mxu0 0.0
    %3062 = vmatprep.subr.mxu0 0.0
    %3063 = vmatpush1.msra.mxu0 0.0
    %3064 = vmatprep.subr.mxu0 0.0
    %3065 = vmatpush1.msra.mxu0 0.0
    %3066 = vmatprep.subr.mxu0 0.0
    %3067 = vmatpush1.msra.mxu0 0.0
    %3068 = vmatprep.subr.mxu0 0.0
    %3069 = vmatpush1.msra.mxu0 0.0
    %3070 = vmatprep.subr.mxu0 0.0
    %3071 = vmatpush1.msra.mxu0 0.0
    %3072 = vmatprep.subr.mxu0 0.0
    %3073 = vmatpush1.msra.mxu0 0.0
    %3074 = vmatprep.subr.mxu0 0.0
    %3075 = vmatpush1.msra.mxu0 0.0
    %3076 = vmatprep.subr.mxu0 0.0
    %3077 = vmatpush1.msra.mxu0 0.0
    %3078 = vmatprep.subr.mxu0 0.0
    %3079 = vmatpush1.msra.mxu0 0.0
    %3080 = vmatprep.subr.mxu0 0.0
    %3081 = vmatpush1.msra.mxu0 0.0
    %3082 = vmatprep.subr.mxu0 0.0
    %3083 = vmatpush1.msra.mxu0 0.0
    %3084 = vmatprep.subr.mxu0 0.0
    %3085 = vmatpush1.msra.mxu0 0.0
    %3086 = vmatprep.subr.mxu0 0.0
    %3087 = vmatpush1.msra.mxu0 0.0
    %3088 = vmatprep.subr.mxu0 0.0
    %3089 = vmatpush1.msra.mxu0 0.0
    %3090 = vmatprep.subr.mxu0 0.0
    %3091 = vmatpush1.msra.mxu0 0.0
    %3092 = vmatprep.subr.mxu0 0.0
    %3093 = vmatpush1.msra.mxu0 0.0
    %3094 = vmatprep.subr.mxu0 0.0
    %3095 = vmatpush1.msra.mxu0 0.0
    %3096 = vmatprep.subr.mxu0 0.0
    %3097 = vmatpush1.msra.mxu0 0.0
    %3098 = vmatprep.subr.mxu0 0.0
    %3099 = vmatpush1.msra.mxu0 0.0
    %3100 = vmatprep.subr.mxu0 0.0
    %3101 = vmatpush1.msra.mxu0 0.0
    %3102 = vmatprep.subr.mxu0 0.0
    %3103 = vmatpush1.msra.mxu0 0.0
    %3104 = vmatprep.subr.mxu0 0.0
    %3105 = vmatpush1.msra.mxu0 0.0
    %3106 = vmatprep.subr.mxu0 0.0
    %3107 = vmatpush1.msra.mxu0 0.0
    %3108 = vmatprep.subr.mxu0 0.0
    %3109 = vmatpush1.msra.mxu0 0.0
    %3110 = vmatprep.subr.mxu0 0.0
    %3111 = vmatpush1.msra.mxu0 0.0
    %3112 = vmatprep.subr.mxu0 0.0
    %3113 = vmatpush1.msra.mxu0 0.0
    %3114 = vmatprep.mubr.f32.mxu0 0.0
    %3115 = vmatmul.mubr.f32.gmra.mrb[0].mxu0 %v3048
    %v3116 = vpop.f32.mrb[0].mxu0
    %v3117 = vadd.f32 0.0, %v3116
    %v3118 = vpop.f32.mrb[0].mxu0
    %3119 = vdwg.mxu0
    %v3121 = vrot.slane %v3117, 7
    %v3122 = vrot.slane %v3117, 1
    %v3123 = vrot.slane %v3117, 2
    %v3124 = vrot.slane %v3117, 3
    %v3125 = vrot.slane %v3117, 4
    %v3126 = vrot.slane %v3117, 5
    %v3127 = vrot.slane %v3117, 6
    %v3136 = vadd.f32 %v182, %v3121
    %v3137 = vadd.f32 %v192, %v3117
    %v3138 = vadd.f32 %v202, %v3122
    %v3139 = vadd.f32 %v212, %v3123
    %v3140 = vadd.f32 %v222, %v3124
    %v3141 = vadd.f32 %v232, %v3125
    %v3142 = vadd.f32 %v242, %v3126
    %v3143 = vadd.f32 %v252, %v3127
    %v3144 = vmul.f32 %v3136, 0.5
    %v3145 = vmul.f32 %v3137, 0.5
    %v3146 = vmul.f32 %v3138, 0.5
    %v3147 = vmul.f32 %v3139, 0.5
    %v3148 = vmul.f32 %v3140, 0.5
    %v3149 = vmul.f32 %v3141, 0.5
    %v3150 = vmul.f32 %v3142, 0.5
    %v3151 = vmul.f32 %v3143, 0.5
    %v3152 = vtanh.pop %v3144
    %v3153 = vtanh.pop %v3145
    %v3154 = vtanh.pop %v3146
    %v3155 = vtanh.pop %v3147
    %v3156 = vtanh.pop %v3148
    %v3157 = vtanh.pop %v3149
    %v3158 = vtanh.pop %v3150
    %v3159 = vtanh.pop %v3151
    %v3160 = vadd.f32 %v3152, 1.0
    %v3161 = vadd.f32 %v3153, 1.0
    %v3162 = vadd.f32 %v3154, 1.0
    %v3163 = vadd.f32 %v3155, 1.0
    %v3164 = vadd.f32 %v3156, 1.0
    %v3165 = vadd.f32 %v3157, 1.0
    %v3166 = vadd.f32 %v3158, 1.0
    %v3167 = vadd.f32 %v3159, 1.0
    %v3168 = vmul.f32 %v3160, 0.5
    %v3169 = vmul.f32 %v3161, 0.5
    %v3170 = vmul.f32 %v3162, 0.5
    %v3171 = vmul.f32 %v3163, 0.5
    %v3172 = vmul.f32 %v3164, 0.5
    %v3173 = vmul.f32 %v3165, 0.5
    %v3174 = vmul.f32 %v3166, 0.5
    %v3175 = vmul.f32 %v3167, 0.5
    %v3184 = vrot.slane %v2968, 7
    %v3185 = vrot.slane %v2969, 7
    %v3186 = vrot.slane %v2970, 7
    %v3187 = vrot.slane %v2971, 7
    %v3188 = vrot.slane %v2972, 7
    %v3189 = vrot.slane %v2973, 7
    %v3190 = vrot.slane %v2974, 7
    %v3191 = vrot.slane %v2975, 7
    %v3200 = vmul.f32 %v3168, %v3184
    %v3201 = vmul.f32 %v3169, %v3185
    %v3202 = vmul.f32 %v3170, %v3186
    %v3203 = vmul.f32 %v3171, %v3187
    %v3204 = vmul.f32 %v3172, %v3188
    %v3205 = vmul.f32 %v3173, %v3189
    %v3206 = vmul.f32 %v3174, %v3190
    %v3207 = vmul.f32 %v3175, %v3191
    %3216 = vrot.lane.b32.xlu0 %v3152, 64
    %v3217 = vpop.permute.xlu0 %3216
    %3218 = vrot.lane.b32.xlu0 %v3153, 64
    %v3219 = vpop.permute.xlu0 %3218
    %3220 = vrot.lane.b32.xlu0 %v3154, 64
    %v3221 = vpop.permute.xlu0 %3220
    %3222 = vrot.lane.b32.xlu0 %v3155, 64
    %v3223 = vpop.permute.xlu0 %3222
    %3224 = vrot.lane.b32.xlu0 %v3156, 64
    %v3225 = vpop.permute.xlu0 %3224
    %3226 = vrot.lane.b32.xlu0 %v3157, 64
    %v3227 = vpop.permute.xlu0 %3226
    %3228 = vrot.lane.b32.xlu0 %v3158, 64
    %v3229 = vpop.permute.xlu0 %3228
    %3230 = vrot.lane.b32.xlu0 %v3159, 64
    %v3231 = vpop.permute.xlu0 %3230
    %v3240 = vmul.f32 %v3168, %v3217
    %v3241 = vmul.f32 %v3169, %v3219
    %v3242 = vmul.f32 %v3170, %v3221
    %v3243 = vmul.f32 %v3171, %v3223
    %v3244 = vmul.f32 %v3172, %v3225
    %v3245 = vmul.f32 %v3173, %v3227
    %v3246 = vmul.f32 %v3174, %v3229
    %v3247 = vmul.f32 %v3175, %v3231
    %3256 = vrot.lane.b32.xlu0 %v3240, 32
    %v3257 = vpop.permute.xlu0 %3256
    %3258 = vrot.lane.b32.xlu0 %v3241, 32
    %v3259 = vpop.permute.xlu0 %3258
    %3260 = vrot.lane.b32.xlu0 %v3242, 32
    %v3261 = vpop.permute.xlu0 %3260
    %3262 = vrot.lane.b32.xlu0 %v3243, 32
    %v3263 = vpop.permute.xlu0 %3262
    %3264 = vrot.lane.b32.xlu0 %v3244, 32
    %v3265 = vpop.permute.xlu0 %3264
    %3266 = vrot.lane.b32.xlu0 %v3245, 32
    %v3267 = vpop.permute.xlu0 %3266
    %3268 = vrot.lane.b32.xlu0 %v3246, 32
    %v3269 = vpop.permute.xlu0 %3268
    %3270 = vrot.lane.b32.xlu0 %v3247, 32
    %v3271 = vpop.permute.xlu0 %3270
    %v3280 = vadd.f32 %v3200, %v3257
    %v3281 = vadd.f32 %v3201, %v3259
    %v3282 = vadd.f32 %v3202, %v3261
    %v3283 = vadd.f32 %v3203, %v3263
    %v3284 = vadd.f32 %v3204, %v3265
    %v3285 = vadd.f32 %v3205, %v3267
    %v3286 = vadd.f32 %v3206, %v3269
    %v3287 = vadd.f32 %v3207, %v3271
    %v3288 = vtanh.pop %v3280
    %v3289 = vtanh.pop %v3281
    %v3290 = vtanh.pop %v3282
    %v3291 = vtanh.pop %v3283
    %v3292 = vtanh.pop %v3284
    %v3293 = vtanh.pop %v3285
    %v3294 = vtanh.pop %v3286
    %v3295 = vtanh.pop %v3287
    %3304 = vrot.lane.b32.xlu0 %v3288, 64
    %v3305 = vpop.permute.xlu0 %3304
    %3306 = vrot.lane.b32.xlu0 %v3289, 64
    %v3307 = vpop.permute.xlu0 %3306
    %3308 = vrot.lane.b32.xlu0 %v3290, 64
    %v3309 = vpop.permute.xlu0 %3308
    %3310 = vrot.lane.b32.xlu0 %v3291, 64
    %v3311 = vpop.permute.xlu0 %3310
    %3312 = vrot.lane.b32.xlu0 %v3292, 64
    %v3313 = vpop.permute.xlu0 %3312
    %3314 = vrot.lane.b32.xlu0 %v3293, 64
    %v3315 = vpop.permute.xlu0 %3314
    %3316 = vrot.lane.b32.xlu0 %v3294, 64
    %v3317 = vpop.permute.xlu0 %3316
    %3318 = vrot.lane.b32.xlu0 %v3295, 64
    %v3319 = vpop.permute.xlu0 %3318
    %v3328 = vmul.f32 %v3168, %v3305
    %v3329 = vmul.f32 %v3169, %v3307
    %v3330 = vmul.f32 %v3170, %v3309
    %v3331 = vmul.f32 %v3171, %v3311
    %v3332 = vmul.f32 %v3172, %v3313
    %v3333 = vmul.f32 %v3173, %v3315
    %v3334 = vmul.f32 %v3174, %v3317
    %v3335 = vmul.f32 %v3175, %v3319
    %v3344 = vrot.slane %v3328, 1
    %v3345 = vsel %vm530, %v3329, %v3344
    %v3346 = vrot.slane %v3330, 7
    %v3347 = vsel %vm533, %v3346, %v3345
    %v3348 = vrot.slane %v3331, 6
    %v3349 = vsel %vm536, %v3348, %v3347
    %v3350 = vrot.slane %v3332, 5
    %v3351 = vsel %vm539, %v3350, %v3349
    %v3352 = vrot.slane %v3333, 4
    %v3353 = vsel %vm542, %v3352, %v3351
    %v3354 = vrot.slane %v3334, 3
    %v3355 = vsel %vm545, %v3354, %v3353
    %v3356 = vrot.slane %v3335, 2
    %v3357 = vsel %vm548, %v3356, %v3355
    %3358 = vrot.lane.b32.xlu0 %v3357, 32
    %v3359 = vpop.permute.xlu0 %3358
    %v3360 = vsel %vm255, %v3359, 0
    %3362 = vmatprep.subr.mxu0 0.0
    %3363 = vmatpush1.msra.mxu0 %v50
    %3364 = vmatprep.subr.mxu0 0.0
    %3365 = vmatpush1.msra.mxu0 %v51
    %3366 = vmatprep.subr.mxu0 0.0
    %3367 = vmatpush1.msra.mxu0 %v52
    %3368 = vmatprep.subr.mxu0 0.0
    %3369 = vmatpush1.msra.mxu0 %v53
    %3370 = vmatprep.subr.mxu0 0.0
    %3371 = vmatpush1.msra.mxu0 0.0
    %3372 = vmatprep.subr.mxu0 0.0
    %3373 = vmatpush1.msra.mxu0 0.0
    %3374 = vmatprep.subr.mxu0 0.0
    %3375 = vmatpush1.msra.mxu0 0.0
    %3376 = vmatprep.subr.mxu0 0.0
    %3377 = vmatpush1.msra.mxu0 0.0
    %3378 = vmatprep.subr.mxu0 0.0
    %3379 = vmatpush1.msra.mxu0 0.0
    %3380 = vmatprep.subr.mxu0 0.0
    %3381 = vmatpush1.msra.mxu0 0.0
    %3382 = vmatprep.subr.mxu0 0.0
    %3383 = vmatpush1.msra.mxu0 0.0
    %3384 = vmatprep.subr.mxu0 0.0
    %3385 = vmatpush1.msra.mxu0 0.0
    %3386 = vmatprep.subr.mxu0 0.0
    %3387 = vmatpush1.msra.mxu0 0.0
    %3388 = vmatprep.subr.mxu0 0.0
    %3389 = vmatpush1.msra.mxu0 0.0
    %3390 = vmatprep.subr.mxu0 0.0
    %3391 = vmatpush1.msra.mxu0 0.0
    %3392 = vmatprep.subr.mxu0 0.0
    %3393 = vmatpush1.msra.mxu0 0.0
    %3394 = vmatprep.subr.mxu0 0.0
    %3395 = vmatpush1.msra.mxu0 0.0
    %3396 = vmatprep.subr.mxu0 0.0
    %3397 = vmatpush1.msra.mxu0 0.0
    %3398 = vmatprep.subr.mxu0 0.0
    %3399 = vmatpush1.msra.mxu0 0.0
    %3400 = vmatprep.subr.mxu0 0.0
    %3401 = vmatpush1.msra.mxu0 0.0
    %3402 = vmatprep.subr.mxu0 0.0
    %3403 = vmatpush1.msra.mxu0 0.0
    %3404 = vmatprep.subr.mxu0 0.0
    %3405 = vmatpush1.msra.mxu0 0.0
    %3406 = vmatprep.subr.mxu0 0.0
    %3407 = vmatpush1.msra.mxu0 0.0
    %3408 = vmatprep.subr.mxu0 0.0
    %3409 = vmatpush1.msra.mxu0 0.0
    %3410 = vmatprep.subr.mxu0 0.0
    %3411 = vmatpush1.msra.mxu0 0.0
    %3412 = vmatprep.subr.mxu0 0.0
    %3413 = vmatpush1.msra.mxu0 0.0
    %3414 = vmatprep.subr.mxu0 0.0
    %3415 = vmatpush1.msra.mxu0 0.0
    %3416 = vmatprep.subr.mxu0 0.0
    %3417 = vmatpush1.msra.mxu0 0.0
    %3418 = vmatprep.subr.mxu0 0.0
    %3419 = vmatpush1.msra.mxu0 0.0
    %3420 = vmatprep.subr.mxu0 0.0
    %3421 = vmatpush1.msra.mxu0 0.0
    %3422 = vmatprep.subr.mxu0 0.0
    %3423 = vmatpush1.msra.mxu0 0.0
    %3424 = vmatprep.subr.mxu0 0.0
    %3425 = vmatpush1.msra.mxu0 0.0
    %3426 = vmatprep.mubr.f32.mxu0 0.0
    %3427 = vmatmul.mubr.f32.gmra.mrb[0].mxu0 %v3360
    %v3428 = vpop.f32.mrb[0].mxu0
    %v3429 = vadd.f32 0.0, %v3428
    %v3430 = vpop.f32.mrb[0].mxu0
    %3431 = vdwg.mxu0
    %v3433 = vrot.slane %v3429, 6
    %v3434 = vrot.slane %v3429, 7
    %v3435 = vrot.slane %v3429, 1
    %v3436 = vrot.slane %v3429, 2
    %v3437 = vrot.slane %v3429, 3
    %v3438 = vrot.slane %v3429, 4
    %v3439 = vrot.slane %v3429, 5
    %v3448 = vadd.f32 %v182, %v3433
    %v3449 = vadd.f32 %v192, %v3434
    %v3450 = vadd.f32 %v202, %v3429
    %v3451 = vadd.f32 %v212, %v3435
    %v3452 = vadd.f32 %v222, %v3436
    %v3453 = vadd.f32 %v232, %v3437
    %v3454 = vadd.f32 %v242, %v3438
    %v3455 = vadd.f32 %v252, %v3439
    %v3456 = vmul.f32 %v3448, 0.5
    %v3457 = vmul.f32 %v3449, 0.5
    %v3458 = vmul.f32 %v3450, 0.5
    %v3459 = vmul.f32 %v3451, 0.5
    %v3460 = vmul.f32 %v3452, 0.5
    %v3461 = vmul.f32 %v3453, 0.5
    %v3462 = vmul.f32 %v3454, 0.5
    %v3463 = vmul.f32 %v3455, 0.5
    %v3464 = vtanh.pop %v3456
    %v3465 = vtanh.pop %v3457
    %v3466 = vtanh.pop %v3458
    %v3467 = vtanh.pop %v3459
    %v3468 = vtanh.pop %v3460
    %v3469 = vtanh.pop %v3461
    %v3470 = vtanh.pop %v3462
    %v3471 = vtanh.pop %v3463
    %v3472 = vadd.f32 %v3464, 1.0
    %v3473 = vadd.f32 %v3465, 1.0
    %v3474 = vadd.f32 %v3466, 1.0
    %v3475 = vadd.f32 %v3467, 1.0
    %v3476 = vadd.f32 %v3468, 1.0
    %v3477 = vadd.f32 %v3469, 1.0
    %v3478 = vadd.f32 %v3470, 1.0
    %v3479 = vadd.f32 %v3471, 1.0
    %v3480 = vmul.f32 %v3472, 0.5
    %v3481 = vmul.f32 %v3473, 0.5
    %v3482 = vmul.f32 %v3474, 0.5
    %v3483 = vmul.f32 %v3475, 0.5
    %v3484 = vmul.f32 %v3476, 0.5
    %v3485 = vmul.f32 %v3477, 0.5
    %v3486 = vmul.f32 %v3478, 0.5
    %v3487 = vmul.f32 %v3479, 0.5
    %v3496 = vrot.slane %v3280, 7
    %v3497 = vrot.slane %v3281, 7
    %v3498 = vrot.slane %v3282, 7
    %v3499 = vrot.slane %v3283, 7
    %v3500 = vrot.slane %v3284, 7
    %v3501 = vrot.slane %v3285, 7
    %v3502 = vrot.slane %v3286, 7
    %v3503 = vrot.slane %v3287, 7
    %v3512 = vmul.f32 %v3480, %v3496
    %v3513 = vmul.f32 %v3481, %v3497
    %v3514 = vmul.f32 %v3482, %v3498
    %v3515 = vmul.f32 %v3483, %v3499
    %v3516 = vmul.f32 %v3484, %v3500
    %v3517 = vmul.f32 %v3485, %v3501
    %v3518 = vmul.f32 %v3486, %v3502
    %v3519 = vmul.f32 %v3487, %v3503
    %3528 = vrot.lane.b32.xlu0 %v3464, 64
    %v3529 = vpop.permute.xlu0 %3528
    %3530 = vrot.lane.b32.xlu0 %v3465, 64
    %v3531 = vpop.permute.xlu0 %3530
    %3532 = vrot.lane.b32.xlu0 %v3466, 64
    %v3533 = vpop.permute.xlu0 %3532
    %3534 = vrot.lane.b32.xlu0 %v3467, 64
    %v3535 = vpop.permute.xlu0 %3534
    %3536 = vrot.lane.b32.xlu0 %v3468, 64
    %v3537 = vpop.permute.xlu0 %3536
    %3538 = vrot.lane.b32.xlu0 %v3469, 64
    %v3539 = vpop.permute.xlu0 %3538
    %3540 = vrot.lane.b32.xlu0 %v3470, 64
    %v3541 = vpop.permute.xlu0 %3540
    %3542 = vrot.lane.b32.xlu0 %v3471, 64
    %v3543 = vpop.permute.xlu0 %3542
    %v3552 = vmul.f32 %v3480, %v3529
    %v3553 = vmul.f32 %v3481, %v3531
    %v3554 = vmul.f32 %v3482, %v3533
    %v3555 = vmul.f32 %v3483, %v3535
    %v3556 = vmul.f32 %v3484, %v3537
    %v3557 = vmul.f32 %v3485, %v3539
    %v3558 = vmul.f32 %v3486, %v3541
    %v3559 = vmul.f32 %v3487, %v3543
    %3568 = vrot.lane.b32.xlu0 %v3552, 32
    %v3569 = vpop.permute.xlu0 %3568
    %3570 = vrot.lane.b32.xlu0 %v3553, 32
    %v3571 = vpop.permute.xlu0 %3570
    %3572 = vrot.lane.b32.xlu0 %v3554, 32
    %v3573 = vpop.permute.xlu0 %3572
    %3574 = vrot.lane.b32.xlu0 %v3555, 32
    %v3575 = vpop.permute.xlu0 %3574
    %3576 = vrot.lane.b32.xlu0 %v3556, 32
    %v3577 = vpop.permute.xlu0 %3576
    %3578 = vrot.lane.b32.xlu0 %v3557, 32
    %v3579 = vpop.permute.xlu0 %3578
    %3580 = vrot.lane.b32.xlu0 %v3558, 32
    %v3581 = vpop.permute.xlu0 %3580
    %3582 = vrot.lane.b32.xlu0 %v3559, 32
    %v3583 = vpop.permute.xlu0 %3582
    %v3592 = vadd.f32 %v3512, %v3569
    %v3593 = vadd.f32 %v3513, %v3571
    %v3594 = vadd.f32 %v3514, %v3573
    %v3595 = vadd.f32 %v3515, %v3575
    %v3596 = vadd.f32 %v3516, %v3577
    %v3597 = vadd.f32 %v3517, %v3579
    %v3598 = vadd.f32 %v3518, %v3581
    %v3599 = vadd.f32 %v3519, %v3583
    %v3600 = vtanh.pop %v3592
    %v3601 = vtanh.pop %v3593
    %v3602 = vtanh.pop %v3594
    %v3603 = vtanh.pop %v3595
    %v3604 = vtanh.pop %v3596
    %v3605 = vtanh.pop %v3597
    %v3606 = vtanh.pop %v3598
    %v3607 = vtanh.pop %v3599
    %3616 = vrot.lane.b32.xlu0 %v3600, 64
    %v3617 = vpop.permute.xlu0 %3616
    %3618 = vrot.lane.b32.xlu0 %v3601, 64
    %v3619 = vpop.permute.xlu0 %3618
    %3620 = vrot.lane.b32.xlu0 %v3602, 64
    %v3621 = vpop.permute.xlu0 %3620
    %3622 = vrot.lane.b32.xlu0 %v3603, 64
    %v3623 = vpop.permute.xlu0 %3622
    %3624 = vrot.lane.b32.xlu0 %v3604, 64
    %v3625 = vpop.permute.xlu0 %3624
    %3626 = vrot.lane.b32.xlu0 %v3605, 64
    %v3627 = vpop.permute.xlu0 %3626
    %3628 = vrot.lane.b32.xlu0 %v3606, 64
    %v3629 = vpop.permute.xlu0 %3628
    %3630 = vrot.lane.b32.xlu0 %v3607, 64
    %v3631 = vpop.permute.xlu0 %3630
    %v3640 = vmul.f32 %v3480, %v3617
    %v3641 = vmul.f32 %v3481, %v3619
    %v3642 = vmul.f32 %v3482, %v3621
    %v3643 = vmul.f32 %v3483, %v3623
    %v3644 = vmul.f32 %v3484, %v3625
    %v3645 = vmul.f32 %v3485, %v3627
    %v3646 = vmul.f32 %v3486, %v3629
    %v3647 = vmul.f32 %v3487, %v3631
    %v3656 = vrot.slane %v3640, 2
    %v3657 = vrot.slane %v3641, 1
    %v3658 = vsel %vm530, %v3657, %v3656
    %v3659 = vsel %vm533, %v3642, %v3658
    %v3660 = vrot.slane %v3643, 7
    %v3661 = vsel %vm536, %v3660, %v3659
    %v3662 = vrot.slane %v3644, 6
    %v3663 = vsel %vm539, %v3662, %v3661
    %v3664 = vrot.slane %v3645, 5
    %v3665 = vsel %vm542, %v3664, %v3663
    %v3666 = vrot.slane %v3646, 4
    %v3667 = vsel %vm545, %v3666, %v3665
    %v3668 = vrot.slane %v3647, 3
    %v3669 = vsel %vm548, %v3668, %v3667
    %3670 = vrot.lane.b32.xlu0 %v3669, 32
    %v3671 = vpop.permute.xlu0 %3670
    %v3672 = vsel %vm255, %v3671, 0
    %3674 = vmatprep.subr.mxu0 0.0
    %3675 = vmatpush1.msra.mxu0 %v50
    %3676 = vmatprep.subr.mxu0 0.0
    %3677 = vmatpush1.msra.mxu0 %v51
    %3678 = vmatprep.subr.mxu0 0.0
    %3679 = vmatpush1.msra.mxu0 %v52
    %3680 = vmatprep.subr.mxu0 0.0
    %3681 = vmatpush1.msra.mxu0 %v53
    %3682 = vmatprep.subr.mxu0 0.0
    %3683 = vmatpush1.msra.mxu0 0.0
    %3684 = vmatprep.subr.mxu0 0.0
    %3685 = vmatpush1.msra.mxu0 0.0
    %3686 = vmatprep.subr.mxu0 0.0
    %3687 = vmatpush1.msra.mxu0 0.0
    %3688 = vmatprep.subr.mxu0 0.0
    %3689 = vmatpush1.msra.mxu0 0.0
    %3690 = vmatprep.subr.mxu0 0.0
    %3691 = vmatpush1.msra.mxu0 0.0
    %3692 = vmatprep.subr.mxu0 0.0
    %3693 = vmatpush1.msra.mxu0 0.0
    %3694 = vmatprep.subr.mxu0 0.0
    %3695 = vmatpush1.msra.mxu0 0.0
    %3696 = vmatprep.subr.mxu0 0.0
    %3697 = vmatpush1.msra.mxu0 0.0
    %3698 = vmatprep.subr.mxu0 0.0
    %3699 = vmatpush1.msra.mxu0 0.0
    %3700 = vmatprep.subr.mxu0 0.0
    %3701 = vmatpush1.msra.mxu0 0.0
    %3702 = vmatprep.subr.mxu0 0.0
    %3703 = vmatpush1.msra.mxu0 0.0
    %3704 = vmatprep.subr.mxu0 0.0
    %3705 = vmatpush1.msra.mxu0 0.0
    %3706 = vmatprep.subr.mxu0 0.0
    %3707 = vmatpush1.msra.mxu0 0.0
    %3708 = vmatprep.subr.mxu0 0.0
    %3709 = vmatpush1.msra.mxu0 0.0
    %3710 = vmatprep.subr.mxu0 0.0
    %3711 = vmatpush1.msra.mxu0 0.0
    %3712 = vmatprep.subr.mxu0 0.0
    %3713 = vmatpush1.msra.mxu0 0.0
    %3714 = vmatprep.subr.mxu0 0.0
    %3715 = vmatpush1.msra.mxu0 0.0
    %3716 = vmatprep.subr.mxu0 0.0
    %3717 = vmatpush1.msra.mxu0 0.0
    %3718 = vmatprep.subr.mxu0 0.0
    %3719 = vmatpush1.msra.mxu0 0.0
    %3720 = vmatprep.subr.mxu0 0.0
    %3721 = vmatpush1.msra.mxu0 0.0
    %3722 = vmatprep.subr.mxu0 0.0
    %3723 = vmatpush1.msra.mxu0 0.0
    %3724 = vmatprep.subr.mxu0 0.0
    %3725 = vmatpush1.msra.mxu0 0.0
    %3726 = vmatprep.subr.mxu0 0.0
    %3727 = vmatpush1.msra.mxu0 0.0
    %3728 = vmatprep.subr.mxu0 0.0
    %3729 = vmatpush1.msra.mxu0 0.0
    %3730 = vmatprep.subr.mxu0 0.0
    %3731 = vmatpush1.msra.mxu0 0.0
    %3732 = vmatprep.subr.mxu0 0.0
    %3733 = vmatpush1.msra.mxu0 0.0
    %3734 = vmatprep.subr.mxu0 0.0
    %3735 = vmatpush1.msra.mxu0 0.0
    %3736 = vmatprep.subr.mxu0 0.0
    %3737 = vmatpush1.msra.mxu0 0.0
    %3738 = vmatprep.mubr.f32.mxu0 0.0
    %3739 = vmatmul.mubr.f32.gmra.mrb[0].mxu0 %v3672
    %v3740 = vpop.f32.mrb[0].mxu0
    %v3741 = vadd.f32 0.0, %v3740
    %v3742 = vpop.f32.mrb[0].mxu0
    %3743 = vdwg.mxu0
    %v3745 = vrot.slane %v3741, 5
    %v3746 = vrot.slane %v3741, 6
    %v3747 = vrot.slane %v3741, 7
    %v3748 = vrot.slane %v3741, 1
    %v3749 = vrot.slane %v3741, 2
    %v3750 = vrot.slane %v3741, 3
    %v3751 = vrot.slane %v3741, 4
    %v3760 = vadd.f32 %v182, %v3745
    %v3761 = vadd.f32 %v192, %v3746
    %v3762 = vadd.f32 %v202, %v3747
    %v3763 = vadd.f32 %v212, %v3741
    %v3764 = vadd.f32 %v222, %v3748
    %v3765 = vadd.f32 %v232, %v3749
    %v3766 = vadd.f32 %v242, %v3750
    %v3767 = vadd.f32 %v252, %v3751
    %v3768 = vmul.f32 %v3760, 0.5
    %v3769 = vmul.f32 %v3761, 0.5
    %v3770 = vmul.f32 %v3762, 0.5
    %v3771 = vmul.f32 %v3763, 0.5
    %v3772 = vmul.f32 %v3764, 0.5
    %v3773 = vmul.f32 %v3765, 0.5
    %v3774 = vmul.f32 %v3766, 0.5
    %v3775 = vmul.f32 %v3767, 0.5
    %v3776 = vtanh.pop %v3768
    %v3777 = vtanh.pop %v3769
    %v3778 = vtanh.pop %v3770
    %v3779 = vtanh.pop %v3771
    %v3780 = vtanh.pop %v3772
    %v3781 = vtanh.pop %v3773
    %v3782 = vtanh.pop %v3774
    %v3783 = vtanh.pop %v3775
    %v3784 = vadd.f32 %v3776, 1.0
    %v3785 = vadd.f32 %v3777, 1.0
    %v3786 = vadd.f32 %v3778, 1.0
    %v3787 = vadd.f32 %v3779, 1.0
    %v3788 = vadd.f32 %v3780, 1.0
    %v3789 = vadd.f32 %v3781, 1.0
    %v3790 = vadd.f32 %v3782, 1.0
    %v3791 = vadd.f32 %v3783, 1.0
    %v3792 = vmul.f32 %v3784, 0.5
    %v3793 = vmul.f32 %v3785, 0.5
    %v3794 = vmul.f32 %v3786, 0.5
    %v3795 = vmul.f32 %v3787, 0.5
    %v3796 = vmul.f32 %v3788, 0.5
    %v3797 = vmul.f32 %v3789, 0.5
    %v3798 = vmul.f32 %v3790, 0.5
    %v3799 = vmul.f32 %v3791, 0.5
    %v3808 = vrot.slane %v3592, 7
    %v3809 = vrot.slane %v3593, 7
    %v3810 = vrot.slane %v3594, 7
    %v3811 = vrot.slane %v3595, 7
    %v3812 = vrot.slane %v3596, 7
    %v3813 = vrot.slane %v3597, 7
    %v3814 = vrot.slane %v3598, 7
    %v3815 = vrot.slane %v3599, 7
    %v3824 = vmul.f32 %v3792, %v3808
    %v3825 = vmul.f32 %v3793, %v3809
    %v3826 = vmul.f32 %v3794, %v3810
    %v3827 = vmul.f32 %v3795, %v3811
    %v3828 = vmul.f32 %v3796, %v3812
    %v3829 = vmul.f32 %v3797, %v3813
    %v3830 = vmul.f32 %v3798, %v3814
    %v3831 = vmul.f32 %v3799, %v3815
    %3840 = vrot.lane.b32.xlu0 %v3776, 64
    %v3841 = vpop.permute.xlu0 %3840
    %3842 = vrot.lane.b32.xlu0 %v3777, 64
    %v3843 = vpop.permute.xlu0 %3842
    %3844 = vrot.lane.b32.xlu0 %v3778, 64
    %v3845 = vpop.permute.xlu0 %3844
    %3846 = vrot.lane.b32.xlu0 %v3779, 64
    %v3847 = vpop.permute.xlu0 %3846
    %3848 = vrot.lane.b32.xlu0 %v3780, 64
    %v3849 = vpop.permute.xlu0 %3848
    %3850 = vrot.lane.b32.xlu0 %v3781, 64
    %v3851 = vpop.permute.xlu0 %3850
    %3852 = vrot.lane.b32.xlu0 %v3782, 64
    %v3853 = vpop.permute.xlu0 %3852
    %3854 = vrot.lane.b32.xlu0 %v3783, 64
    %v3855 = vpop.permute.xlu0 %3854
    %v3864 = vmul.f32 %v3792, %v3841
    %v3865 = vmul.f32 %v3793, %v3843
    %v3866 = vmul.f32 %v3794, %v3845
    %v3867 = vmul.f32 %v3795, %v3847
    %v3868 = vmul.f32 %v3796, %v3849
    %v3869 = vmul.f32 %v3797, %v3851
    %v3870 = vmul.f32 %v3798, %v3853
    %v3871 = vmul.f32 %v3799, %v3855
    %3880 = vrot.lane.b32.xlu0 %v3864, 32
    %v3881 = vpop.permute.xlu0 %3880
    %3882 = vrot.lane.b32.xlu0 %v3865, 32
    %v3883 = vpop.permute.xlu0 %3882
    %3884 = vrot.lane.b32.xlu0 %v3866, 32
    %v3885 = vpop.permute.xlu0 %3884
    %3886 = vrot.lane.b32.xlu0 %v3867, 32
    %v3887 = vpop.permute.xlu0 %3886
    %3888 = vrot.lane.b32.xlu0 %v3868, 32
    %v3889 = vpop.permute.xlu0 %3888
    %3890 = vrot.lane.b32.xlu0 %v3869, 32
    %v3891 = vpop.permute.xlu0 %3890
    %3892 = vrot.lane.b32.xlu0 %v3870, 32
    %v3893 = vpop.permute.xlu0 %3892
    %3894 = vrot.lane.b32.xlu0 %v3871, 32
    %v3895 = vpop.permute.xlu0 %3894
    %v3904 = vadd.f32 %v3824, %v3881
    %v3905 = vadd.f32 %v3825, %v3883
    %v3906 = vadd.f32 %v3826, %v3885
    %v3907 = vadd.f32 %v3827, %v3887
    %v3908 = vadd.f32 %v3828, %v3889
    %v3909 = vadd.f32 %v3829, %v3891
    %v3910 = vadd.f32 %v3830, %v3893
    %v3911 = vadd.f32 %v3831, %v3895
    %v3912 = vtanh.pop %v3904
    %v3913 = vtanh.pop %v3905
    %v3914 = vtanh.pop %v3906
    %v3915 = vtanh.pop %v3907
    %v3916 = vtanh.pop %v3908
    %v3917 = vtanh.pop %v3909
    %v3918 = vtanh.pop %v3910
    %v3919 = vtanh.pop %v3911
    %3928 = vrot.lane.b32.xlu0 %v3912, 64
    %v3929 = vpop.permute.xlu0 %3928
    %3930 = vrot.lane.b32.xlu0 %v3913, 64
    %v3931 = vpop.permute.xlu0 %3930
    %3932 = vrot.lane.b32.xlu0 %v3914, 64
    %v3933 = vpop.permute.xlu0 %3932
    %3934 = vrot.lane.b32.xlu0 %v3915, 64
    %v3935 = vpop.permute.xlu0 %3934
    %3936 = vrot.lane.b32.xlu0 %v3916, 64
    %v3937 = vpop.permute.xlu0 %3936
    %3938 = vrot.lane.b32.xlu0 %v3917, 64
    %v3939 = vpop.permute.xlu0 %3938
    %3940 = vrot.lane.b32.xlu0 %v3918, 64
    %v3941 = vpop.permute.xlu0 %3940
    %3942 = vrot.lane.b32.xlu0 %v3919, 64
    %v3943 = vpop.permute.xlu0 %3942
    %v3952 = vmul.f32 %v3792, %v3929
    %v3953 = vmul.f32 %v3793, %v3931
    %v3954 = vmul.f32 %v3794, %v3933
    %v3955 = vmul.f32 %v3795, %v3935
    %v3956 = vmul.f32 %v3796, %v3937
    %v3957 = vmul.f32 %v3797, %v3939
    %v3958 = vmul.f32 %v3798, %v3941
    %v3959 = vmul.f32 %v3799, %v3943
    %v3968 = vrot.slane %v3952, 3
    %v3969 = vrot.slane %v3953, 2
    %v3970 = vsel %vm530, %v3969, %v3968
    %v3971 = vrot.slane %v3954, 1
    %v3972 = vsel %vm533, %v3971, %v3970
    %v3973 = vsel %vm536, %v3955, %v3972
    %v3974 = vrot.slane %v3956, 7
    %v3975 = vsel %vm539, %v3974, %v3973
    %v3976 = vrot.slane %v3957, 6
    %v3977 = vsel %vm542, %v3976, %v3975
    %v3978 = vrot.slane %v3958, 5
    %v3979 = vsel %vm545, %v3978, %v3977
    %v3980 = vrot.slane %v3959, 4
    %v3981 = vsel %vm548, %v3980, %v3979
    %3982 = vrot.lane.b32.xlu0 %v3981, 32
    %v3983 = vpop.permute.xlu0 %3982
    %v3984 = vsel %vm255, %v3983, 0
    %3986 = vmatprep.subr.mxu0 0.0
    %3987 = vmatpush1.msra.mxu0 %v50
    %3988 = vmatprep.subr.mxu0 0.0
    %3989 = vmatpush1.msra.mxu0 %v51
    %3990 = vmatprep.subr.mxu0 0.0
    %3991 = vmatpush1.msra.mxu0 %v52
    %3992 = vmatprep.subr.mxu0 0.0
    %3993 = vmatpush1.msra.mxu0 %v53
    %3994 = vmatprep.subr.mxu0 0.0
    %3995 = vmatpush1.msra.mxu0 0.0
    %3996 = vmatprep.subr.mxu0 0.0
    %3997 = vmatpush1.msra.mxu0 0.0
    %3998 = vmatprep.subr.mxu0 0.0
    %3999 = vmatpush1.msra.mxu0 0.0
    %4000 = vmatprep.subr.mxu0 0.0
    %4001 = vmatpush1.msra.mxu0 0.0
    %4002 = vmatprep.subr.mxu0 0.0
    %4003 = vmatpush1.msra.mxu0 0.0
    %4004 = vmatprep.subr.mxu0 0.0
    %4005 = vmatpush1.msra.mxu0 0.0
    %4006 = vmatprep.subr.mxu0 0.0
    %4007 = vmatpush1.msra.mxu0 0.0
    %4008 = vmatprep.subr.mxu0 0.0
    %4009 = vmatpush1.msra.mxu0 0.0
    %4010 = vmatprep.subr.mxu0 0.0
    %4011 = vmatpush1.msra.mxu0 0.0
    %4012 = vmatprep.subr.mxu0 0.0
    %4013 = vmatpush1.msra.mxu0 0.0
    %4014 = vmatprep.subr.mxu0 0.0
    %4015 = vmatpush1.msra.mxu0 0.0
    %4016 = vmatprep.subr.mxu0 0.0
    %4017 = vmatpush1.msra.mxu0 0.0
    %4018 = vmatprep.subr.mxu0 0.0
    %4019 = vmatpush1.msra.mxu0 0.0
    %4020 = vmatprep.subr.mxu0 0.0
    %4021 = vmatpush1.msra.mxu0 0.0
    %4022 = vmatprep.subr.mxu0 0.0
    %4023 = vmatpush1.msra.mxu0 0.0
    %4024 = vmatprep.subr.mxu0 0.0
    %4025 = vmatpush1.msra.mxu0 0.0
    %4026 = vmatprep.subr.mxu0 0.0
    %4027 = vmatpush1.msra.mxu0 0.0
    %4028 = vmatprep.subr.mxu0 0.0
    %4029 = vmatpush1.msra.mxu0 0.0
    %4030 = vmatprep.subr.mxu0 0.0
    %4031 = vmatpush1.msra.mxu0 0.0
    %4032 = vmatprep.subr.mxu0 0.0
    %4033 = vmatpush1.msra.mxu0 0.0
    %4034 = vmatprep.subr.mxu0 0.0
    %4035 = vmatpush1.msra.mxu0 0.0
    %4036 = vmatprep.subr.mxu0 0.0
    %4037 = vmatpush1.msra.mxu0 0.0
    %4038 = vmatprep.subr.mxu0 0.0
    %4039 = vmatpush1.msra.mxu0 0.0
    %4040 = vmatprep.subr.mxu0 0.0
    %4041 = vmatpush1.msra.mxu0 0.0
    %4042 = vmatprep.subr.mxu0 0.0
    %4043 = vmatpush1.msra.mxu0 0.0
    %4044 = vmatprep.subr.mxu0 0.0
    %4045 = vmatpush1.msra.mxu0 0.0
    %4046 = vmatprep.subr.mxu0 0.0
    %4047 = vmatpush1.msra.mxu0 0.0
    %4048 = vmatprep.subr.mxu0 0.0
    %4049 = vmatpush1.msra.mxu0 0.0
    %4050 = vmatprep.mubr.f32.mxu0 0.0
    %4051 = vmatmul.mubr.f32.gmra.mrb[0].mxu0 %v3984
    %v4052 = vpop.f32.mrb[0].mxu0
    %v4053 = vadd.f32 0.0, %v4052
    %v4054 = vpop.f32.mrb[0].mxu0
    %4055 = vdwg.mxu0
    %v4057 = vrot.slane %v4053, 4
    %v4058 = vrot.slane %v4053, 5
    %v4059 = vrot.slane %v4053, 6
    %v4060 = vrot.slane %v4053, 7
    %v4061 = vrot.slane %v4053, 1
    %v4062 = vrot.slane %v4053, 2
    %v4063 = vrot.slane %v4053, 3
    %v4072 = vadd.f32 %v182, %v4057
    %v4073 = vadd.f32 %v192, %v4058
    %v4074 = vadd.f32 %v202, %v4059
    %v4075 = vadd.f32 %v212, %v4060
    %v4076 = vadd.f32 %v222, %v4053
    %v4077 = vadd.f32 %v232, %v4061
    %v4078 = vadd.f32 %v242, %v4062
    %v4079 = vadd.f32 %v252, %v4063
    %v4080 = vmul.f32 %v4072, 0.5
    %v4081 = vmul.f32 %v4073, 0.5
    %v4082 = vmul.f32 %v4074, 0.5
    %v4083 = vmul.f32 %v4075, 0.5
    %v4084 = vmul.f32 %v4076, 0.5
    %v4085 = vmul.f32 %v4077, 0.5
    %v4086 = vmul.f32 %v4078, 0.5
    %v4087 = vmul.f32 %v4079, 0.5
    %v4088 = vtanh.pop %v4080
    %v4089 = vtanh.pop %v4081
    %v4090 = vtanh.pop %v4082
    %v4091 = vtanh.pop %v4083
    %v4092 = vtanh.pop %v4084
    %v4093 = vtanh.pop %v4085
    %v4094 = vtanh.pop %v4086
    %v4095 = vtanh.pop %v4087
    %v4096 = vadd.f32 %v4088, 1.0
    %v4097 = vadd.f32 %v4089, 1.0
    %v4098 = vadd.f32 %v4090, 1.0
    %v4099 = vadd.f32 %v4091, 1.0
    %v4100 = vadd.f32 %v4092, 1.0
    %v4101 = vadd.f32 %v4093, 1.0
    %v4102 = vadd.f32 %v4094, 1.0
    %v4103 = vadd.f32 %v4095, 1.0
    %v4104 = vmul.f32 %v4096, 0.5
    %v4105 = vmul.f32 %v4097, 0.5
    %v4106 = vmul.f32 %v4098, 0.5
    %v4107 = vmul.f32 %v4099, 0.5
    %v4108 = vmul.f32 %v4100, 0.5
    %v4109 = vmul.f32 %v4101, 0.5
    %v4110 = vmul.f32 %v4102, 0.5
    %v4111 = vmul.f32 %v4103, 0.5
    %v4120 = vrot.slane %v3904, 7
    %v4121 = vrot.slane %v3905, 7
    %v4122 = vrot.slane %v3906, 7
    %v4123 = vrot.slane %v3907, 7
    %v4124 = vrot.slane %v3908, 7
    %v4125 = vrot.slane %v3909, 7
    %v4126 = vrot.slane %v3910, 7
    %v4127 = vrot.slane %v3911, 7
    %v4136 = vmul.f32 %v4104, %v4120
    %v4137 = vmul.f32 %v4105, %v4121
    %v4138 = vmul.f32 %v4106, %v4122
    %v4139 = vmul.f32 %v4107, %v4123
    %v4140 = vmul.f32 %v4108, %v4124
    %v4141 = vmul.f32 %v4109, %v4125
    %v4142 = vmul.f32 %v4110, %v4126
    %v4143 = vmul.f32 %v4111, %v4127
    %4152 = vrot.lane.b32.xlu0 %v4088, 64
    %v4153 = vpop.permute.xlu0 %4152
    %4154 = vrot.lane.b32.xlu0 %v4089, 64
    %v4155 = vpop.permute.xlu0 %4154
    %4156 = vrot.lane.b32.xlu0 %v4090, 64
    %v4157 = vpop.permute.xlu0 %4156
    %4158 = vrot.lane.b32.xlu0 %v4091, 64
    %v4159 = vpop.permute.xlu0 %4158
    %4160 = vrot.lane.b32.xlu0 %v4092, 64
    %v4161 = vpop.permute.xlu0 %4160
    %4162 = vrot.lane.b32.xlu0 %v4093, 64
    %v4163 = vpop.permute.xlu0 %4162
    %4164 = vrot.lane.b32.xlu0 %v4094, 64
    %v4165 = vpop.permute.xlu0 %4164
    %4166 = vrot.lane.b32.xlu0 %v4095, 64
    %v4167 = vpop.permute.xlu0 %4166
    %v4176 = vmul.f32 %v4104, %v4153
    %v4177 = vmul.f32 %v4105, %v4155
    %v4178 = vmul.f32 %v4106, %v4157
    %v4179 = vmul.f32 %v4107, %v4159
    %v4180 = vmul.f32 %v4108, %v4161
    %v4181 = vmul.f32 %v4109, %v4163
    %v4182 = vmul.f32 %v4110, %v4165
    %v4183 = vmul.f32 %v4111, %v4167
    %4192 = vrot.lane.b32.xlu0 %v4176, 32
    %v4193 = vpop.permute.xlu0 %4192
    %4194 = vrot.lane.b32.xlu0 %v4177, 32
    %v4195 = vpop.permute.xlu0 %4194
    %4196 = vrot.lane.b32.xlu0 %v4178, 32
    %v4197 = vpop.permute.xlu0 %4196
    %4198 = vrot.lane.b32.xlu0 %v4179, 32
    %v4199 = vpop.permute.xlu0 %4198
    %4200 = vrot.lane.b32.xlu0 %v4180, 32
    %v4201 = vpop.permute.xlu0 %4200
    %4202 = vrot.lane.b32.xlu0 %v4181, 32
    %v4203 = vpop.permute.xlu0 %4202
    %4204 = vrot.lane.b32.xlu0 %v4182, 32
    %v4205 = vpop.permute.xlu0 %4204
    %4206 = vrot.lane.b32.xlu0 %v4183, 32
    %v4207 = vpop.permute.xlu0 %4206
    %v4216 = vadd.f32 %v4136, %v4193
    %v4217 = vadd.f32 %v4137, %v4195
    %v4218 = vadd.f32 %v4138, %v4197
    %v4219 = vadd.f32 %v4139, %v4199
    %v4220 = vadd.f32 %v4140, %v4201
    %v4221 = vadd.f32 %v4141, %v4203
    %v4222 = vadd.f32 %v4142, %v4205
    %v4223 = vadd.f32 %v4143, %v4207
    %v4224 = vtanh.pop %v4216
    %v4225 = vtanh.pop %v4217
    %v4226 = vtanh.pop %v4218
    %v4227 = vtanh.pop %v4219
    %v4228 = vtanh.pop %v4220
    %v4229 = vtanh.pop %v4221
    %v4230 = vtanh.pop %v4222
    %v4231 = vtanh.pop %v4223
    %4240 = vrot.lane.b32.xlu0 %v4224, 64
    %v4241 = vpop.permute.xlu0 %4240
    %4242 = vrot.lane.b32.xlu0 %v4225, 64
    %v4243 = vpop.permute.xlu0 %4242
    %4244 = vrot.lane.b32.xlu0 %v4226, 64
    %v4245 = vpop.permute.xlu0 %4244
    %4246 = vrot.lane.b32.xlu0 %v4227, 64
    %v4247 = vpop.permute.xlu0 %4246
    %4248 = vrot.lane.b32.xlu0 %v4228, 64
    %v4249 = vpop.permute.xlu0 %4248
    %4250 = vrot.lane.b32.xlu0 %v4229, 64
    %v4251 = vpop.permute.xlu0 %4250
    %4252 = vrot.lane.b32.xlu0 %v4230, 64
    %v4253 = vpop.permute.xlu0 %4252
    %4254 = vrot.lane.b32.xlu0 %v4231, 64
    %v4255 = vpop.permute.xlu0 %4254
    %v4264 = vmul.f32 %v4104, %v4241
    %v4265 = vmul.f32 %v4105, %v4243
    %v4266 = vmul.f32 %v4106, %v4245
    %v4267 = vmul.f32 %v4107, %v4247
    %v4268 = vmul.f32 %v4108, %v4249
    %v4269 = vmul.f32 %v4109, %v4251
    %v4270 = vmul.f32 %v4110, %v4253
    %v4271 = vmul.f32 %v4111, %v4255
    %v4280 = vrot.slane %v4264, 4
    %v4281 = vrot.slane %v4265, 3
    %v4282 = vsel %vm530, %v4281, %v4280
    %v4283 = vrot.slane %v4266, 2
    %v4284 = vsel %vm533, %v4283, %v4282
    %v4285 = vrot.slane %v4267, 1
    %v4286 = vsel %vm536, %v4285, %v4284
    %v4287 = vsel %vm539, %v4268, %v4286
    %v4288 = vrot.slane %v4269, 7
    %v4289 = vsel %vm542, %v4288, %v4287
    %v4290 = vrot.slane %v4270, 6
    %v4291 = vsel %vm545, %v4290, %v4289
    %v4292 = vrot.slane %v4271, 5
    %v4293 = vsel %vm548, %v4292, %v4291
    %4294 = vrot.lane.b32.xlu0 %v4293, 32
    %v4295 = vpop.permute.xlu0 %4294
    %v4296 = vsel %vm255, %v4295, 0
    %4298 = vmatprep.subr.mxu0 0.0
    %4299 = vmatpush1.msra.mxu0 %v50
    %4300 = vmatprep.subr.mxu0 0.0
    %4301 = vmatpush1.msra.mxu0 %v51
    %4302 = vmatprep.subr.mxu0 0.0
    %4303 = vmatpush1.msra.mxu0 %v52
    %4304 = vmatprep.subr.mxu0 0.0
    %4305 = vmatpush1.msra.mxu0 %v53
    %4306 = vmatprep.subr.mxu0 0.0
    %4307 = vmatpush1.msra.mxu0 0.0
    %4308 = vmatprep.subr.mxu0 0.0
    %4309 = vmatpush1.msra.mxu0 0.0
    %4310 = vmatprep.subr.mxu0 0.0
    %4311 = vmatpush1.msra.mxu0 0.0
    %4312 = vmatprep.subr.mxu0 0.0
    %4313 = vmatpush1.msra.mxu0 0.0
    %4314 = vmatprep.subr.mxu0 0.0
    %4315 = vmatpush1.msra.mxu0 0.0
    %4316 = vmatprep.subr.mxu0 0.0
    %4317 = vmatpush1.msra.mxu0 0.0
    %4318 = vmatprep.subr.mxu0 0.0
    %4319 = vmatpush1.msra.mxu0 0.0
    %4320 = vmatprep.subr.mxu0 0.0
    %4321 = vmatpush1.msra.mxu0 0.0
    %4322 = vmatprep.subr.mxu0 0.0
    %4323 = vmatpush1.msra.mxu0 0.0
    %4324 = vmatprep.subr.mxu0 0.0
    %4325 = vmatpush1.msra.mxu0 0.0
    %4326 = vmatprep.subr.mxu0 0.0
    %4327 = vmatpush1.msra.mxu0 0.0
    %4328 = vmatprep.subr.mxu0 0.0
    %4329 = vmatpush1.msra.mxu0 0.0
    %4330 = vmatprep.subr.mxu0 0.0
    %4331 = vmatpush1.msra.mxu0 0.0
    %4332 = vmatprep.subr.mxu0 0.0
    %4333 = vmatpush1.msra.mxu0 0.0
    %4334 = vmatprep.subr.mxu0 0.0
    %4335 = vmatpush1.msra.mxu0 0.0
    %4336 = vmatprep.subr.mxu0 0.0
    %4337 = vmatpush1.msra.mxu0 0.0
    %4338 = vmatprep.subr.mxu0 0.0
    %4339 = vmatpush1.msra.mxu0 0.0
    %4340 = vmatprep.subr.mxu0 0.0
    %4341 = vmatpush1.msra.mxu0 0.0
    %4342 = vmatprep.subr.mxu0 0.0
    %4343 = vmatpush1.msra.mxu0 0.0
    %4344 = vmatprep.subr.mxu0 0.0
    %4345 = vmatpush1.msra.mxu0 0.0
    %4346 = vmatprep.subr.mxu0 0.0
    %4347 = vmatpush1.msra.mxu0 0.0
    %4348 = vmatprep.subr.mxu0 0.0
    %4349 = vmatpush1.msra.mxu0 0.0
    %4350 = vmatprep.subr.mxu0 0.0
    %4351 = vmatpush1.msra.mxu0 0.0
    %4352 = vmatprep.subr.mxu0 0.0
    %4353 = vmatpush1.msra.mxu0 0.0
    %4354 = vmatprep.subr.mxu0 0.0
    %4355 = vmatpush1.msra.mxu0 0.0
    %4356 = vmatprep.subr.mxu0 0.0
    %4357 = vmatpush1.msra.mxu0 0.0
    %4358 = vmatprep.subr.mxu0 0.0
    %4359 = vmatpush1.msra.mxu0 0.0
    %4360 = vmatprep.subr.mxu0 0.0
    %4361 = vmatpush1.msra.mxu0 0.0
    %4362 = vmatprep.mubr.f32.mxu0 0.0
    %4363 = vmatmul.mubr.f32.gmra.mrb[0].mxu0 %v4296
    %v4364 = vpop.f32.mrb[0].mxu0
    %v4365 = vadd.f32 0.0, %v4364
    %v4366 = vpop.f32.mrb[0].mxu0
    %4367 = vdwg.mxu0
    %v4369 = vrot.slane %v4365, 3
    %v4370 = vrot.slane %v4365, 4
    %v4371 = vrot.slane %v4365, 5
    %v4372 = vrot.slane %v4365, 6
    %v4373 = vrot.slane %v4365, 7
    %v4374 = vrot.slane %v4365, 1
    %v4375 = vrot.slane %v4365, 2
    %v4384 = vadd.f32 %v182, %v4369
    %v4385 = vadd.f32 %v192, %v4370
    %v4386 = vadd.f32 %v202, %v4371
    %v4387 = vadd.f32 %v212, %v4372
    %v4388 = vadd.f32 %v222, %v4373
    %v4389 = vadd.f32 %v232, %v4365
    %v4390 = vadd.f32 %v242, %v4374
    %v4391 = vadd.f32 %v252, %v4375
    %v4392 = vmul.f32 %v4384, 0.5
    %v4393 = vmul.f32 %v4385, 0.5
    %v4394 = vmul.f32 %v4386, 0.5
    %v4395 = vmul.f32 %v4387, 0.5
    %v4396 = vmul.f32 %v4388, 0.5
    %v4397 = vmul.f32 %v4389, 0.5
    %v4398 = vmul.f32 %v4390, 0.5
    %v4399 = vmul.f32 %v4391, 0.5
    %v4400 = vtanh.pop %v4392
    %v4401 = vtanh.pop %v4393
    %v4402 = vtanh.pop %v4394
    %v4403 = vtanh.pop %v4395
    %v4404 = vtanh.pop %v4396
    %v4405 = vtanh.pop %v4397
    %v4406 = vtanh.pop %v4398
    %v4407 = vtanh.pop %v4399
    %v4408 = vadd.f32 %v4400, 1.0
    %v4409 = vadd.f32 %v4401, 1.0
    %v4410 = vadd.f32 %v4402, 1.0
    %v4411 = vadd.f32 %v4403, 1.0
    %v4412 = vadd.f32 %v4404, 1.0
    %v4413 = vadd.f32 %v4405, 1.0
    %v4414 = vadd.f32 %v4406, 1.0
    %v4415 = vadd.f32 %v4407, 1.0
    %v4416 = vmul.f32 %v4408, 0.5
    %v4417 = vmul.f32 %v4409, 0.5
    %v4418 = vmul.f32 %v4410, 0.5
    %v4419 = vmul.f32 %v4411, 0.5
    %v4420 = vmul.f32 %v4412, 0.5
    %v4421 = vmul.f32 %v4413, 0.5
    %v4422 = vmul.f32 %v4414, 0.5
    %v4423 = vmul.f32 %v4415, 0.5
    %v4432 = vrot.slane %v4216, 7
    %v4433 = vrot.slane %v4217, 7
    %v4434 = vrot.slane %v4218, 7
    %v4435 = vrot.slane %v4219, 7
    %v4436 = vrot.slane %v4220, 7
    %v4437 = vrot.slane %v4221, 7
    %v4438 = vrot.slane %v4222, 7
    %v4439 = vrot.slane %v4223, 7
    %v4448 = vmul.f32 %v4416, %v4432
    %v4449 = vmul.f32 %v4417, %v4433
    %v4450 = vmul.f32 %v4418, %v4434
    %v4451 = vmul.f32 %v4419, %v4435
    %v4452 = vmul.f32 %v4420, %v4436
    %v4453 = vmul.f32 %v4421, %v4437
    %v4454 = vmul.f32 %v4422, %v4438
    %v4455 = vmul.f32 %v4423, %v4439
    %4464 = vrot.lane.b32.xlu0 %v4400, 64
    %v4465 = vpop.permute.xlu0 %4464
    %4466 = vrot.lane.b32.xlu0 %v4401, 64
    %v4467 = vpop.permute.xlu0 %4466
    %4468 = vrot.lane.b32.xlu0 %v4402, 64
    %v4469 = vpop.permute.xlu0 %4468
    %4470 = vrot.lane.b32.xlu0 %v4403, 64
    %v4471 = vpop.permute.xlu0 %4470
    %4472 = vrot.lane.b32.xlu0 %v4404, 64
    %v4473 = vpop.permute.xlu0 %4472
    %4474 = vrot.lane.b32.xlu0 %v4405, 64
    %v4475 = vpop.permute.xlu0 %4474
    %4476 = vrot.lane.b32.xlu0 %v4406, 64
    %v4477 = vpop.permute.xlu0 %4476
    %4478 = vrot.lane.b32.xlu0 %v4407, 64
    %v4479 = vpop.permute.xlu0 %4478
    %v4488 = vmul.f32 %v4416, %v4465
    %v4489 = vmul.f32 %v4417, %v4467
    %v4490 = vmul.f32 %v4418, %v4469
    %v4491 = vmul.f32 %v4419, %v4471
    %v4492 = vmul.f32 %v4420, %v4473
    %v4493 = vmul.f32 %v4421, %v4475
    %v4494 = vmul.f32 %v4422, %v4477
    %v4495 = vmul.f32 %v4423, %v4479
    %4504 = vrot.lane.b32.xlu0 %v4488, 32
    %v4505 = vpop.permute.xlu0 %4504
    %4506 = vrot.lane.b32.xlu0 %v4489, 32
    %v4507 = vpop.permute.xlu0 %4506
    %4508 = vrot.lane.b32.xlu0 %v4490, 32
    %v4509 = vpop.permute.xlu0 %4508
    %4510 = vrot.lane.b32.xlu0 %v4491, 32
    %v4511 = vpop.permute.xlu0 %4510
    %4512 = vrot.lane.b32.xlu0 %v4492, 32
    %v4513 = vpop.permute.xlu0 %4512
    %4514 = vrot.lane.b32.xlu0 %v4493, 32
    %v4515 = vpop.permute.xlu0 %4514
    %4516 = vrot.lane.b32.xlu0 %v4494, 32
    %v4517 = vpop.permute.xlu0 %4516
    %4518 = vrot.lane.b32.xlu0 %v4495, 32
    %v4519 = vpop.permute.xlu0 %4518
    %v4528 = vadd.f32 %v4448, %v4505
    %v4529 = vadd.f32 %v4449, %v4507
    %v4530 = vadd.f32 %v4450, %v4509
    %v4531 = vadd.f32 %v4451, %v4511
    %v4532 = vadd.f32 %v4452, %v4513
    %v4533 = vadd.f32 %v4453, %v4515
    %v4534 = vadd.f32 %v4454, %v4517
    %v4535 = vadd.f32 %v4455, %v4519
    %v4536 = vtanh.pop %v4528
    %v4537 = vtanh.pop %v4529
    %v4538 = vtanh.pop %v4530
    %v4539 = vtanh.pop %v4531
    %v4540 = vtanh.pop %v4532
    %v4541 = vtanh.pop %v4533
    %v4542 = vtanh.pop %v4534
    %v4543 = vtanh.pop %v4535
    %4552 = vrot.lane.b32.xlu0 %v4536, 64
    %v4553 = vpop.permute.xlu0 %4552
    %4554 = vrot.lane.b32.xlu0 %v4537, 64
    %v4555 = vpop.permute.xlu0 %4554
    %4556 = vrot.lane.b32.xlu0 %v4538, 64
    %v4557 = vpop.permute.xlu0 %4556
    %4558 = vrot.lane.b32.xlu0 %v4539, 64
    %v4559 = vpop.permute.xlu0 %4558
    %4560 = vrot.lane.b32.xlu0 %v4540, 64
    %v4561 = vpop.permute.xlu0 %4560
    %4562 = vrot.lane.b32.xlu0 %v4541, 64
    %v4563 = vpop.permute.xlu0 %4562
    %4564 = vrot.lane.b32.xlu0 %v4542, 64
    %v4565 = vpop.permute.xlu0 %4564
    %4566 = vrot.lane.b32.xlu0 %v4543, 64
    %v4567 = vpop.permute.xlu0 %4566
    %v4576 = vmul.f32 %v4416, %v4553
    %v4577 = vmul.f32 %v4417, %v4555
    %v4578 = vmul.f32 %v4418, %v4557
    %v4579 = vmul.f32 %v4419, %v4559
    %v4580 = vmul.f32 %v4420, %v4561
    %v4581 = vmul.f32 %v4421, %v4563
    %v4582 = vmul.f32 %v4422, %v4565
    %v4583 = vmul.f32 %v4423, %v4567
    %v4592 = vrot.slane %v4576, 5
    %v4593 = vrot.slane %v4577, 4
    %v4594 = vsel %vm530, %v4593, %v4592
    %v4595 = vrot.slane %v4578, 3
    %v4596 = vsel %vm533, %v4595, %v4594
    %v4597 = vrot.slane %v4579, 2
    %v4598 = vsel %vm536, %v4597, %v4596
    %v4599 = vrot.slane %v4580, 1
    %v4600 = vsel %vm539, %v4599, %v4598
    %v4601 = vsel %vm542, %v4581, %v4600
    %v4602 = vrot.slane %v4582, 7
    %v4603 = vsel %vm545, %v4602, %v4601
    %v4604 = vrot.slane %v4583, 6
    %v4605 = vsel %vm548, %v4604, %v4603
    %4606 = vrot.lane.b32.xlu0 %v4605, 32
    %v4607 = vpop.permute.xlu0 %4606
    %v4608 = vsel %vm255, %v4607, 0
    %4610 = vmatprep.subr.mxu0 0.0
    %4611 = vmatpush1.msra.mxu0 %v50
    %4612 = vmatprep.subr.mxu0 0.0
    %4613 = vmatpush1.msra.mxu0 %v51
    %4614 = vmatprep.subr.mxu0 0.0
    %4615 = vmatpush1.msra.mxu0 %v52
    %4616 = vmatprep.subr.mxu0 0.0
    %4617 = vmatpush1.msra.mxu0 %v53
    %4618 = vmatprep.subr.mxu0 0.0
    %4619 = vmatpush1.msra.mxu0 0.0
    %4620 = vmatprep.subr.mxu0 0.0
    %4621 = vmatpush1.msra.mxu0 0.0
    %4622 = vmatprep.subr.mxu0 0.0
    %4623 = vmatpush1.msra.mxu0 0.0
    %4624 = vmatprep.subr.mxu0 0.0
    %4625 = vmatpush1.msra.mxu0 0.0
    %4626 = vmatprep.subr.mxu0 0.0
    %4627 = vmatpush1.msra.mxu0 0.0
    %4628 = vmatprep.subr.mxu0 0.0
    %4629 = vmatpush1.msra.mxu0 0.0
    %4630 = vmatprep.subr.mxu0 0.0
    %4631 = vmatpush1.msra.mxu0 0.0
    %4632 = vmatprep.subr.mxu0 0.0
    %4633 = vmatpush1.msra.mxu0 0.0
    %4634 = vmatprep.subr.mxu0 0.0
    %4635 = vmatpush1.msra.mxu0 0.0
    %4636 = vmatprep.subr.mxu0 0.0
    %4637 = vmatpush1.msra.mxu0 0.0
    %4638 = vmatprep.subr.mxu0 0.0
    %4639 = vmatpush1.msra.mxu0 0.0
    %4640 = vmatprep.subr.mxu0 0.0
    %4641 = vmatpush1.msra.mxu0 0.0
    %4642 = vmatprep.subr.mxu0 0.0
    %4643 = vmatpush1.msra.mxu0 0.0
    %4644 = vmatprep.subr.mxu0 0.0
    %4645 = vmatpush1.msra.mxu0 0.0
    %4646 = vmatprep.subr.mxu0 0.0
    %4647 = vmatpush1.msra.mxu0 0.0
    %4648 = vmatprep.subr.mxu0 0.0
    %4649 = vmatpush1.msra.mxu0 0.0
    %4650 = vmatprep.subr.mxu0 0.0
    %4651 = vmatpush1.msra.mxu0 0.0
    %4652 = vmatprep.subr.mxu0 0.0
    %4653 = vmatpush1.msra.mxu0 0.0
    %4654 = vmatprep.subr.mxu0 0.0
    %4655 = vmatpush1.msra.mxu0 0.0
    %4656 = vmatprep.subr.mxu0 0.0
    %4657 = vmatpush1.msra.mxu0 0.0
    %4658 = vmatprep.subr.mxu0 0.0
    %4659 = vmatpush1.msra.mxu0 0.0
    %4660 = vmatprep.subr.mxu0 0.0
    %4661 = vmatpush1.msra.mxu0 0.0
    %4662 = vmatprep.subr.mxu0 0.0
    %4663 = vmatpush1.msra.mxu0 0.0
    %4664 = vmatprep.subr.mxu0 0.0
    %4665 = vmatpush1.msra.mxu0 0.0
    %4666 = vmatprep.subr.mxu0 0.0
    %4667 = vmatpush1.msra.mxu0 0.0
    %4668 = vmatprep.subr.mxu0 0.0
    %4669 = vmatpush1.msra.mxu0 0.0
    %4670 = vmatprep.subr.mxu0 0.0
    %4671 = vmatpush1.msra.mxu0 0.0
    %4672 = vmatprep.subr.mxu0 0.0
    %4673 = vmatpush1.msra.mxu0 0.0
    %4674 = vmatprep.mubr.f32.mxu0 0.0
    %4675 = vmatmul.mubr.f32.gmra.mrb[0].mxu0 %v4608
    %v4676 = vpop.f32.mrb[0].mxu0
    %v4677 = vadd.f32 0.0, %v4676
    %v4678 = vpop.f32.mrb[0].mxu0
    %4679 = vdwg.mxu0
    %v4681 = vrot.slane %v4677, 2
    %v4682 = vrot.slane %v4677, 3
    %v4683 = vrot.slane %v4677, 4
    %v4684 = vrot.slane %v4677, 5
    %v4685 = vrot.slane %v4677, 6
    %v4686 = vrot.slane %v4677, 7
    %v4687 = vrot.slane %v4677, 1
    %v4696 = vadd.f32 %v182, %v4681
    %v4697 = vadd.f32 %v192, %v4682
    %v4698 = vadd.f32 %v202, %v4683
    %v4699 = vadd.f32 %v212, %v4684
    %v4700 = vadd.f32 %v222, %v4685
    %v4701 = vadd.f32 %v232, %v4686
    %v4702 = vadd.f32 %v242, %v4677
    %v4703 = vadd.f32 %v252, %v4687
    %v4704 = vmul.f32 %v4696, 0.5
    %v4705 = vmul.f32 %v4697, 0.5
    %v4706 = vmul.f32 %v4698, 0.5
    %v4707 = vmul.f32 %v4699, 0.5
    %v4708 = vmul.f32 %v4700, 0.5
    %v4709 = vmul.f32 %v4701, 0.5
    %v4710 = vmul.f32 %v4702, 0.5
    %v4711 = vmul.f32 %v4703, 0.5
    %v4712 = vtanh.pop %v4704
    %v4713 = vtanh.pop %v4705
    %v4714 = vtanh.pop %v4706
    %v4715 = vtanh.pop %v4707
    %v4716 = vtanh.pop %v4708
    %v4717 = vtanh.pop %v4709
    %v4718 = vtanh.pop %v4710
    %v4719 = vtanh.pop %v4711
    %v4720 = vadd.f32 %v4712, 1.0
    %v4721 = vadd.f32 %v4713, 1.0
    %v4722 = vadd.f32 %v4714, 1.0
    %v4723 = vadd.f32 %v4715, 1.0
    %v4724 = vadd.f32 %v4716, 1.0
    %v4725 = vadd.f32 %v4717, 1.0
    %v4726 = vadd.f32 %v4718, 1.0
    %v4727 = vadd.f32 %v4719, 1.0
    %v4728 = vmul.f32 %v4720, 0.5
    %v4729 = vmul.f32 %v4721, 0.5
    %v4730 = vmul.f32 %v4722, 0.5
    %v4731 = vmul.f32 %v4723, 0.5
    %v4732 = vmul.f32 %v4724, 0.5
    %v4733 = vmul.f32 %v4725, 0.5
    %v4734 = vmul.f32 %v4726, 0.5
    %v4735 = vmul.f32 %v4727, 0.5
    %v4744 = vrot.slane %v4528, 7
    %v4745 = vrot.slane %v4529, 7
    %v4746 = vrot.slane %v4530, 7
    %v4747 = vrot.slane %v4531, 7
    %v4748 = vrot.slane %v4532, 7
    %v4749 = vrot.slane %v4533, 7
    %v4750 = vrot.slane %v4534, 7
    %v4751 = vrot.slane %v4535, 7
    %v4760 = vmul.f32 %v4728, %v4744
    %v4761 = vmul.f32 %v4729, %v4745
    %v4762 = vmul.f32 %v4730, %v4746
    %v4763 = vmul.f32 %v4731, %v4747
    %v4764 = vmul.f32 %v4732, %v4748
    %v4765 = vmul.f32 %v4733, %v4749
    %v4766 = vmul.f32 %v4734, %v4750
    %v4767 = vmul.f32 %v4735, %v4751
    %4776 = vrot.lane.b32.xlu0 %v4712, 64
    %v4777 = vpop.permute.xlu0 %4776
    %4778 = vrot.lane.b32.xlu0 %v4713, 64
    %v4779 = vpop.permute.xlu0 %4778
    %4780 = vrot.lane.b32.xlu0 %v4714, 64
    %v4781 = vpop.permute.xlu0 %4780
    %4782 = vrot.lane.b32.xlu0 %v4715, 64
    %v4783 = vpop.permute.xlu0 %4782
    %4784 = vrot.lane.b32.xlu0 %v4716, 64
    %v4785 = vpop.permute.xlu0 %4784
    %4786 = vrot.lane.b32.xlu0 %v4717, 64
    %v4787 = vpop.permute.xlu0 %4786
    %4788 = vrot.lane.b32.xlu0 %v4718, 64
    %v4789 = vpop.permute.xlu0 %4788
    %4790 = vrot.lane.b32.xlu0 %v4719, 64
    %v4791 = vpop.permute.xlu0 %4790
    %v4800 = vmul.f32 %v4728, %v4777
    %v4801 = vmul.f32 %v4729, %v4779
    %v4802 = vmul.f32 %v4730, %v4781
    %v4803 = vmul.f32 %v4731, %v4783
    %v4804 = vmul.f32 %v4732, %v4785
    %v4805 = vmul.f32 %v4733, %v4787
    %v4806 = vmul.f32 %v4734, %v4789
    %v4807 = vmul.f32 %v4735, %v4791
    %4816 = vrot.lane.b32.xlu0 %v4800, 32
    %v4817 = vpop.permute.xlu0 %4816
    %4818 = vrot.lane.b32.xlu0 %v4801, 32
    %v4819 = vpop.permute.xlu0 %4818
    %4820 = vrot.lane.b32.xlu0 %v4802, 32
    %v4821 = vpop.permute.xlu0 %4820
    %4822 = vrot.lane.b32.xlu0 %v4803, 32
    %v4823 = vpop.permute.xlu0 %4822
    %4824 = vrot.lane.b32.xlu0 %v4804, 32
    %v4825 = vpop.permute.xlu0 %4824
    %4826 = vrot.lane.b32.xlu0 %v4805, 32
    %v4827 = vpop.permute.xlu0 %4826
    %4828 = vrot.lane.b32.xlu0 %v4806, 32
    %v4829 = vpop.permute.xlu0 %4828
    %4830 = vrot.lane.b32.xlu0 %v4807, 32
    %v4831 = vpop.permute.xlu0 %4830
    %v4840 = vadd.f32 %v4760, %v4817
    %v4841 = vadd.f32 %v4761, %v4819
    %v4842 = vadd.f32 %v4762, %v4821
    %v4843 = vadd.f32 %v4763, %v4823
    %v4844 = vadd.f32 %v4764, %v4825
    %v4845 = vadd.f32 %v4765, %v4827
    %v4846 = vadd.f32 %v4766, %v4829
    %v4847 = vadd.f32 %v4767, %v4831
    %v4848 = vtanh.pop %v4840
    %v4849 = vtanh.pop %v4841
    %v4850 = vtanh.pop %v4842
    %v4851 = vtanh.pop %v4843
    %v4852 = vtanh.pop %v4844
    %v4853 = vtanh.pop %v4845
    %v4854 = vtanh.pop %v4846
    %v4855 = vtanh.pop %v4847
    %4864 = vrot.lane.b32.xlu0 %v4848, 64
    %v4865 = vpop.permute.xlu0 %4864
    %4866 = vrot.lane.b32.xlu0 %v4849, 64
    %v4867 = vpop.permute.xlu0 %4866
    %4868 = vrot.lane.b32.xlu0 %v4850, 64
    %v4869 = vpop.permute.xlu0 %4868
    %4870 = vrot.lane.b32.xlu0 %v4851, 64
    %v4871 = vpop.permute.xlu0 %4870
    %4872 = vrot.lane.b32.xlu0 %v4852, 64
    %v4873 = vpop.permute.xlu0 %4872
    %4874 = vrot.lane.b32.xlu0 %v4853, 64
    %v4875 = vpop.permute.xlu0 %4874
    %4876 = vrot.lane.b32.xlu0 %v4854, 64
    %v4877 = vpop.permute.xlu0 %4876
    %4878 = vrot.lane.b32.xlu0 %v4855, 64
    %v4879 = vpop.permute.xlu0 %4878
    %v4888 = vmul.f32 %v4728, %v4865
    %v4889 = vmul.f32 %v4729, %v4867
    %v4890 = vmul.f32 %v4730, %v4869
    %v4891 = vmul.f32 %v4731, %v4871
    %v4892 = vmul.f32 %v4732, %v4873
    %v4893 = vmul.f32 %v4733, %v4875
    %v4894 = vmul.f32 %v4734, %v4877
    %v4895 = vmul.f32 %v4735, %v4879
    %v4904 = vrot.slane %v4888, 6
    %v4905 = vrot.slane %v4889, 5
    %v4906 = vsel %vm530, %v4905, %v4904
    %v4907 = vrot.slane %v4890, 4
    %v4908 = vsel %vm533, %v4907, %v4906
    %v4909 = vrot.slane %v4891, 3
    %v4910 = vsel %vm536, %v4909, %v4908
    %v4911 = vrot.slane %v4892, 2
    %v4912 = vsel %vm539, %v4911, %v4910
    %v4913 = vrot.slane %v4893, 1
    %v4914 = vsel %vm542, %v4913, %v4912
    %v4915 = vsel %vm545, %v4894, %v4914
    %v4916 = vrot.slane %v4895, 7
    %v4917 = vsel %vm548, %v4916, %v4915
    %4918 = vrot.lane.b32.xlu0 %v4917, 32
    %v4919 = vpop.permute.xlu0 %4918
    %v4920 = vsel %vm255, %v4919, 0
    %4922 = vmatprep.subr.mxu0 0.0
    %4923 = vmatpush1.msra.mxu0 %v50
    %4924 = vmatprep.subr.mxu0 0.0
    %4925 = vmatpush1.msra.mxu0 %v51
    %4926 = vmatprep.subr.mxu0 0.0
    %4927 = vmatpush1.msra.mxu0 %v52
    %4928 = vmatprep.subr.mxu0 0.0
    %4929 = vmatpush1.msra.mxu0 %v53
    %4930 = vmatprep.subr.mxu0 0.0
    %4931 = vmatpush1.msra.mxu0 0.0
    %4932 = vmatprep.subr.mxu0 0.0
    %4933 = vmatpush1.msra.mxu0 0.0
    %4934 = vmatprep.subr.mxu0 0.0
    %4935 = vmatpush1.msra.mxu0 0.0
    %4936 = vmatprep.subr.mxu0 0.0
    %4937 = vmatpush1.msra.mxu0 0.0
    %4938 = vmatprep.subr.mxu0 0.0
    %4939 = vmatpush1.msra.mxu0 0.0
    %4940 = vmatprep.subr.mxu0 0.0
    %4941 = vmatpush1.msra.mxu0 0.0
    %4942 = vmatprep.subr.mxu0 0.0
    %4943 = vmatpush1.msra.mxu0 0.0
    %4944 = vmatprep.subr.mxu0 0.0
    %4945 = vmatpush1.msra.mxu0 0.0
    %4946 = vmatprep.subr.mxu0 0.0
    %4947 = vmatpush1.msra.mxu0 0.0
    %4948 = vmatprep.subr.mxu0 0.0
    %4949 = vmatpush1.msra.mxu0 0.0
    %4950 = vmatprep.subr.mxu0 0.0
    %4951 = vmatpush1.msra.mxu0 0.0
    %4952 = vmatprep.subr.mxu0 0.0
    %4953 = vmatpush1.msra.mxu0 0.0
    %4954 = vmatprep.subr.mxu0 0.0
    %4955 = vmatpush1.msra.mxu0 0.0
    %4956 = vmatprep.subr.mxu0 0.0
    %4957 = vmatpush1.msra.mxu0 0.0
    %4958 = vmatprep.subr.mxu0 0.0
    %4959 = vmatpush1.msra.mxu0 0.0
    %4960 = vmatprep.subr.mxu0 0.0
    %4961 = vmatpush1.msra.mxu0 0.0
    %4962 = vmatprep.subr.mxu0 0.0
    %4963 = vmatpush1.msra.mxu0 0.0
    %4964 = vmatprep.subr.mxu0 0.0
    %4965 = vmatpush1.msra.mxu0 0.0
    %4966 = vmatprep.subr.mxu0 0.0
    %4967 = vmatpush1.msra.mxu0 0.0
    %4968 = vmatprep.subr.mxu0 0.0
    %4969 = vmatpush1.msra.mxu0 0.0
    %4970 = vmatprep.subr.mxu0 0.0
    %4971 = vmatpush1.msra.mxu0 0.0
    %4972 = vmatprep.subr.mxu0 0.0
    %4973 = vmatpush1.msra.mxu0 0.0
    %4974 = vmatprep.subr.mxu0 0.0
    %4975 = vmatpush1.msra.mxu0 0.0
    %4976 = vmatprep.subr.mxu0 0.0
    %4977 = vmatpush1.msra.mxu0 0.0
    %4978 = vmatprep.subr.mxu0 0.0
    %4979 = vmatpush1.msra.mxu0 0.0
    %4980 = vmatprep.subr.mxu0 0.0
    %4981 = vmatpush1.msra.mxu0 0.0
    %4982 = vmatprep.subr.mxu0 0.0
    %4983 = vmatpush1.msra.mxu0 0.0
    %4984 = vmatprep.subr.mxu0 0.0
    %4985 = vmatpush1.msra.mxu0 0.0
    %4986 = vmatprep.mubr.f32.mxu0 0.0
    %4987 = vmatmul.mubr.f32.gmra.mrb[0].mxu0 %v4920
    %v4988 = vpop.f32.mrb[0].mxu0
    %v4989 = vadd.f32 0.0, %v4988
    %v4990 = vpop.f32.mrb[0].mxu0
    %4991 = vdwg.mxu0
    %v4993 = vrot.slane %v4989, 1
    %v4994 = vrot.slane %v4989, 2
    %v4995 = vrot.slane %v4989, 3
    %v4996 = vrot.slane %v4989, 4
    %v4997 = vrot.slane %v4989, 5
    %v4998 = vrot.slane %v4989, 6
    %v4999 = vrot.slane %v4989, 7
    %v5008 = vadd.f32 %v182, %v4993
    %v5009 = vadd.f32 %v192, %v4994
    %v5010 = vadd.f32 %v202, %v4995
    %v5011 = vadd.f32 %v212, %v4996
    %v5012 = vadd.f32 %v222, %v4997
    %v5013 = vadd.f32 %v232, %v4998
    %v5014 = vadd.f32 %v242, %v4999
    %v5015 = vadd.f32 %v252, %v4989
    %v5016 = vmul.f32 %v5008, 0.5
    %v5017 = vmul.f32 %v5009, 0.5
    %v5018 = vmul.f32 %v5010, 0.5
    %v5019 = vmul.f32 %v5011, 0.5
    %v5020 = vmul.f32 %v5012, 0.5
    %v5021 = vmul.f32 %v5013, 0.5
    %v5022 = vmul.f32 %v5014, 0.5
    %v5023 = vmul.f32 %v5015, 0.5
    %v5024 = vtanh.pop %v5016
    %v5025 = vtanh.pop %v5017
    %v5026 = vtanh.pop %v5018
    %v5027 = vtanh.pop %v5019
    %v5028 = vtanh.pop %v5020
    %v5029 = vtanh.pop %v5021
    %v5030 = vtanh.pop %v5022
    %v5031 = vtanh.pop %v5023
    %v5032 = vadd.f32 %v5024, 1.0
    %v5033 = vadd.f32 %v5025, 1.0
    %v5034 = vadd.f32 %v5026, 1.0
    %v5035 = vadd.f32 %v5027, 1.0
    %v5036 = vadd.f32 %v5028, 1.0
    %v5037 = vadd.f32 %v5029, 1.0
    %v5038 = vadd.f32 %v5030, 1.0
    %v5039 = vadd.f32 %v5031, 1.0
    %v5040 = vmul.f32 %v5032, 0.5
    %v5041 = vmul.f32 %v5033, 0.5
    %v5042 = vmul.f32 %v5034, 0.5
    %v5043 = vmul.f32 %v5035, 0.5
    %v5044 = vmul.f32 %v5036, 0.5
    %v5045 = vmul.f32 %v5037, 0.5
    %v5046 = vmul.f32 %v5038, 0.5
    %v5047 = vmul.f32 %v5039, 0.5
    %v5056 = vrot.slane %v4840, 7
    %v5057 = vrot.slane %v4841, 7
    %v5058 = vrot.slane %v4842, 7
    %v5059 = vrot.slane %v4843, 7
    %v5060 = vrot.slane %v4844, 7
    %v5061 = vrot.slane %v4845, 7
    %v5062 = vrot.slane %v4846, 7
    %v5063 = vrot.slane %v4847, 7
    %v5072 = vmul.f32 %v5040, %v5056
    %v5073 = vmul.f32 %v5041, %v5057
    %v5074 = vmul.f32 %v5042, %v5058
    %v5075 = vmul.f32 %v5043, %v5059
    %v5076 = vmul.f32 %v5044, %v5060
    %v5077 = vmul.f32 %v5045, %v5061
    %v5078 = vmul.f32 %v5046, %v5062
    %v5079 = vmul.f32 %v5047, %v5063
    %5088 = vrot.lane.b32.xlu0 %v5024, 64
    %v5089 = vpop.permute.xlu0 %5088
    %5090 = vrot.lane.b32.xlu0 %v5025, 64
    %v5091 = vpop.permute.xlu0 %5090
    %5092 = vrot.lane.b32.xlu0 %v5026, 64
    %v5093 = vpop.permute.xlu0 %5092
    %5094 = vrot.lane.b32.xlu0 %v5027, 64
    %v5095 = vpop.permute.xlu0 %5094
    %5096 = vrot.lane.b32.xlu0 %v5028, 64
    %v5097 = vpop.permute.xlu0 %5096
    %5098 = vrot.lane.b32.xlu0 %v5029, 64
    %v5099 = vpop.permute.xlu0 %5098
    %5100 = vrot.lane.b32.xlu0 %v5030, 64
    %v5101 = vpop.permute.xlu0 %5100
    %5102 = vrot.lane.b32.xlu0 %v5031, 64
    %v5103 = vpop.permute.xlu0 %5102
    %v5112 = vmul.f32 %v5040, %v5089
    %v5113 = vmul.f32 %v5041, %v5091
    %v5114 = vmul.f32 %v5042, %v5093
    %v5115 = vmul.f32 %v5043, %v5095
    %v5116 = vmul.f32 %v5044, %v5097
    %v5117 = vmul.f32 %v5045, %v5099
    %v5118 = vmul.f32 %v5046, %v5101
    %v5119 = vmul.f32 %v5047, %v5103
    %5128 = vrot.lane.b32.xlu0 %v5112, 32
    %v5129 = vpop.permute.xlu0 %5128
    %5130 = vrot.lane.b32.xlu0 %v5113, 32
    %v5131 = vpop.permute.xlu0 %5130
    %5132 = vrot.lane.b32.xlu0 %v5114, 32
    %v5133 = vpop.permute.xlu0 %5132
    %5134 = vrot.lane.b32.xlu0 %v5115, 32
    %v5135 = vpop.permute.xlu0 %5134
    %5136 = vrot.lane.b32.xlu0 %v5116, 32
    %v5137 = vpop.permute.xlu0 %5136
    %5138 = vrot.lane.b32.xlu0 %v5117, 32
    %v5139 = vpop.permute.xlu0 %5138
    %5140 = vrot.lane.b32.xlu0 %v5118, 32
    %v5141 = vpop.permute.xlu0 %5140
    %5142 = vrot.lane.b32.xlu0 %v5119, 32
    %v5143 = vpop.permute.xlu0 %5142
    %v5152 = vadd.f32 %v5072, %v5129
    %v5153 = vadd.f32 %v5073, %v5131
    %v5154 = vadd.f32 %v5074, %v5133
    %v5155 = vadd.f32 %v5075, %v5135
    %v5156 = vadd.f32 %v5076, %v5137
    %v5157 = vadd.f32 %v5077, %v5139
    %v5158 = vadd.f32 %v5078, %v5141
    %v5159 = vadd.f32 %v5079, %v5143
    %v5160 = vtanh.pop %v5152
    %v5161 = vtanh.pop %v5153
    %v5162 = vtanh.pop %v5154
    %v5163 = vtanh.pop %v5155
    %v5164 = vtanh.pop %v5156
    %v5165 = vtanh.pop %v5157
    %v5166 = vtanh.pop %v5158
    %v5167 = vtanh.pop %v5159
    %5176 = vrot.lane.b32.xlu0 %v5160, 64
    %v5177 = vpop.permute.xlu0 %5176
    %5178 = vrot.lane.b32.xlu0 %v5161, 64
    %v5179 = vpop.permute.xlu0 %5178
    %5180 = vrot.lane.b32.xlu0 %v5162, 64
    %v5181 = vpop.permute.xlu0 %5180
    %5182 = vrot.lane.b32.xlu0 %v5163, 64
    %v5183 = vpop.permute.xlu0 %5182
    %5184 = vrot.lane.b32.xlu0 %v5164, 64
    %v5185 = vpop.permute.xlu0 %5184
    %5186 = vrot.lane.b32.xlu0 %v5165, 64
    %v5187 = vpop.permute.xlu0 %5186
    %5188 = vrot.lane.b32.xlu0 %v5166, 64
    %v5189 = vpop.permute.xlu0 %5188
    %5190 = vrot.lane.b32.xlu0 %v5167, 64
    %v5191 = vpop.permute.xlu0 %5190
    %v5200 = vmul.f32 %v5040, %v5177
    %v5201 = vmul.f32 %v5041, %v5179
    %v5202 = vmul.f32 %v5042, %v5181
    %v5203 = vmul.f32 %v5043, %v5183
    %v5204 = vmul.f32 %v5044, %v5185
    %v5205 = vmul.f32 %v5045, %v5187
    %v5206 = vmul.f32 %v5046, %v5189
    %v5207 = vmul.f32 %v5047, %v5191
    %v5208 = vld [vmem:[%s4] sm:$0xff]
    %v5209 = vld [vmem:[%s4 + $0x8] sm:$0xff]
    %v5210 = vld [vmem:[%s4 + $0x10] sm:$0xff]
    %v5211 = vld [vmem:[%s4 + $0x18] sm:$0xff]
    %v5212 = vld [vmem:[%s5] sm:$0x1]
    %v5214 = vlaneseq
    %v5215 = vshrl.u32 %v5214, 7
    %v5216 = vsub.s32 0, %v5215
    %v5217 = vrot.slane %v5212, %v5216
    %v5227 = vrot.slane %v5200, 7
    %v5228 = vrot.slane %v5201, 6
    %v5229 = vsel %vm530, %v5228, %v5227
    %v5230 = vrot.slane %v5202, 5
    %v5231 = vsel %vm533, %v5230, %v5229
    %v5232 = vrot.slane %v5203, 4
    %v5233 = vsel %vm536, %v5232, %v5231
    %v5234 = vrot.slane %v5204, 3
    %v5235 = vsel %vm539, %v5234, %v5233
    %v5236 = vrot.slane %v5205, 2
    %v5237 = vsel %vm542, %v5236, %v5235
    %v5238 = vrot.slane %v5206, 1
    %v5239 = vsel %vm545, %v5238, %v5237
    %v5240 = vsel %vm548, %v5207, %v5239
    %5241 = vrot.lane.b32.xlu0 %v5240, 32
    %v5242 = vpop.permute.xlu0 %5241
    %v5243 = vsel %vm255, %v5242, 0
    %5245 = vmatprep.subr.mxu0 0.0
    %5246 = vmatpush1.msra.mxu0 %v5208
    %5247 = vmatprep.subr.mxu0 0.0
    %5248 = vmatpush1.msra.mxu0 %v5209
    %5249 = vmatprep.subr.mxu0 0.0
    %5250 = vmatpush1.msra.mxu0 %v5210
    %5251 = vmatprep.subr.mxu0 0.0
    %5252 = vmatpush1.msra.mxu0 %v5211
    %5253 = vmatprep.subr.mxu0 0.0
    %5254 = vmatpush1.msra.mxu0 0.0
    %5255 = vmatprep.subr.mxu0 0.0
    %5256 = vmatpush1.msra.mxu0 0.0
    %5257 = vmatprep.subr.mxu0 0.0
    %5258 = vmatpush1.msra.mxu0 0.0
    %5259 = vmatprep.subr.mxu0 0.0
    %5260 = vmatpush1.msra.mxu0 0.0
    %5261 = vmatprep.subr.mxu0 0.0
    %5262 = vmatpush1.msra.mxu0 0.0
    %5263 = vmatprep.subr.mxu0 0.0
    %5264 = vmatpush1.msra.mxu0 0.0
    %5265 = vmatprep.subr.mxu0 0.0
    %5266 = vmatpush1.msra.mxu0 0.0
    %5267 = vmatprep.subr.mxu0 0.0
    %5268 = vmatpush1.msra.mxu0 0.0
    %5269 = vmatprep.subr.mxu0 0.0
    %5270 = vmatpush1.msra.mxu0 0.0
    %5271 = vmatprep.subr.mxu0 0.0
    %5272 = vmatpush1.msra.mxu0 0.0
    %5273 = vmatprep.subr.mxu0 0.0
    %5274 = vmatpush1.msra.mxu0 0.0
    %5275 = vmatprep.subr.mxu0 0.0
    %5276 = vmatpush1.msra.mxu0 0.0
    %5277 = vmatprep.subr.mxu0 0.0
    %5278 = vmatpush1.msra.mxu0 0.0
    %5279 = vmatprep.subr.mxu0 0.0
    %5280 = vmatpush1.msra.mxu0 0.0
    %5281 = vmatprep.subr.mxu0 0.0
    %5282 = vmatpush1.msra.mxu0 0.0
    %5283 = vmatprep.subr.mxu0 0.0
    %5284 = vmatpush1.msra.mxu0 0.0
    %5285 = vmatprep.subr.mxu0 0.0
    %5286 = vmatpush1.msra.mxu0 0.0
    %5287 = vmatprep.subr.mxu0 0.0
    %5288 = vmatpush1.msra.mxu0 0.0
    %5289 = vmatprep.subr.mxu0 0.0
    %5290 = vmatpush1.msra.mxu0 0.0
    %5291 = vmatprep.subr.mxu0 0.0
    %5292 = vmatpush1.msra.mxu0 0.0
    %5293 = vmatprep.subr.mxu0 0.0
    %5294 = vmatpush1.msra.mxu0 0.0
    %5295 = vmatprep.subr.mxu0 0.0
    %5296 = vmatpush1.msra.mxu0 0.0
    %5297 = vmatprep.subr.mxu0 0.0
    %5298 = vmatpush1.msra.mxu0 0.0
    %5299 = vmatprep.subr.mxu0 0.0
    %5300 = vmatpush1.msra.mxu0 0.0
    %5301 = vmatprep.subr.mxu0 0.0
    %5302 = vmatpush1.msra.mxu0 0.0
    %5303 = vmatprep.subr.mxu0 0.0
    %5304 = vmatpush1.msra.mxu0 0.0
    %5305 = vmatprep.subr.mxu0 0.0
    %5306 = vmatpush1.msra.mxu0 0.0
    %5307 = vmatprep.subr.mxu0 0.0
    %5308 = vmatpush1.msra.mxu0 0.0
    %5309 = vmatprep.mubr.f32.mxu0 0.0
    %5310 = vmatmul.mubr.f32.gmra.mrb[0].mxu0 %v5243
    %v5311 = vpop.f32.mrb[0].mxu0
    %v5312 = vadd.f32 %v5217, %v5311
    %v5313 = vpop.f32.mrb[0].mxu0
    %5314 = vdwg.mxu0
    %v5315 = vmax.f32 %v5312, 0.0
    %v5316 = vld [vmem:[%s8] sm:$0x3]
    %v5317 = vld [vmem:[%s6] sm:$0xff]
    %v5318 = vld [vmem:[%s6 + $0x8] sm:$0xff]
    %v5319 = vld [vmem:[%s6 + $0x10] sm:$0xff]
    %v5320 = vld [vmem:[%s6 + $0x18] sm:$0xff]
    %v5321 = vld [vmem:[%s7] sm:$0x1]
    %v5323 = vlaneseq
    %v5324 = vshrl.u32 %v5323, 7
    %v5325 = vsub.s32 0, %v5324
    %v5326 = vrot.slane %v5321, %v5325
    %v5329 = vsel %vm255, %v5315, 0
    %5331 = vmatprep.subr.mxu0 0.0
    %5332 = vmatpush1.msra.mxu0 %v5317
    %5333 = vmatprep.subr.mxu0 0.0
    %5334 = vmatpush1.msra.mxu0 %v5318
    %5335 = vmatprep.subr.mxu0 0.0
    %5336 = vmatpush1.msra.mxu0 %v5319
    %5337 = vmatprep.subr.mxu0 0.0
    %5338 = vmatpush1.msra.mxu0 %v5320
    %5339 = vmatprep.subr.mxu0 0.0
    %5340 = vmatpush1.msra.mxu0 0.0
    %5341 = vmatprep.subr.mxu0 0.0
    %5342 = vmatpush1.msra.mxu0 0.0
    %5343 = vmatprep.subr.mxu0 0.0
    %5344 = vmatpush1.msra.mxu0 0.0
    %5345 = vmatprep.subr.mxu0 0.0
    %5346 = vmatpush1.msra.mxu0 0.0
    %5347 = vmatprep.subr.mxu0 0.0
    %5348 = vmatpush1.msra.mxu0 0.0
    %5349 = vmatprep.subr.mxu0 0.0
    %5350 = vmatpush1.msra.mxu0 0.0
    %5351 = vmatprep.subr.mxu0 0.0
    %5352 = vmatpush1.msra.mxu0 0.0
    %5353 = vmatprep.subr.mxu0 0.0
    %5354 = vmatpush1.msra.mxu0 0.0
    %5355 = vmatprep.subr.mxu0 0.0
    %5356 = vmatpush1.msra.mxu0 0.0
    %5357 = vmatprep.subr.mxu0 0.0
    %5358 = vmatpush1.msra.mxu0 0.0
    %5359 = vmatprep.subr.mxu0 0.0
    %5360 = vmatpush1.msra.mxu0 0.0
    %5361 = vmatprep.subr.mxu0 0.0
    %5362 = vmatpush1.msra.mxu0 0.0
    %5363 = vmatprep.subr.mxu0 0.0
    %5364 = vmatpush1.msra.mxu0 0.0
    %5365 = vmatprep.subr.mxu0 0.0
    %5366 = vmatpush1.msra.mxu0 0.0
    %5367 = vmatprep.subr.mxu0 0.0
    %5368 = vmatpush1.msra.mxu0 0.0
    %5369 = vmatprep.subr.mxu0 0.0
    %5370 = vmatpush1.msra.mxu0 0.0
    %5371 = vmatprep.subr.mxu0 0.0
    %5372 = vmatpush1.msra.mxu0 0.0
    %5373 = vmatprep.subr.mxu0 0.0
    %5374 = vmatpush1.msra.mxu0 0.0
    %5375 = vmatprep.subr.mxu0 0.0
    %5376 = vmatpush1.msra.mxu0 0.0
    %5377 = vmatprep.subr.mxu0 0.0
    %5378 = vmatpush1.msra.mxu0 0.0
    %5379 = vmatprep.subr.mxu0 0.0
    %5380 = vmatpush1.msra.mxu0 0.0
    %5381 = vmatprep.subr.mxu0 0.0
    %5382 = vmatpush1.msra.mxu0 0.0
    %5383 = vmatprep.subr.mxu0 0.0
    %5384 = vmatpush1.msra.mxu0 0.0
    %5385 = vmatprep.subr.mxu0 0.0
    %5386 = vmatpush1.msra.mxu0 0.0
    %5387 = vmatprep.subr.mxu0 0.0
    %5388 = vmatpush1.msra.mxu0 0.0
    %5389 = vmatprep.subr.mxu0 0.0
    %5390 = vmatpush1.msra.mxu0 0.0
    %5391 = vmatprep.subr.mxu0 0.0
    %5392 = vmatpush1.msra.mxu0 0.0
    %5393 = vmatprep.subr.mxu0 0.0
    %5394 = vmatpush1.msra.mxu0 0.0
    %5395 = vmatprep.mubr.f32.mxu0 0.0
    %5396 = vmatmul.mubr.f32.gmra.mrb[0].mxu0 %v5329
    %v5397 = vpop.f32.mrb[0].mxu0
    %v5398 = vadd.f32 %v5326, %v5397
    %v5399 = vpop.f32.mrb[0].mxu0
    %5400 = vdwg.mxu0
    %5401 = vset.pattern.permute.xlu0 0
    %5402 = vperm.xlu0 %5401, %v34
    %v5403 = vpop.permute.xlu0 %5402
    %5405 = vset.pattern.permute.xlu0 0
    %5406 = vperm.xlu0 %5405, %v36
    %v5407 = vpop.permute.xlu0 %5406
    %5409 = vset.pattern.permute.xlu0 0
    %5410 = vperm.xlu0 %5409, %v38
    %v5411 = vpop.permute.xlu0 %5410
    %5413 = vset.pattern.permute.xlu0 0
    %5414 = vperm.xlu0 %5413, %v40
    %v5415 = vpop.permute.xlu0 %5414
    %5417 = vset.pattern.permute.xlu0 0
    %5418 = vperm.xlu0 %5417, %v42
    %v5419 = vpop.permute.xlu0 %5418
    %5421 = vset.pattern.permute.xlu0 0
    %5422 = vperm.xlu0 %5421, %v44
    %v5423 = vpop.permute.xlu0 %5422
    %5425 = vset.pattern.permute.xlu0 0
    %5426 = vperm.xlu0 %5425, %v46
    %v5427 = vpop.permute.xlu0 %5426
    %5429 = vset.pattern.permute.xlu0 0
    %5430 = vperm.xlu0 %5429, %v48
    %v5431 = vpop.permute.xlu0 %5430
    %v5433 = vlaneseq
    %v5434 = vshrl.u32 %v5433, 7
    %v5435 = vsub.s32 0, %v5434
    %v5436 = vrot.slane %v5316, %v5435
    %v5437 = vmul.f32 %v5403, %v5436
    %v5438 = vmul.f32 %v5407, %v5436
    %v5439 = vmul.f32 %v5411, %v5436
    %v5440 = vmul.f32 %v5415, %v5436
    %v5441 = vmul.f32 %v5419, %v5436
    %v5442 = vmul.f32 %v5423, %v5436
    %v5443 = vmul.f32 %v5427, %v5436
    %v5444 = vmul.f32 %v5431, %v5436
    %v5453 = vrot.slane %v5437, 7
    %v5454 = vrot.slane %v5438, 6
    %v5455 = vsel %vm530, %v5454, %v5453
    %v5456 = vrot.slane %v5439, 5
    %v5457 = vsel %vm533, %v5456, %v5455
    %v5458 = vrot.slane %v5440, 4
    %v5459 = vsel %vm536, %v5458, %v5457
    %v5460 = vrot.slane %v5441, 3
    %v5461 = vsel %vm539, %v5460, %v5459
    %v5462 = vrot.slane %v5442, 2
    %v5463 = vsel %vm542, %v5462, %v5461
    %v5464 = vrot.slane %v5443, 1
    %v5465 = vsel %vm545, %v5464, %v5463
    %v5466 = vsel %vm548, %v5444, %v5465
    %v5468 = vadd.f32 %v5398, %v5466
    %5469 = vset.pattern.permute.xlu0 1
    %5470 = vperm.xlu0 %5469, %v34
    %v5471 = vpop.permute.xlu0 %5470
    %5473 = vset.pattern.permute.xlu0 1
    %5474 = vperm.xlu0 %5473, %v36
    %v5475 = vpop.permute.xlu0 %5474
    %5477 = vset.pattern.permute.xlu0 1
    %5478 = vperm.xlu0 %5477, %v38
    %v5479 = vpop.permute.xlu0 %5478
    %5481 = vset.pattern.permute.xlu0 1
    %5482 = vperm.xlu0 %5481, %v40
    %v5483 = vpop.permute.xlu0 %5482
    %5485 = vset.pattern.permute.xlu0 1
    %5486 = vperm.xlu0 %5485, %v42
    %v5487 = vpop.permute.xlu0 %5486
    %5489 = vset.pattern.permute.xlu0 1
    %5490 = vperm.xlu0 %5489, %v44
    %v5491 = vpop.permute.xlu0 %5490
    %5493 = vset.pattern.permute.xlu0 1
    %5494 = vperm.xlu0 %5493, %v46
    %v5495 = vpop.permute.xlu0 %5494
    %5497 = vset.pattern.permute.xlu0 1
    %5498 = vperm.xlu0 %5497, %v48
    %v5499 = vpop.permute.xlu0 %5498
    %v5501 = vlaneseq
    %v5502 = vshrl.u32 %v5501, 7
    %v5503 = vsub.s32 1, %v5502
    %v5504 = vrot.slane %v5316, %v5503
    %v5505 = vmul.f32 %v5471, %v5504
    %v5506 = vmul.f32 %v5475, %v5504
    %v5507 = vmul.f32 %v5479, %v5504
    %v5508 = vmul.f32 %v5483, %v5504
    %v5509 = vmul.f32 %v5487, %v5504
    %v5510 = vmul.f32 %v5491, %v5504
    %v5511 = vmul.f32 %v5495, %v5504
    %v5512 = vmul.f32 %v5499, %v5504
    %v5521 = vrot.slane %v5505, 7
    %v5522 = vrot.slane %v5506, 6
    %v5523 = vsel %vm530, %v5522, %v5521
    %v5524 = vrot.slane %v5507, 5
    %v5525 = vsel %vm533, %v5524, %v5523
    %v5526 = vrot.slane %v5508, 4
    %v5527 = vsel %vm536, %v5526, %v5525
    %v5528 = vrot.slane %v5509, 3
    %v5529 = vsel %vm539, %v5528, %v5527
    %v5530 = vrot.slane %v5510, 2
    %v5531 = vsel %vm542, %v5530, %v5529
    %v5532 = vrot.slane %v5511, 1
    %v5533 = vsel %vm545, %v5532, %v5531
    %v5534 = vsel %vm548, %v5512, %v5533
    %v5536 = vadd.f32 %v5468, %v5534
    %5537 = vst [vmem:[#allocation2] sm:$0xff] %v5536
    // Predicated region
    $region38: #{tpu_custom_call.1} parent=1 // pred_check
      _
    $region39: #{tpu_custom_call.1} parent=1 // pred_check_branch
      %5539 = sbr.rel (0) target = $region41
    $region40: #{tpu_custom_call.1} parent=1 // pred_region
      %s5541 = ssub.s32 128, 128
      %5542 = vsyncadd [#allocation3], %s5541
      %s5544 = sshll.u32 [#allocation2], 4
      %s5545 = int_to_ptr.vmem [resolvable:$true] %s5544
      %5547 = dma.vmem_to_hbm [thread:$0]  %s5545, 128, %s9, [#allocation3]
    $region41: #{tpu_custom_call.1} parent=1 // pred_fallthru
      _
    // Predicated region
    $region42: #{tpu_custom_call.1} parent=1 // pred_check
      _
    $region43: #{tpu_custom_call.1} parent=1 // pred_check_branch
      %5549 = sbr.rel (0) target = $region45
    $region44: #{tpu_custom_call.1} parent=1 // pred_region
      %5550 = dma.done [#allocation3], 128
    $region45: #{tpu_custom_call.1} parent=1 // pred_fallthru
      _
    %5551 = vsyncpa [#allocation3], 1

</llo_original>
